<compile_context>
chip_gen: v5e
topology: v5e:2x2
jax: 0.10.0
libtpu: 0.0.40
codegen_flags: <defaults>
</compile_context>

<pallas_src>
import functools
import math

import jax
import jax.numpy as jnp
from jax import lax
from jax.experimental import pallas as pl
from jax.experimental.pallas import tpu as pltpu

EPS = 1e-6
NEG_INF = -1e9


def _vmem_capacity_bytes():
    try:
        return int(pltpu.get_tpu_info().vmem_capacity_bytes)
    except Exception:
        return 64 << 20          # conservative fallback (v7x per-TC VMEM)


_VMEM_CAP = _vmem_capacity_bytes()
# Leave headroom for compiler-internal scratch / pipeline buffers: never request the whole VMEM.
_VMEM_CEILING = max(_VMEM_CAP - (16 << 20), (_VMEM_CAP * 3) // 4)
_BIG_VMEM = _VMEM_CAP >= (96 << 20)      # v5e / v6e (128 MiB physical)

# Preferred tile sizes (shrunk automatically for small / non-divisible problems).
TM = 512 if _BIG_VMEM else 256    # rows (B*S) per block
TN = 256                          # output features per block (matmul_bias)
TK = 512                          # contraction block
TQ = 512 if _BIG_VMEM else 256    # query rows per attention block
TKV = 256                         # key/value rows per attention block


def _pick(dim, pref):
    """Largest tile <= pref that divides dim, preferring 128- then 8-multiples."""
    if dim <= pref:
        return dim
    for mult in (128, 8, 1):
        t = (pref // mult) * mult
        while t >= mult:
            if dim % t == 0:
                return t
            t -= mult
    return dim


def _compiler_params(dimension_semantics, io_block_bytes, scratch_bytes=0):
    """Dtype-accurate VMEM budget: double-buffered I/O blocks + scratch + headroom."""
    req = 2 * int(io_block_bytes) + int(scratch_bytes) + (2 << 20)
    req = max(req, 8 << 20)
    vmem = min(req, _VMEM_CEILING)
    return pltpu.CompilerParams(dimension_semantics=dimension_semantics,
                                vmem_limit_bytes=int(vmem))


# ----------------------------- kernel 1: matmul + bias (+ relu) ---------------------
def _matmul_bias_kernel(a_ref, w_ref, b_ref, o_ref, acc_ref, *, relu):
    k = pl.program_id(2)

    @pl.when(k == 0)
    def _():
        acc_ref[...] = jnp.zeros_like(acc_ref)

    acc_ref[...] += jnp.dot(a_ref[...], w_ref[...],
                            preferred_element_type=jnp.float32)

    @pl.when(k == pl.num_programs(2) - 1)
    def _():
        out = acc_ref[...] + b_ref[...].astype(jnp.float32)
        if relu:
            out = jnp.maximum(out, 0.0)
        o_ref[...] = out.astype(o_ref.dtype)


def _matmul_bias(a, w, b, *, relu=False, out_dtype=jnp.bfloat16):
    M, K = a.shape
    K2, N = w.shape
    assert K == K2
    tm, tn, tk = _pick(M, TM), _pick(N, TN), _pick(K, TK)
    grid = (M // tm, N // tn, K // tk)
    io_bytes = 2 * (tm * tk + tk * tn + tm * tn) + 4 * tn   # bf16 a/w/out + f32 bias
    return pl.pallas_call(
        functools.partial(_matmul_bias_kernel, relu=relu),
        out_shape=jax.ShapeDtypeStruct((M, N), out_dtype),
        grid_spec=pltpu.PrefetchScalarGridSpec(
            num_scalar_prefetch=0,
            grid=grid,
            in_specs=[
                pl.BlockSpec((tm, tk), lambda i, j, k: (i, k)),   # activations (bf16)
                pl.BlockSpec((tk, tn), lambda i, j, k: (k, j)),   # weights (bf16, streamed)
                pl.BlockSpec((1, tn), lambda i, j, k: (0, j)),    # bias (f32)
            ],
            out_specs=pl.BlockSpec((tm, tn), lambda i, j, k: (i, j)),
            scratch_shapes=[pltpu.VMEM((tm, tn), jnp.float32)],
        ),
        compiler_params=_compiler_params(("parallel", "parallel", "arbitrary"),
                                         io_bytes, 4 * tm * tn),
    )(a, w, b)


# ----------------------------- kernel 2: matmul + bias + residual + LayerNorm -------
def _matmul_res_ln_kernel(a_ref, w_ref, b_ref, res_ref, g_ref, be_ref, o_ref, acc_ref):
    k = pl.program_id(1)

    @pl.when(k == 0)
    def _():
        acc_ref[...] = jnp.zeros_like(acc_ref)

    acc_ref[...] += jnp.dot(a_ref[...], w_ref[...],
                            preferred_element_type=jnp.float32)

    @pl.when(k == pl.num_programs(1) - 1)
    def _():
        h = (acc_ref[...] + b_ref[...].astype(jnp.float32)
             + res_ref[...].astype(jnp.float32))
        # Single-pass statistics: var = E[h^2] - mean^2 (one XLU reduction sweep, not two).
        mean = jnp.mean(h, axis=-1, keepdims=True)
        var = jnp.maximum(jnp.mean(h * h, axis=-1, keepdims=True) - mean * mean, 0.0)
        y = (h - mean) * lax.rsqrt(var + EPS)
        y = y * g_ref[...].astype(jnp.float32) + be_ref[...].astype(jnp.float32)
        o_ref[...] = y.astype(o_ref.dtype)


def _matmul_res_ln(a, w, b, res, g, be):
    M, K = a.shape
    D = w.shape[1]
    tm, tk = _pick(M, TM), _pick(K, TK)

    def footprint(tm_, tk_):
        io = 2 * (tm_ * tk_ + tk_ * D + 2 * tm_ * D) + 4 * 3 * D
        return 2 * io + 4 * tm_ * D + (2 << 20)

    # Full-width LN epilogue can get big at large D (esp. on v7x's 64 MiB VMEM): shrink tiles.
    while footprint(tm, tk) > (40 << 20) and tk > 128 and K % (tk // 2) == 0:
        tk //= 2
    while footprint(tm, tk) > (40 << 20) and tm > 8 and M % (tm // 2) == 0:
        tm //= 2

    grid = (M // tm, K // tk)
    io_bytes = 2 * (tm * tk + tk * D + 2 * tm * D) + 4 * 3 * D
    return pl.pallas_call(
        _matmul_res_ln_kernel,
        out_shape=jax.ShapeDtypeStruct((M, D), jnp.bfloat16),
        grid_spec=pltpu.PrefetchScalarGridSpec(
            num_scalar_prefetch=0,
            grid=grid,
            in_specs=[
                pl.BlockSpec((tm, tk), lambda i, k: (i, k)),   # activations (bf16)
                pl.BlockSpec((tk, D), lambda i, k: (k, 0)),    # weights (bf16, K-streamed)
                pl.BlockSpec((1, D), lambda i, k: (0, 0)),     # bias (f32)
                pl.BlockSpec((tm, D), lambda i, k: (i, 0)),    # residual (bf16)
                pl.BlockSpec((1, D), lambda i, k: (0, 0)),     # gamma (f32)
                pl.BlockSpec((1, D), lambda i, k: (0, 0)),     # beta (f32)
            ],
            out_specs=pl.BlockSpec((tm, D), lambda i, k: (i, 0)),
            scratch_shapes=[pltpu.VMEM((tm, D), jnp.float32)],
        ),
        compiler_params=_compiler_params(("parallel", "arbitrary"),
                                         io_bytes, 4 * tm * D),
    )(a, w, b, res, g, be)


# ----------------------------- kernel 3: flash attention (online softmax) -----------
def _flash_attn_kernel(q_ref, k_ref, v_ref, bias_ref, o_ref, m_scr, l_scr, acc_scr):
    ki = pl.program_id(2)

    @pl.when(ki == 0)
    def _():
        m_scr[...] = jnp.full_like(m_scr, -jnp.inf)
        l_scr[...] = jnp.zeros_like(l_scr)
        acc_scr[...] = jnp.zeros_like(acc_scr)

    # blocks: q (H, tq, dk) bf16 with 1/sqrt(dk) already folded into the Q projection,
    #         k/v (H, tk, dk) bf16, bias (tq, tk) bf16.
    # All heads in one batched contraction (no per-head slices / concat).
    s = jnp.einsum('hqd,hkd->hqk', q_ref[0], k_ref[0],
                   preferred_element_type=jnp.float32)               # (H, tq, tk)
    s = s + bias_ref[0][None].astype(jnp.float32)                    # additive mask bias
    # TODO(synk): for structured (causal / padding) masks, generate the bias in-kernel with
    # broadcasted_iota and skip fully-masked kv blocks; the generic module interface passes
    # an arbitrary dense mask, so it is streamed as a bf16 additive bias instead.

    m_prev = m_scr[...]
    m_new = jnp.maximum(m_prev, jnp.max(s, axis=-1, keepdims=True))
    alpha = jnp.exp(m_prev - m_new)
    p = jnp.exp(s - m_new)
    l_scr[...] = alpha * l_scr[...] + jnp.sum(p, axis=-1, keepdims=True)
    acc_scr[...] = alpha * acc_scr[...] + jnp.einsum(
        'hqk,hkd->hqd', p.astype(jnp.bfloat16), v_ref[0],
        preferred_element_type=jnp.float32)
    m_scr[...] = m_new

    @pl.when(ki == pl.num_programs(2) - 1)
    def _():
        inv_l = pl.reciprocal(l_scr[...], approx=True)               # EUP, off critical path
        o_ref[0] = (acc_scr[...] * inv_l).astype(o_ref.dtype)


def _flash_attention(q, k, v, bias):
    # q, k, v: (B, H, S, dk) bf16 (q pre-scaled); bias: (B, S_q, S_k) bf16 additive mask
    B, H, Sq, dk = q.shape
    Sk = k.shape[2]
    tq, tk = _pick(Sq, TQ), _pick(Sk, TKV)
    grid = (B, Sq // tq, Sk // tk)
    io_bytes = 2 * (2 * H * tq * dk + 2 * H * tk * dk + tq * tk)     # all blocks bf16
    scratch_bytes = 4 * (2 * H * tq + H * tq * dk)
    return pl.pallas_call(
        _flash_attn_kernel,
        out_shape=jax.ShapeDtypeStruct((B, H, Sq, dk), jnp.bfloat16),
        grid_spec=pltpu.PrefetchScalarGridSpec(
            num_scalar_prefetch=0,
            grid=grid,
            in_specs=[
                pl.BlockSpec((1, H, tq, dk), lambda b, qi, ki: (b, 0, qi, 0)),
                pl.BlockSpec((1, H, tk, dk), lambda b, qi, ki: (b, 0, ki, 0)),
                pl.BlockSpec((1, H, tk, dk), lambda b, qi, ki: (b, 0, ki, 0)),
                pl.BlockSpec((1, tq, tk), lambda b, qi, ki: (b, qi, ki)),
            ],
            # TODO(synk): pack heads along the lane axis for a lane-dense (tq, H*dk) output
            # block (>=128-wide unmasked stores) and drop the XLA head-merge transpose.
            out_specs=pl.BlockSpec((1, H, tq, dk), lambda b, qi, ki: (b, 0, qi, 0)),
            scratch_shapes=[
                pltpu.VMEM((H, tq, 1), jnp.float32),   # running max
                pltpu.VMEM((H, tq, 1), jnp.float32),   # running denom
                pltpu.VMEM((H, tq, dk), jnp.float32),  # output accumulator
            ],
        ),
        compiler_params=_compiler_params(("parallel", "parallel", "arbitrary"),
                                         io_bytes, scratch_bytes),
    )(q, k, v, bias)


# ----------------------------- pure-JAX reference primitives (mirror the kernel math)
def _ref_matmul_bias(a, w, b, *, relu=False, out_dtype=jnp.bfloat16):
    out = jnp.dot(a, w, preferred_element_type=jnp.float32) + b
    if relu:
        out = jnp.maximum(out, 0.0)
    return out.astype(out_dtype)


def _ref_matmul_res_ln(a, w, b, res, g, be):
    h = jnp.dot(a, w, preferred_element_type=jnp.float32) + b + res.astype(jnp.float32)
    mean = jnp.mean(h, axis=-1, keepdims=True)
    var = jnp.mean(jnp.square(h - mean), axis=-1, keepdims=True)
    y = (h - mean) * lax.rsqrt(var + EPS) * g + be
    return y.astype(jnp.bfloat16)


def _ref_attention(q, k, v, bias):
    s = jnp.einsum('bhqd,bhkd->bhqk', q, k, preferred_element_type=jnp.float32)
    s = s + bias[:, None].astype(jnp.float32)
    s = s - jnp.max(s, axis=-1, keepdims=True)
    p = jnp.exp(s)
    p = p / jnp.sum(p, axis=-1, keepdims=True)
    o = jnp.einsum('bhqk,bhkd->bhqd', p.astype(jnp.bfloat16), v,
                   preferred_element_type=jnp.float32)
    return o.astype(jnp.bfloat16)


# ----------------------------- layer composition (shared by kernel & reference) -----
def _compose(x, enc, tgt_bias, src_bias, p, num_heads, mm, mm_res_ln, attn):
    B, S, D = x.shape
    S_enc = enc.shape[1]
    H = num_heads
    dk = D // H
    scale = 1.0 / math.sqrt(dk)
    bf = jnp.bfloat16

    # Activations live in bf16 end to end (the MXU consumes bf16 anyway); LN math stays f32.
    x2d = x.reshape(B * S, D).astype(bf)
    enc2d = enc.reshape(B * S_enc, D).astype(bf)

    def heads(a2d, L):      # (B*L, D) -> (B, H, L, dk)
        return a2d.reshape(B, L, H, dk).transpose(0, 2, 1, 3)

    def unheads(a4d, L):    # (B, H, L, dk) -> (B*L, D)
        return a4d.transpose(0, 2, 1, 3).reshape(B * L, D)

    # ---- self attention + residual + norm1 (fused QKV projection; 1/sqrt(dk) folded into W_q)
    w_qkv = jnp.concatenate([p["sa_wq"] * scale, p["sa_wk"], p["sa_wv"]], axis=1).astype(bf)
    b_qkv = jnp.concatenate([p["sa_bq"] * scale, p["sa_bk"], p["sa_bv"]], axis=1)
    qkv = mm(x2d, w_qkv, b_qkv)
    q, k, v = (heads(qkv[:, i * D:(i + 1) * D], S) for i in range(3))
    sa = unheads(attn(q, k, v, tgt_bias), S)
    x1 = mm_res_ln(sa, p["sa_wo"].astype(bf), p["sa_bo"], x2d, p["g1"], p["be1"])

    # ---- cross attention + residual + norm2 (fused KV projection of encoder output)
    qc = heads(mm(x1, (p["ca_wq"] * scale).astype(bf), p["ca_bq"] * scale), S)
    w_kv = jnp.concatenate([p["ca_wk"], p["ca_wv"]], axis=1).astype(bf)
    b_kv = jnp.concatenate([p["ca_bk"], p["ca_bv"]], axis=1)
    kv = mm(enc2d, w_kv, b_kv)
    kc, vc = heads(kv[:, :D], S_enc), heads(kv[:, D:], S_enc)
    ca = unheads(attn(qc, kc, vc, src_bias), S)
    x2 = mm_res_ln(ca, p["ca_wo"].astype(bf), p["ca_bo"], x1, p["g2"], p["be2"])

    # ---- feed-forward + residual + norm3 (dropout == identity, eval mode)
    h = mm(x2, p["ff_w1"].astype(bf), p["ff_b1"], relu=True)
    out2d = mm_res_ln(h, p["ff_w2"].astype(bf), p["ff_b2"], x2, p["g3"], p["be3"])
    return out2d.reshape(B, S, D)


def _mask_to_bias(mask):
    # mask > 0 -> keep (bias 0), else -> masked (bias -1e9).
    return jnp.where(mask > 0, 0.0, NEG_INF).astype(jnp.bfloat16)


def decoder_layer(x, enc_output, src_mask, tgt_mask, params, *, num_heads):
    tgt_bias = _mask_to_bias(tgt_mask)
    src_bias = _mask_to_bias(src_mask)
    return _compose(x, enc_output, tgt_bias, src_bias, params, num_heads,
                    _matmul_bias, _matmul_res_ln, _flash_attention)


def decoder_layer_reference(x, enc_output, src_mask, tgt_mask, params, *, num_heads):
    tgt_bias = _mask_to_bias(tgt_mask)
    src_bias = _mask_to_bias(src_mask)
    return _compose(x, enc_output, tgt_bias, src_bias, params, num_heads,
                    _ref_matmul_bias, _ref_matmul_res_ln, _ref_attention)


# ----------------------------- parameter init ---------------------------------------
def init_params(key, d_model, d_ff):
    def lin(k, fan_in, fan_out):
        return 0.02 * jax.random.normal(k, (fan_in, fan_out), jnp.float32)

    keys = jax.random.split(key, 16)
    p = {}
    ki = iter(keys)
    for prefix in ("sa", "ca"):
        for name in ("q", "k", "v", "o"):
            p[f"{prefix}_w{name}"] = lin(next(ki), d_model, d_model)
            p[f"{prefix}_b{name}"] = jnp.zeros((1, d_model), jnp.float32)
    p["ff_w1"] = lin(next(ki), d_model, d_ff)
    p["ff_b1"] = jnp.zeros((1, d_ff), jnp.float32)
    p["ff_w2"] = lin(next(ki), d_ff, d_model)
    p["ff_b2"] = jnp.zeros((1, d_model), jnp.float32)
    for i in (1, 2, 3):
        p[f"g{i}"] = jnp.ones((1, d_model), jnp.float32)
        p[f"be{i}"] = jnp.zeros((1, d_model), jnp.float32)
    return p


# ----------------------------- demo --------------------------------------------------
if __name__ == "__main__":
    B, S, S_enc = 2, 8, 10
    d_model, num_heads, d_ff = 32, 4, 64

    key = jax.random.PRNGKey(0)
    kx, kenc, kp = jax.random.split(key, 3)
    x = jax.random.normal(kx, (B, S, d_model), jnp.float32)
    enc = jax.random.normal(kenc, (B, S_enc, d_model), jnp.float32)

    # causal target mask, all-ones source mask (1 = attend, 0 = masked)
    tgt_mask = jnp.tril(jnp.ones((S, S), jnp.float32))[None].repeat(B, axis=0)
    src_mask = jnp.ones((B, S, S_enc), jnp.float32)

    params = init_params(kp, d_model, d_ff)

    layer = jax.jit(functools.partial(decoder_layer, num_heads=num_heads))
    out = jax.block_until_ready(layer(x, enc, src_mask, tgt_mask, params))

    ref = decoder_layer_reference(x, enc, src_mask, tgt_mask, params,
                                  num_heads=num_heads)
    assert out.shape == (B, S, d_model)
    assert not bool(jnp.any(jnp.isnan(out)))
    out_f32 = out.astype(jnp.float32)
    ref_f32 = ref.astype(jnp.float32)
    assert jnp.allclose(out_f32, ref_f32, atol=3e-2, rtol=3e-2), \
        float(jnp.max(jnp.abs(out_f32 - ref_f32)))

    print("KERNEL_OK")
</pallas_src>

<mosaic_0001>
module attributes {stable_mosaic.version = 11 : i64} {
  func.func @_flash_attn_kernel(%arg0: i32, %arg1: i32, %arg2: i32, %arg3: memref<1x4x8x8xbf16, #tpu.memory_space<vmem>>, %arg4: memref<1x4x8x8xbf16, #tpu.memory_space<vmem>>, %arg5: memref<1x4x8x8xbf16, #tpu.memory_space<vmem>>, %arg6: memref<1x8x8xbf16, #tpu.memory_space<vmem>>, %arg7: memref<1x4x8x8xbf16, #tpu.memory_space<vmem>>, %arg8: memref<4x8x1xf32, #tpu.memory_space<vmem>>, %arg9: memref<4x8x1xf32, #tpu.memory_space<vmem>>, %arg10: memref<4x8x8xf32, #tpu.memory_space<vmem>>) attributes {dimension_semantics = [#tpu.dimension_semantics<parallel>, #tpu.dimension_semantics<parallel>, #tpu.dimension_semantics<arbitrary>], iteration_bounds = array<i64: 2, 1, 1>, scalar_prefetch = 0 : i64, scratch_operands = 3 : i64, tpu.core_type = #tpu.core_type<tc>, window_params = [{transform_indices = @transform_0, window_bounds = array<i64: 1, 4, 8, 8>}, {transform_indices = @transform_1, window_bounds = array<i64: 1, 4, 8, 8>}, {transform_indices = @transform_2, window_bounds = array<i64: 1, 4, 8, 8>}, {transform_indices = @transform_3, window_bounds = array<i64: 1, 8, 8>}, {transform_indices = @transform_4, window_bounds = array<i64: 1, 4, 8, 8>}]} {
    %c0_i32 = arith.constant 0 : i32
    %0 = arith.cmpi eq, %arg2, %c0_i32 : i32
    %1 = arith.extui %0 : i1 to i32
    %c0_i32_0 = arith.constant 0 : i32
    %2 = arith.cmpi ne, %1, %c0_i32_0 : i32
    scf.if %2 {
      %cst_38 = arith.constant 0xFF800000 : f32
      %42 = vector.broadcast %cst_38 : f32 to vector<4x8x1xf32>
      %c0_39 = arith.constant 0 : index
      %c0_40 = arith.constant 0 : index
      %c0_41 = arith.constant 0 : index
      %43 = vector.load %arg8[%c0_39, %c0_40, %c0_41] : memref<4x8x1xf32, #tpu.memory_space<vmem>>, vector<4x8x1xf32>
      tpu.vector_store %arg8[%c0_39, %c0_40, %c0_41], %42 {strides = array<i32>} : memref<4x8x1xf32, #tpu.memory_space<vmem>>, vector<4x8x1xf32>,
      %cst_42 = arith.constant 0.000000e+00 : f32
      %44 = vector.broadcast %cst_42 : f32 to vector<4x8x1xf32>
      %c0_43 = arith.constant 0 : index
      %c0_44 = arith.constant 0 : index
      %c0_45 = arith.constant 0 : index
      %45 = vector.load %arg9[%c0_43, %c0_44, %c0_45] : memref<4x8x1xf32, #tpu.memory_space<vmem>>, vector<4x8x1xf32>
      tpu.vector_store %arg9[%c0_43, %c0_44, %c0_45], %44 {strides = array<i32>} : memref<4x8x1xf32, #tpu.memory_space<vmem>>, vector<4x8x1xf32>,
      %cst_46 = arith.constant 0.000000e+00 : f32
      %46 = vector.broadcast %cst_46 : f32 to vector<4x8x8xf32>
      %c0_47 = arith.constant 0 : index
      %c0_48 = arith.constant 0 : index
      %c0_49 = arith.constant 0 : index
      %47 = vector.load %arg10[%c0_47, %c0_48, %c0_49] : memref<4x8x8xf32, #tpu.memory_space<vmem>>, vector<4x8x8xf32>
      tpu.vector_store %arg10[%c0_47, %c0_48, %c0_49], %46 {strides = array<i32>} : memref<4x8x8xf32, #tpu.memory_space<vmem>>, vector<4x8x8xf32>,
    } else {
    }
    %c0 = arith.constant 0 : index
    %c0_1 = arith.constant 0 : index
    %c0_2 = arith.constant 0 : index
    %c0_3 = arith.constant 0 : index
    %3 = vector.load %arg3[%c0, %c0_1, %c0_2, %c0_3] : memref<1x4x8x8xbf16, #tpu.memory_space<vmem>>, vector<1x4x8x8xbf16>
    %4 = vector.shape_cast %3 : vector<1x4x8x8xbf16> to vector<4x8x8xbf16>
    %c0_4 = arith.constant 0 : index
    %c0_5 = arith.constant 0 : index
    %c0_6 = arith.constant 0 : index
    %c0_7 = arith.constant 0 : index
    %5 = vector.load %arg4[%c0_4, %c0_5, %c0_6, %c0_7] : memref<1x4x8x8xbf16, #tpu.memory_space<vmem>>, vector<1x4x8x8xbf16>
    %6 = vector.shape_cast %5 : vector<1x4x8x8xbf16> to vector<4x8x8xbf16>
    "tpu.trace_start"() <{level = 10 : i32, message = "hqd,hkd->hqk"}> : () -> ()
    %cst = arith.constant dense<0.000000e+00> : vector<4x8x8xf32>
    %7 = tpu.matmul %4, %6, %cst {dimension_numbers = #tpu.dot_dimension_numbers<[2], [2], [1], [1], [0, 0, 0, 1, 1, 1], [0], [0]>} : vector<4x8x8xbf16>, vector<4x8x8xbf16>, vector<4x8x8xf32> -> vector<4x8x8xf32>
    "tpu.trace_stop"() : () -> ()
    %c0_8 = arith.constant 0 : index
    %c0_9 = arith.constant 0 : index
    %c0_10 = arith.constant 0 : index
    %8 = vector.load %arg6[%c0_8, %c0_9, %c0_10] : memref<1x8x8xbf16, #tpu.memory_space<vmem>>, vector<1x8x8xbf16>
    %9 = vector.shape_cast %8 : vector<1x8x8xbf16> to vector<8x8xbf16>
    %10 = vector.shape_cast %9 : vector<8x8xbf16> to vector<1x8x8xbf16>
    %11 = arith.extf %10 : vector<1x8x8xbf16> to vector<1x8x8xf32>
    %12 = vector.broadcast %11 : vector<1x8x8xf32> to vector<4x8x8xf32>
    %13 = arith.addf %7, %12 : vector<4x8x8xf32>
    %c0_11 = arith.constant 0 : index
    %c0_12 = arith.constant 0 : index
    %c0_13 = arith.constant 0 : index
    %14 = vector.load %arg8[%c0_11, %c0_12, %c0_13] : memref<4x8x1xf32, #tpu.memory_space<vmem>>, vector<4x8x1xf32>
    %cst_14 = arith.constant dense<0xFF800000> : vector<4x8xf32>
    %15 = vector.multi_reduction <maximumf>, %13, %cst_14 [2] : vector<4x8x8xf32> to vector<4x8xf32>
    %16 = vector.shape_cast %15 : vector<4x8xf32> to vector<4x8x1xf32>
    %17 = arith.maximumf %14, %16 : vector<4x8x1xf32>
    %18 = arith.subf %14, %17 : vector<4x8x1xf32>
    %19 = math.exp %18 : vector<4x8x1xf32>
    %20 = vector.broadcast %17 : vector<4x8x1xf32> to vector<4x8x8xf32>
    %21 = arith.subf %13, %20 : vector<4x8x8xf32>
    %22 = math.exp %21 : vector<4x8x8xf32>
    %c0_15 = arith.constant 0 : index
    %c0_16 = arith.constant 0 : index
    %c0_17 = arith.constant 0 : index
    %23 = vector.load %arg9[%c0_15, %c0_16, %c0_17] : memref<4x8x1xf32, #tpu.memory_space<vmem>>, vector<4x8x1xf32>
    %24 = arith.mulf %19, %23 : vector<4x8x1xf32>
    %cst_18 = arith.constant dense<0.000000e+00> : vector<4x8xf32>
    %25 = vector.multi_reduction <add>, %22, %cst_18 [2] : vector<4x8x8xf32> to vector<4x8xf32>
    %26 = vector.shape_cast %25 : vector<4x8xf32> to vector<4x8x1xf32>
    %27 = arith.addf %24, %26 : vector<4x8x1xf32>
    %c0_19 = arith.constant 0 : index
    %c0_20 = arith.constant 0 : index
    %c0_21 = arith.constant 0 : index
    %28 = vector.load %arg9[%c0_19, %c0_20, %c0_21] : memref<4x8x1xf32, #tpu.memory_space<vmem>>, vector<4x8x1xf32>
    tpu.vector_store %arg9[%c0_19, %c0_20, %c0_21], %27 {strides = array<i32>} : memref<4x8x1xf32, #tpu.memory_space<vmem>>, vector<4x8x1xf32>,
    %c0_22 = arith.constant 0 : index
    %c0_23 = arith.constant 0 : index
    %c0_24 = arith.constant 0 : index
    %29 = vector.load %arg10[%c0_22, %c0_23, %c0_24] : memref<4x8x8xf32, #tpu.memory_space<vmem>>, vector<4x8x8xf32>
    %30 = vector.broadcast %19 : vector<4x8x1xf32> to vector<4x8x8xf32>
    %31 = arith.mulf %30, %29 : vector<4x8x8xf32>
    %32 = arith.truncf %22 : vector<4x8x8xf32> to vector<4x8x8xbf16>
    %c0_25 = arith.constant 0 : index
    %c0_26 = arith.constant 0 : index
    %c0_27 = arith.constant 0 : index
    %c0_28 = arith.constant 0 : index
    %33 = vector.load %arg5[%c0_25, %c0_26, %c0_27, %c0_28] : memref<1x4x8x8xbf16, #tpu.memory_space<vmem>>, vector<1x4x8x8xbf16>
    %34 = vector.shape_cast %33 : vector<1x4x8x8xbf16> to vector<4x8x8xbf16>
    "tpu.trace_start"() <{level = 10 : i32, message = "hqk,hkd->hqd"}> : () -> ()
    %cst_29 = arith.constant dense<0.000000e+00> : vector<4x8x8xf32>
    %35 = tpu.matmul %32, %34, %cst_29 {dimension_numbers = #tpu.dot_dimension_numbers<[2], [1], [1], [2], [0, 0, 0, 1, 1, 2], [0], [0]>} : vector<4x8x8xbf16>, vector<4x8x8xbf16>, vector<4x8x8xf32> -> vector<4x8x8xf32>
    "tpu.trace_stop"() : () -> ()
    %36 = arith.addf %31, %35 : vector<4x8x8xf32>
    %c0_30 = arith.constant 0 : index
    %c0_31 = arith.constant 0 : index
    %c0_32 = arith.constant 0 : index
    %37 = vector.load %arg10[%c0_30, %c0_31, %c0_32] : memref<4x8x8xf32, #tpu.memory_space<vmem>>, vector<4x8x8xf32>
    tpu.vector_store %arg10[%c0_30, %c0_31, %c0_32], %36 {strides = array<i32>} : memref<4x8x8xf32, #tpu.memory_space<vmem>>, vector<4x8x8xf32>,
    %c0_33 = arith.constant 0 : index
    %c0_34 = arith.constant 0 : index
    %c0_35 = arith.constant 0 : index
    %38 = vector.load %arg8[%c0_33, %c0_34, %c0_35] : memref<4x8x1xf32, #tpu.memory_space<vmem>>, vector<4x8x1xf32>
    tpu.vector_store %arg8[%c0_33, %c0_34, %c0_35], %17 {strides = array<i32>} : memref<4x8x1xf32, #tpu.memory_space<vmem>>, vector<4x8x1xf32>,
    %c0_i32_36 = arith.constant 0 : i32
    %39 = arith.cmpi eq, %arg2, %c0_i32_36 : i32
    %40 = arith.extui %39 : i1 to i32
    %c0_i32_37 = arith.constant 0 : i32
    %41 = arith.cmpi ne, %40, %c0_i32_37 : i32
    scf.if %41 {
      %c0_38 = arith.constant 0 : index
      %c0_39 = arith.constant 0 : index
      %c0_40 = arith.constant 0 : index
      %42 = vector.load %arg9[%c0_38, %c0_39, %c0_40] : memref<4x8x1xf32, #tpu.memory_space<vmem>>, vector<4x8x1xf32>
      %43 = tpu.reciprocal %42 {approx = true} : vector<4x8x1xf32> -> vector<4x8x1xf32>
      %c0_41 = arith.constant 0 : index
      %c0_42 = arith.constant 0 : index
      %c0_43 = arith.constant 0 : index
      %44 = vector.load %arg10[%c0_41, %c0_42, %c0_43] : memref<4x8x8xf32, #tpu.memory_space<vmem>>, vector<4x8x8xf32>
      %45 = vector.broadcast %43 : vector<4x8x1xf32> to vector<4x8x8xf32>
      %46 = arith.mulf %44, %45 : vector<4x8x8xf32>
      %47 = arith.truncf %46 : vector<4x8x8xf32> to vector<4x8x8xbf16>
      %c0_44 = arith.constant 0 : index
      %c0_45 = arith.constant 0 : index
      %c0_46 = arith.constant 0 : index
      %c0_47 = arith.constant 0 : index
      %48 = vector.load %arg7[%c0_44, %c0_45, %c0_46, %c0_47] : memref<1x4x8x8xbf16, #tpu.memory_space<vmem>>, vector<1x4x8x8xbf16>
      %49 = vector.shape_cast %48 : vector<1x4x8x8xbf16> to vector<4x8x8xbf16>
      %50 = vector.shape_cast %47 : vector<4x8x8xbf16> to vector<1x4x8x8xbf16>
      tpu.vector_store %arg7[%c0_44, %c0_45, %c0_46, %c0_47], %50 {strides = array<i32>} : memref<1x4x8x8xbf16, #tpu.memory_space<vmem>>, vector<1x4x8x8xbf16>,
    } else {
    }
    return
  }
  func.func @transform_0(%arg0: i32, %arg1: i32, %arg2: i32) -> (i32, i32, i32, i32) {
    %c0_i32 = arith.constant 0 : i32
    %c0_i32_0 = arith.constant 0 : i32
    %c0_i32_1 = arith.constant 0 : i32
    return %arg0, %c0_i32, %arg1, %c0_i32_0 : i32, i32, i32, i32
  }
  func.func @transform_1(%arg0: i32, %arg1: i32, %arg2: i32) -> (i32, i32, i32, i32) {
    %c0_i32 = arith.constant 0 : i32
    %c0_i32_0 = arith.constant 0 : i32
    %c0_i32_1 = arith.constant 0 : i32
    return %arg0, %c0_i32, %arg2, %c0_i32_0 : i32, i32, i32, i32
  }
  func.func @transform_2(%arg0: i32, %arg1: i32, %arg2: i32) -> (i32, i32, i32, i32) {
    %c0_i32 = arith.constant 0 : i32
    %c0_i32_0 = arith.constant 0 : i32
    %c0_i32_1 = arith.constant 0 : i32
    return %arg0, %c0_i32, %arg2, %c0_i32_0 : i32, i32, i32, i32
  }
  func.func @transform_3(%arg0: i32, %arg1: i32, %arg2: i32) -> (i32, i32, i32) {
    %c0_i32 = arith.constant 0 : i32
    return %arg0, %arg1, %arg2 : i32, i32, i32
  }
  func.func @transform_4(%arg0: i32, %arg1: i32, %arg2: i32) -> (i32, i32, i32, i32) {
    %c0_i32 = arith.constant 0 : i32
    %c0_i32_0 = arith.constant 0 : i32
    %c0_i32_1 = arith.constant 0 : i32
    return %arg0, %c0_i32, %arg1, %c0_i32_0 : i32, i32, i32, i32
  }
}

module attributes {stable_mosaic.version = 11 : i64} {
  func.func @_matmul_bias_kernel(%arg0: i32, %arg1: i32, %arg2: i32, %arg3: memref<16x32xbf16, #tpu.memory_space<vmem>>, %arg4: memref<32x96xbf16, #tpu.memory_space<vmem>>, %arg5: memref<1x96xf32, #tpu.memory_space<vmem>>, %arg6: memref<16x96xbf16, #tpu.memory_space<vmem>>, %arg7: memref<16x96xf32, #tpu.memory_space<vmem>>) attributes {dimension_semantics = [#tpu.dimension_semantics<parallel>, #tpu.dimension_semantics<parallel>, #tpu.dimension_semantics<arbitrary>], iteration_bounds = array<i64: 1, 1, 1>, scalar_prefetch = 0 : i64, scratch_operands = 1 : i64, tpu.core_type = #tpu.core_type<tc>, window_params = [{transform_indices = @transform_0, window_bounds = array<i64: 16, 32>}, {transform_indices = @transform_1, window_bounds = array<i64: 32, 96>}, {transform_indices = @transform_2, window_bounds = array<i64: 1, 96>}, {transform_indices = @transform_3, window_bounds = array<i64: 16, 96>}]} {
    %c0_i32 = arith.constant 0 : i32
    %0 = arith.cmpi eq, %arg2, %c0_i32 : i32
    %1 = arith.extui %0 : i1 to i32
    %c0_i32_0 = arith.constant 0 : i32
    %2 = arith.cmpi ne, %1, %c0_i32_0 : i32
    scf.if %2 {
      %cst_10 = arith.constant 0.000000e+00 : f32
      %12 = vector.broadcast %cst_10 : f32 to vector<16x96xf32>
      %c0_11 = arith.constant 0 : index
      %c0_12 = arith.constant 0 : index
      %13 = vector.load %arg7[%c0_11, %c0_12] : memref<16x96xf32, #tpu.memory_space<vmem>>, vector<16x96xf32>
      tpu.vector_store %arg7[%c0_11, %c0_12], %12 {strides = array<i32>} : memref<16x96xf32, #tpu.memory_space<vmem>>, vector<16x96xf32>,
    } else {
    }
    %c0 = arith.constant 0 : index
    %c0_1 = arith.constant 0 : index
    %3 = vector.load %arg7[%c0, %c0_1] : memref<16x96xf32, #tpu.memory_space<vmem>>, vector<16x96xf32>
    %c0_2 = arith.constant 0 : index
    %c0_3 = arith.constant 0 : index
    %4 = vector.load %arg3[%c0_2, %c0_3] : memref<16x32xbf16, #tpu.memory_space<vmem>>, vector<16x32xbf16>
    %c0_4 = arith.constant 0 : index
    %c0_5 = arith.constant 0 : index
    %5 = vector.load %arg4[%c0_4, %c0_5] : memref<32x96xbf16, #tpu.memory_space<vmem>>, vector<32x96xbf16>
    %cst = arith.constant dense<0.000000e+00> : vector<16x96xf32>
    %6 = tpu.matmul %4, %5, %cst {dimension_numbers = #tpu.dot_dimension_numbers<[1], [0], [0], [1], [0, 0, 1, 1], [], []>} : vector<16x32xbf16>, vector<32x96xbf16>, vector<16x96xf32> -> vector<16x96xf32>
    %7 = arith.addf %3, %6 : vector<16x96xf32>
    %c0_6 = arith.constant 0 : index
    %c0_7 = arith.constant 0 : index
    %8 = vector.load %arg7[%c0_6, %c0_7] : memref<16x96xf32, #tpu.memory_space<vmem>>, vector<16x96xf32>
    tpu.vector_store %arg7[%c0_6, %c0_7], %7 {strides = array<i32>} : memref<16x96xf32, #tpu.memory_space<vmem>>, vector<16x96xf32>,
    %c0_i32_8 = arith.constant 0 : i32
    %9 = arith.cmpi eq, %arg2, %c0_i32_8 : i32
    %10 = arith.extui %9 : i1 to i32
    %c0_i32_9 = arith.constant 0 : i32
    %11 = arith.cmpi ne, %10, %c0_i32_9 : i32
    scf.if %11 {
      %c0_10 = arith.constant 0 : index
      %c0_11 = arith.constant 0 : index
      %12 = vector.load %arg7[%c0_10, %c0_11] : memref<16x96xf32, #tpu.memory_space<vmem>>, vector<16x96xf32>
      %c0_12 = arith.constant 0 : index
      %c0_13 = arith.constant 0 : index
      %13 = vector.load %arg5[%c0_12, %c0_13] : memref<1x96xf32, #tpu.memory_space<vmem>>, vector<1x96xf32>
      %14 = vector.broadcast %13 : vector<1x96xf32> to vector<16x96xf32>
      %15 = arith.addf %12, %14 : vector<16x96xf32>
      %16 = arith.truncf %15 : vector<16x96xf32> to vector<16x96xbf16>
      %c0_14 = arith.constant 0 : index
      %c0_15 = arith.constant 0 : index
      %17 = vector.load %arg6[%c0_14, %c0_15] : memref<16x96xbf16, #tpu.memory_space<vmem>>, vector<16x96xbf16>
      tpu.vector_store %arg6[%c0_14, %c0_15], %16 {strides = array<i32>} : memref<16x96xbf16, #tpu.memory_space<vmem>>, vector<16x96xbf16>,
    } else {
    }
    return
  }
  func.func @transform_0(%arg0: i32, %arg1: i32, %arg2: i32) -> (i32, i32) {
    %c0_i32 = arith.constant 0 : i32
    return %arg0, %arg2 : i32, i32
  }
  func.func @transform_1(%arg0: i32, %arg1: i32, %arg2: i32) -> (i32, i32) {
    %c0_i32 = arith.constant 0 : i32
    return %arg2, %arg1 : i32, i32
  }
  func.func @transform_2(%arg0: i32, %arg1: i32, %arg2: i32) -> (i32, i32) {
    %c0_i32 = arith.constant 0 : i32
    %c0_i32_0 = arith.constant 0 : i32
    return %c0_i32, %arg1 : i32, i32
  }
  func.func @transform_3(%arg0: i32, %arg1: i32, %arg2: i32) -> (i32, i32) {
    %c0_i32 = arith.constant 0 : i32
    return %arg0, %arg1 : i32, i32
  }
}

module attributes {stable_mosaic.version = 11 : i64} {
  func.func @_matmul_res_ln_kernel(%arg0: i32, %arg1: i32, %arg2: memref<16x32xbf16, #tpu.memory_space<vmem>>, %arg3: memref<32x32xbf16, #tpu.memory_space<vmem>>, %arg4: memref<1x32xf32, #tpu.memory_space<vmem>>, %arg5: memref<16x32xbf16, #tpu.memory_space<vmem>>, %arg6: memref<1x32xf32, #tpu.memory_space<vmem>>, %arg7: memref<1x32xf32, #tpu.memory_space<vmem>>, %arg8: memref<16x32xbf16, #tpu.memory_space<vmem>>, %arg9: memref<16x32xf32, #tpu.memory_space<vmem>>) attributes {dimension_semantics = [#tpu.dimension_semantics<parallel>, #tpu.dimension_semantics<arbitrary>], iteration_bounds = array<i64: 1, 1>, scalar_prefetch = 0 : i64, scratch_operands = 1 : i64, tpu.core_type = #tpu.core_type<tc>, window_params = [{transform_indices = @transform_0, window_bounds = array<i64: 16, 32>}, {transform_indices = @transform_1, window_bounds = array<i64: 32, 32>}, {pipeline_mode = #tpu.pipeline_mode<synchronous>, transform_indices = @transform_2, window_bounds = array<i64: 1, 32>}, {transform_indices = @transform_3, window_bounds = array<i64: 16, 32>}, {pipeline_mode = #tpu.pipeline_mode<synchronous>, transform_indices = @transform_4, window_bounds = array<i64: 1, 32>}, {pipeline_mode = #tpu.pipeline_mode<synchronous>, transform_indices = @transform_5, window_bounds = array<i64: 1, 32>}, {transform_indices = @transform_6, window_bounds = array<i64: 16, 32>}]} {
    %c0_i32 = arith.constant 0 : i32
    %0 = arith.cmpi eq, %arg1, %c0_i32 : i32
    %1 = arith.extui %0 : i1 to i32
    %c0_i32_0 = arith.constant 0 : i32
    %2 = arith.cmpi ne, %1, %c0_i32_0 : i32
    scf.if %2 {
      %cst_10 = arith.constant 0.000000e+00 : f32
      %12 = vector.broadcast %cst_10 : f32 to vector<16x32xf32>
      %c0_11 = arith.constant 0 : index
      %c0_12 = arith.constant 0 : index
      %13 = vector.load %arg9[%c0_11, %c0_12] : memref<16x32xf32, #tpu.memory_space<vmem>>, vector<16x32xf32>
      tpu.vector_store %arg9[%c0_11, %c0_12], %12 {strides = array<i32>} : memref<16x32xf32, #tpu.memory_space<vmem>>, vector<16x32xf32>,
    } else {
    }
    %c0 = arith.constant 0 : index
    %c0_1 = arith.constant 0 : index
    %3 = vector.load %arg9[%c0, %c0_1] : memref<16x32xf32, #tpu.memory_space<vmem>>, vector<16x32xf32>
    %c0_2 = arith.constant 0 : index
    %c0_3 = arith.constant 0 : index
    %4 = vector.load %arg2[%c0_2, %c0_3] : memref<16x32xbf16, #tpu.memory_space<vmem>>, vector<16x32xbf16>
    %c0_4 = arith.constant 0 : index
    %c0_5 = arith.constant 0 : index
    %5 = vector.load %arg3[%c0_4, %c0_5] : memref<32x32xbf16, #tpu.memory_space<vmem>>, vector<32x32xbf16>
    %cst = arith.constant dense<0.000000e+00> : vector<16x32xf32>
    %6 = tpu.matmul %4, %5, %cst {dimension_numbers = #tpu.dot_dimension_numbers<[1], [0], [0], [1], [0, 0, 1, 1], [], []>} : vector<16x32xbf16>, vector<32x32xbf16>, vector<16x32xf32> -> vector<16x32xf32>
    %7 = arith.addf %3, %6 : vector<16x32xf32>
    %c0_6 = arith.constant 0 : index
    %c0_7 = arith.constant 0 : index
    %8 = vector.load %arg9[%c0_6, %c0_7] : memref<16x32xf32, #tpu.memory_space<vmem>>, vector<16x32xf32>
    tpu.vector_store %arg9[%c0_6, %c0_7], %7 {strides = array<i32>} : memref<16x32xf32, #tpu.memory_space<vmem>>, vector<16x32xf32>,
    %c0_i32_8 = arith.constant 0 : i32
    %9 = arith.cmpi eq, %arg1, %c0_i32_8 : i32
    %10 = arith.extui %9 : i1 to i32
    %c0_i32_9 = arith.constant 0 : i32
    %11 = arith.cmpi ne, %10, %c0_i32_9 : i32
    scf.if %11 {
      %c0_10 = arith.constant 0 : index
      %c0_11 = arith.constant 0 : index
      %12 = vector.load %arg9[%c0_10, %c0_11] : memref<16x32xf32, #tpu.memory_space<vmem>>, vector<16x32xf32>
      %c0_12 = arith.constant 0 : index
      %c0_13 = arith.constant 0 : index
      %13 = vector.load %arg4[%c0_12, %c0_13] : memref<1x32xf32, #tpu.memory_space<vmem>>, vector<1x32xf32>
      %14 = vector.broadcast %13 : vector<1x32xf32> to vector<16x32xf32>
      %15 = arith.addf %12, %14 : vector<16x32xf32>
      %c0_14 = arith.constant 0 : index
      %c0_15 = arith.constant 0 : index
      %16 = vector.load %arg5[%c0_14, %c0_15] : memref<16x32xbf16, #tpu.memory_space<vmem>>, vector<16x32xbf16>
      %17 = arith.extf %16 : vector<16x32xbf16> to vector<16x32xf32>
      %18 = arith.addf %15, %17 : vector<16x32xf32>
      %cst_16 = arith.constant dense<0.000000e+00> : vector<16xf32>
      %19 = vector.multi_reduction <add>, %18, %cst_16 [1] : vector<16x32xf32> to vector<16xf32>
      %20 = vector.shape_cast %19 : vector<16xf32> to vector<16x1xf32>
      %cst_17 = arith.constant 3.200000e+01 : f32
      %21 = vector.broadcast %cst_17 : f32 to vector<16x1xf32>
      %22 = arith.divf %20, %21 : vector<16x1xf32>
      %23 = arith.mulf %18, %18 : vector<16x32xf32>
      %cst_18 = arith.constant dense<0.000000e+00> : vector<16xf32>
      %24 = vector.multi_reduction <add>, %23, %cst_18 [1] : vector<16x32xf32> to vector<16xf32>
      %25 = vector.shape_cast %24 : vector<16xf32> to vector<16x1xf32>
      %cst_19 = arith.constant 3.200000e+01 : f32
      %26 = vector.broadcast %cst_19 : f32 to vector<16x1xf32>
      %27 = arith.divf %25, %26 : vector<16x1xf32>
      %28 = arith.mulf %22, %22 : vector<16x1xf32>
      %29 = arith.subf %27, %28 : vector<16x1xf32>
      %cst_20 = arith.constant 0.000000e+00 : f32
      %30 = vector.broadcast %cst_20 : f32 to vector<16x1xf32>
      %31 = arith.maximumf %29, %30 : vector<16x1xf32>
      %32 = vector.broadcast %22 : vector<16x1xf32> to vector<16x32xf32>
      %33 = arith.subf %18, %32 : vector<16x32xf32>
      %cst_21 = arith.constant 9.99999997E-7 : f32
      %34 = vector.broadcast %cst_21 : f32 to vector<16x1xf32>
      %35 = arith.addf %31, %34 : vector<16x1xf32>
      %36 = math.rsqrt %35 : vector<16x1xf32>
      %37 = vector.broadcast %36 : vector<16x1xf32> to vector<16x32xf32>
      %38 = arith.mulf %33, %37 : vector<16x32xf32>
      %c0_22 = arith.constant 0 : index
      %c0_23 = arith.constant 0 : index
      %39 = vector.load %arg6[%c0_22, %c0_23] : memref<1x32xf32, #tpu.memory_space<vmem>>, vector<1x32xf32>
      %40 = vector.broadcast %39 : vector<1x32xf32> to vector<16x32xf32>
      %41 = arith.mulf %38, %40 : vector<16x32xf32>
      %c0_24 = arith.constant 0 : index
      %c0_25 = arith.constant 0 : index
      %42 = vector.load %arg7[%c0_24, %c0_25] : memref<1x32xf32, #tpu.memory_space<vmem>>, vector<1x32xf32>
      %43 = vector.broadcast %42 : vector<1x32xf32> to vector<16x32xf32>
      %44 = arith.addf %41, %43 : vector<16x32xf32>
      %45 = arith.truncf %44 : vector<16x32xf32> to vector<16x32xbf16>
      %c0_26 = arith.constant 0 : index
      %c0_27 = arith.constant 0 : index
      %46 = vector.load %arg8[%c0_26, %c0_27] : memref<16x32xbf16, #tpu.memory_space<vmem>>, vector<16x32xbf16>
      tpu.vector_store %arg8[%c0_26, %c0_27], %45 {strides = array<i32>} : memref<16x32xbf16, #tpu.memory_space<vmem>>, vector<16x32xbf16>,
    } else {
    }
    return
  }
  func.func @transform_0(%arg0: i32, %arg1: i32) -> (i32, i32) {
    %c0_i32 = arith.constant 0 : i32
    return %arg0, %arg1 : i32, i32
  }
  func.func @transform_1(%arg0: i32, %arg1: i32) -> (i32, i32) {
    %c0_i32 = arith.constant 0 : i32
    %c0_i32_0 = arith.constant 0 : i32
    return %arg1, %c0_i32 : i32, i32
  }
  func.func @transform_2(%arg0: i32, %arg1: i32) -> (i32, i32) {
    %c0_i32 = arith.constant 0 : i32
    %c0_i32_0 = arith.constant 0 : i32
    %c0_i32_1 = arith.constant 0 : i32
    return %c0_i32, %c0_i32_0 : i32, i32
  }
  func.func @transform_3(%arg0: i32, %arg1: i32) -> (i32, i32) {
    %c0_i32 = arith.constant 0 : i32
    %c0_i32_0 = arith.constant 0 : i32
    return %arg0, %c0_i32 : i32, i32
  }
  func.func @transform_4(%arg0: i32, %arg1: i32) -> (i32, i32) {
    %c0_i32 = arith.constant 0 : i32
    %c0_i32_0 = arith.constant 0 : i32
    %c0_i32_1 = arith.constant 0 : i32
    return %c0_i32, %c0_i32_0 : i32, i32
  }
  func.func @transform_5(%arg0: i32, %arg1: i32) -> (i32, i32) {
    %c0_i32 = arith.constant 0 : i32
    %c0_i32_0 = arith.constant 0 : i32
    %c0_i32_1 = arith.constant 0 : i32
    return %c0_i32, %c0_i32_0 : i32, i32
  }
  func.func @transform_6(%arg0: i32, %arg1: i32) -> (i32, i32) {
    %c0_i32 = arith.constant 0 : i32
    %c0_i32_0 = arith.constant 0 : i32
    return %arg0, %c0_i32 : i32, i32
  }
}

module attributes {stable_mosaic.version = 11 : i64} {
  func.func @_matmul_bias_kernel(%arg0: i32, %arg1: i32, %arg2: i32, %arg3: memref<16x32xbf16, #tpu.memory_space<vmem>>, %arg4: memref<32x32xbf16, #tpu.memory_space<vmem>>, %arg5: memref<1x32xf32, #tpu.memory_space<vmem>>, %arg6: memref<16x32xbf16, #tpu.memory_space<vmem>>, %arg7: memref<16x32xf32, #tpu.memory_space<vmem>>) attributes {dimension_semantics = [#tpu.dimension_semantics<parallel>, #tpu.dimension_semantics<parallel>, #tpu.dimension_semantics<arbitrary>], iteration_bounds = array<i64: 1, 1, 1>, scalar_prefetch = 0 : i64, scratch_operands = 1 : i64, tpu.core_type = #tpu.core_type<tc>, window_params = [{transform_indices = @transform_0, window_bounds = array<i64: 16, 32>}, {transform_indices = @transform_1, window_bounds = array<i64: 32, 32>}, {transform_indices = @transform_2, window_bounds = array<i64: 1, 32>}, {transform_indices = @transform_3, window_bounds = array<i64: 16, 32>}]} {
    %c0_i32 = arith.constant 0 : i32
    %0 = arith.cmpi eq, %arg2, %c0_i32 : i32
    %1 = arith.extui %0 : i1 to i32
    %c0_i32_0 = arith.constant 0 : i32
    %2 = arith.cmpi ne, %1, %c0_i32_0 : i32
    scf.if %2 {
      %cst_10 = arith.constant 0.000000e+00 : f32
      %12 = vector.broadcast %cst_10 : f32 to vector<16x32xf32>
      %c0_11 = arith.constant 0 : index
      %c0_12 = arith.constant 0 : index
      %13 = vector.load %arg7[%c0_11, %c0_12] : memref<16x32xf32, #tpu.memory_space<vmem>>, vector<16x32xf32>
      tpu.vector_store %arg7[%c0_11, %c0_12], %12 {strides = array<i32>} : memref<16x32xf32, #tpu.memory_space<vmem>>, vector<16x32xf32>,
    } else {
    }
    %c0 = arith.constant 0 : index
    %c0_1 = arith.constant 0 : index
    %3 = vector.load %arg7[%c0, %c0_1] : memref<16x32xf32, #tpu.memory_space<vmem>>, vector<16x32xf32>
    %c0_2 = arith.constant 0 : index
    %c0_3 = arith.constant 0 : index
    %4 = vector.load %arg3[%c0_2, %c0_3] : memref<16x32xbf16, #tpu.memory_space<vmem>>, vector<16x32xbf16>
    %c0_4 = arith.constant 0 : index
    %c0_5 = arith.constant 0 : index
    %5 = vector.load %arg4[%c0_4, %c0_5] : memref<32x32xbf16, #tpu.memory_space<vmem>>, vector<32x32xbf16>
    %cst = arith.constant dense<0.000000e+00> : vector<16x32xf32>
    %6 = tpu.matmul %4, %5, %cst {dimension_numbers = #tpu.dot_dimension_numbers<[1], [0], [0], [1], [0, 0, 1, 1], [], []>} : vector<16x32xbf16>, vector<32x32xbf16>, vector<16x32xf32> -> vector<16x32xf32>
    %7 = arith.addf %3, %6 : vector<16x32xf32>
    %c0_6 = arith.constant 0 : index
    %c0_7 = arith.constant 0 : index
    %8 = vector.load %arg7[%c0_6, %c0_7] : memref<16x32xf32, #tpu.memory_space<vmem>>, vector<16x32xf32>
    tpu.vector_store %arg7[%c0_6, %c0_7], %7 {strides = array<i32>} : memref<16x32xf32, #tpu.memory_space<vmem>>, vector<16x32xf32>,
    %c0_i32_8 = arith.constant 0 : i32
    %9 = arith.cmpi eq, %arg2, %c0_i32_8 : i32
    %10 = arith.extui %9 : i1 to i32
    %c0_i32_9 = arith.constant 0 : i32
    %11 = arith.cmpi ne, %10, %c0_i32_9 : i32
    scf.if %11 {
      %c0_10 = arith.constant 0 : index
      %c0_11 = arith.constant 0 : index
      %12 = vector.load %arg7[%c0_10, %c0_11] : memref<16x32xf32, #tpu.memory_space<vmem>>, vector<16x32xf32>
      %c0_12 = arith.constant 0 : index
      %c0_13 = arith.constant 0 : index
      %13 = vector.load %arg5[%c0_12, %c0_13] : memref<1x32xf32, #tpu.memory_space<vmem>>, vector<1x32xf32>
      %14 = vector.broadcast %13 : vector<1x32xf32> to vector<16x32xf32>
      %15 = arith.addf %12, %14 : vector<16x32xf32>
      %16 = arith.truncf %15 : vector<16x32xf32> to vector<16x32xbf16>
      %c0_14 = arith.constant 0 : index
      %c0_15 = arith.constant 0 : index
      %17 = vector.load %arg6[%c0_14, %c0_15] : memref<16x32xbf16, #tpu.memory_space<vmem>>, vector<16x32xbf16>
      tpu.vector_store %arg6[%c0_14, %c0_15], %16 {strides = array<i32>} : memref<16x32xbf16, #tpu.memory_space<vmem>>, vector<16x32xbf16>,
    } else {
    }
    return
  }
  func.func @transform_0(%arg0: i32, %arg1: i32, %arg2: i32) -> (i32, i32) {
    %c0_i32 = arith.constant 0 : i32
    return %arg0, %arg2 : i32, i32
  }
  func.func @transform_1(%arg0: i32, %arg1: i32, %arg2: i32) -> (i32, i32) {
    %c0_i32 = arith.constant 0 : i32
    return %arg2, %arg1 : i32, i32
  }
  func.func @transform_2(%arg0: i32, %arg1: i32, %arg2: i32) -> (i32, i32) {
    %c0_i32 = arith.constant 0 : i32
    %c0_i32_0 = arith.constant 0 : i32
    return %c0_i32, %arg1 : i32, i32
  }
  func.func @transform_3(%arg0: i32, %arg1: i32, %arg2: i32) -> (i32, i32) {
    %c0_i32 = arith.constant 0 : i32
    return %arg0, %arg1 : i32, i32
  }
}

module attributes {stable_mosaic.version = 11 : i64} {
  func.func @_matmul_bias_kernel(%arg0: i32, %arg1: i32, %arg2: i32, %arg3: memref<20x32xbf16, #tpu.memory_space<vmem>>, %arg4: memref<32x64xbf16, #tpu.memory_space<vmem>>, %arg5: memref<1x64xf32, #tpu.memory_space<vmem>>, %arg6: memref<20x64xbf16, #tpu.memory_space<vmem>>, %arg7: memref<20x64xf32, #tpu.memory_space<vmem>>) attributes {dimension_semantics = [#tpu.dimension_semantics<parallel>, #tpu.dimension_semantics<parallel>, #tpu.dimension_semantics<arbitrary>], iteration_bounds = array<i64: 1, 1, 1>, scalar_prefetch = 0 : i64, scratch_operands = 1 : i64, tpu.core_type = #tpu.core_type<tc>, window_params = [{transform_indices = @transform_0, window_bounds = array<i64: 20, 32>}, {transform_indices = @transform_1, window_bounds = array<i64: 32, 64>}, {transform_indices = @transform_2, window_bounds = array<i64: 1, 64>}, {transform_indices = @transform_3, window_bounds = array<i64: 20, 64>}]} {
    %c0_i32 = arith.constant 0 : i32
    %0 = arith.cmpi eq, %arg2, %c0_i32 : i32
    %1 = arith.extui %0 : i1 to i32
    %c0_i32_0 = arith.constant 0 : i32
    %2 = arith.cmpi ne, %1, %c0_i32_0 : i32
    scf.if %2 {
      %cst_10 = arith.constant 0.000000e+00 : f32
      %12 = vector.broadcast %cst_10 : f32 to vector<20x64xf32>
      %c0_11 = arith.constant 0 : index
      %c0_12 = arith.constant 0 : index
      %13 = vector.load %arg7[%c0_11, %c0_12] : memref<20x64xf32, #tpu.memory_space<vmem>>, vector<20x64xf32>
      tpu.vector_store %arg7[%c0_11, %c0_12], %12 {strides = array<i32>} : memref<20x64xf32, #tpu.memory_space<vmem>>, vector<20x64xf32>,
    } else {
    }
    %c0 = arith.constant 0 : index
    %c0_1 = arith.constant 0 : index
    %3 = vector.load %arg7[%c0, %c0_1] : memref<20x64xf32, #tpu.memory_space<vmem>>, vector<20x64xf32>
    %c0_2 = arith.constant 0 : index
    %c0_3 = arith.constant 0 : index
    %4 = vector.load %arg3[%c0_2, %c0_3] : memref<20x32xbf16, #tpu.memory_space<vmem>>, vector<20x32xbf16>
    %c0_4 = arith.constant 0 : index
    %c0_5 = arith.constant 0 : index
    %5 = vector.load %arg4[%c0_4, %c0_5] : memref<32x64xbf16, #tpu.memory_space<vmem>>, vector<32x64xbf16>
    %cst = arith.constant dense<0.000000e+00> : vector<20x64xf32>
    %6 = tpu.matmul %4, %5, %cst {dimension_numbers = #tpu.dot_dimension_numbers<[1], [0], [0], [1], [0, 0, 1, 1], [], []>} : vector<20x32xbf16>, vector<32x64xbf16>, vector<20x64xf32> -> vector<20x64xf32>
    %7 = arith.addf %3, %6 : vector<20x64xf32>
    %c0_6 = arith.constant 0 : index
    %c0_7 = arith.constant 0 : index
    %8 = vector.load %arg7[%c0_6, %c0_7] : memref<20x64xf32, #tpu.memory_space<vmem>>, vector<20x64xf32>
    tpu.vector_store %arg7[%c0_6, %c0_7], %7 {strides = array<i32>} : memref<20x64xf32, #tpu.memory_space<vmem>>, vector<20x64xf32>,
    %c0_i32_8 = arith.constant 0 : i32
    %9 = arith.cmpi eq, %arg2, %c0_i32_8 : i32
    %10 = arith.extui %9 : i1 to i32
    %c0_i32_9 = arith.constant 0 : i32
    %11 = arith.cmpi ne, %10, %c0_i32_9 : i32
    scf.if %11 {
      %c0_10 = arith.constant 0 : index
      %c0_11 = arith.constant 0 : index
      %12 = vector.load %arg7[%c0_10, %c0_11] : memref<20x64xf32, #tpu.memory_space<vmem>>, vector<20x64xf32>
      %c0_12 = arith.constant 0 : index
      %c0_13 = arith.constant 0 : index
      %13 = vector.load %arg5[%c0_12, %c0_13] : memref<1x64xf32, #tpu.memory_space<vmem>>, vector<1x64xf32>
      %14 = vector.broadcast %13 : vector<1x64xf32> to vector<20x64xf32>
      %15 = arith.addf %12, %14 : vector<20x64xf32>
      %16 = arith.truncf %15 : vector<20x64xf32> to vector<20x64xbf16>
      %c0_14 = arith.constant 0 : index
      %c0_15 = arith.constant 0 : index
      %17 = vector.load %arg6[%c0_14, %c0_15] : memref<20x64xbf16, #tpu.memory_space<vmem>>, vector<20x64xbf16>
      tpu.vector_store %arg6[%c0_14, %c0_15], %16 {strides = array<i32>} : memref<20x64xbf16, #tpu.memory_space<vmem>>, vector<20x64xbf16>,
    } else {
    }
    return
  }
  func.func @transform_0(%arg0: i32, %arg1: i32, %arg2: i32) -> (i32, i32) {
    %c0_i32 = arith.constant 0 : i32
    return %arg0, %arg2 : i32, i32
  }
  func.func @transform_1(%arg0: i32, %arg1: i32, %arg2: i32) -> (i32, i32) {
    %c0_i32 = arith.constant 0 : i32
    return %arg2, %arg1 : i32, i32
  }
  func.func @transform_2(%arg0: i32, %arg1: i32, %arg2: i32) -> (i32, i32) {
    %c0_i32 = arith.constant 0 : i32
    %c0_i32_0 = arith.constant 0 : i32
    return %c0_i32, %arg1 : i32, i32
  }
  func.func @transform_3(%arg0: i32, %arg1: i32, %arg2: i32) -> (i32, i32) {
    %c0_i32 = arith.constant 0 : i32
    return %arg0, %arg1 : i32, i32
  }
}

module attributes {stable_mosaic.version = 11 : i64} {
  func.func @_flash_attn_kernel(%arg0: i32, %arg1: i32, %arg2: i32, %arg3: memref<1x4x8x8xbf16, #tpu.memory_space<vmem>>, %arg4: memref<1x4x10x8xbf16, #tpu.memory_space<vmem>>, %arg5: memref<1x4x10x8xbf16, #tpu.memory_space<vmem>>, %arg6: memref<1x8x10xbf16, #tpu.memory_space<vmem>>, %arg7: memref<1x4x8x8xbf16, #tpu.memory_space<vmem>>, %arg8: memref<4x8x1xf32, #tpu.memory_space<vmem>>, %arg9: memref<4x8x1xf32, #tpu.memory_space<vmem>>, %arg10: memref<4x8x8xf32, #tpu.memory_space<vmem>>) attributes {dimension_semantics = [#tpu.dimension_semantics<parallel>, #tpu.dimension_semantics<parallel>, #tpu.dimension_semantics<arbitrary>], iteration_bounds = array<i64: 2, 1, 1>, scalar_prefetch = 0 : i64, scratch_operands = 3 : i64, tpu.core_type = #tpu.core_type<tc>, window_params = [{transform_indices = @transform_0, window_bounds = array<i64: 1, 4, 8, 8>}, {transform_indices = @transform_1, window_bounds = array<i64: 1, 4, 10, 8>}, {transform_indices = @transform_2, window_bounds = array<i64: 1, 4, 10, 8>}, {transform_indices = @transform_3, window_bounds = array<i64: 1, 8, 10>}, {transform_indices = @transform_4, window_bounds = array<i64: 1, 4, 8, 8>}]} {
    %c0_i32 = arith.constant 0 : i32
    %0 = arith.cmpi eq, %arg2, %c0_i32 : i32
    %1 = arith.extui %0 : i1 to i32
    %c0_i32_0 = arith.constant 0 : i32
    %2 = arith.cmpi ne, %1, %c0_i32_0 : i32
    scf.if %2 {
      %cst_38 = arith.constant 0xFF800000 : f32
      %42 = vector.broadcast %cst_38 : f32 to vector<4x8x1xf32>
      %c0_39 = arith.constant 0 : index
      %c0_40 = arith.constant 0 : index
      %c0_41 = arith.constant 0 : index
      %43 = vector.load %arg8[%c0_39, %c0_40, %c0_41] : memref<4x8x1xf32, #tpu.memory_space<vmem>>, vector<4x8x1xf32>
      tpu.vector_store %arg8[%c0_39, %c0_40, %c0_41], %42 {strides = array<i32>} : memref<4x8x1xf32, #tpu.memory_space<vmem>>, vector<4x8x1xf32>,
      %cst_42 = arith.constant 0.000000e+00 : f32
      %44 = vector.broadcast %cst_42 : f32 to vector<4x8x1xf32>
      %c0_43 = arith.constant 0 : index
      %c0_44 = arith.constant 0 : index
      %c0_45 = arith.constant 0 : index
      %45 = vector.load %arg9[%c0_43, %c0_44, %c0_45] : memref<4x8x1xf32, #tpu.memory_space<vmem>>, vector<4x8x1xf32>
      tpu.vector_store %arg9[%c0_43, %c0_44, %c0_45], %44 {strides = array<i32>} : memref<4x8x1xf32, #tpu.memory_space<vmem>>, vector<4x8x1xf32>,
      %cst_46 = arith.constant 0.000000e+00 : f32
      %46 = vector.broadcast %cst_46 : f32 to vector<4x8x8xf32>
      %c0_47 = arith.constant 0 : index
      %c0_48 = arith.constant 0 : index
      %c0_49 = arith.constant 0 : index
      %47 = vector.load %arg10[%c0_47, %c0_48, %c0_49] : memref<4x8x8xf32, #tpu.memory_space<vmem>>, vector<4x8x8xf32>
      tpu.vector_store %arg10[%c0_47, %c0_48, %c0_49], %46 {strides = array<i32>} : memref<4x8x8xf32, #tpu.memory_space<vmem>>, vector<4x8x8xf32>,
    } else {
    }
    %c0 = arith.constant 0 : index
    %c0_1 = arith.constant 0 : index
    %c0_2 = arith.constant 0 : index
    %c0_3 = arith.constant 0 : index
    %3 = vector.load %arg3[%c0, %c0_1, %c0_2, %c0_3] : memref<1x4x8x8xbf16, #tpu.memory_space<vmem>>, vector<1x4x8x8xbf16>
    %4 = vector.shape_cast %3 : vector<1x4x8x8xbf16> to vector<4x8x8xbf16>
    %c0_4 = arith.constant 0 : index
    %c0_5 = arith.constant 0 : index
    %c0_6 = arith.constant 0 : index
    %c0_7 = arith.constant 0 : index
    %5 = vector.load %arg4[%c0_4, %c0_5, %c0_6, %c0_7] : memref<1x4x10x8xbf16, #tpu.memory_space<vmem>>, vector<1x4x10x8xbf16>
    %6 = vector.shape_cast %5 : vector<1x4x10x8xbf16> to vector<4x10x8xbf16>
    "tpu.trace_start"() <{level = 10 : i32, message = "hqd,hkd->hqk"}> : () -> ()
    %cst = arith.constant dense<0.000000e+00> : vector<4x8x10xf32>
    %7 = tpu.matmul %4, %6, %cst {dimension_numbers = #tpu.dot_dimension_numbers<[2], [2], [1], [1], [0, 0, 0, 1, 1, 1], [0], [0]>} : vector<4x8x8xbf16>, vector<4x10x8xbf16>, vector<4x8x10xf32> -> vector<4x8x10xf32>
    "tpu.trace_stop"() : () -> ()
    %c0_8 = arith.constant 0 : index
    %c0_9 = arith.constant 0 : index
    %c0_10 = arith.constant 0 : index
    %8 = vector.load %arg6[%c0_8, %c0_9, %c0_10] : memref<1x8x10xbf16, #tpu.memory_space<vmem>>, vector<1x8x10xbf16>
    %9 = vector.shape_cast %8 : vector<1x8x10xbf16> to vector<8x10xbf16>
    %10 = vector.shape_cast %9 : vector<8x10xbf16> to vector<1x8x10xbf16>
    %11 = arith.extf %10 : vector<1x8x10xbf16> to vector<1x8x10xf32>
    %12 = vector.broadcast %11 : vector<1x8x10xf32> to vector<4x8x10xf32>
    %13 = arith.addf %7, %12 : vector<4x8x10xf32>
    %c0_11 = arith.constant 0 : index
    %c0_12 = arith.constant 0 : index
    %c0_13 = arith.constant 0 : index
    %14 = vector.load %arg8[%c0_11, %c0_12, %c0_13] : memref<4x8x1xf32, #tpu.memory_space<vmem>>, vector<4x8x1xf32>
    %cst_14 = arith.constant dense<0xFF800000> : vector<4x8xf32>
    %15 = vector.multi_reduction <maximumf>, %13, %cst_14 [2] : vector<4x8x10xf32> to vector<4x8xf32>
    %16 = vector.shape_cast %15 : vector<4x8xf32> to vector<4x8x1xf32>
    %17 = arith.maximumf %14, %16 : vector<4x8x1xf32>
    %18 = arith.subf %14, %17 : vector<4x8x1xf32>
    %19 = math.exp %18 : vector<4x8x1xf32>
    %20 = vector.broadcast %17 : vector<4x8x1xf32> to vector<4x8x10xf32>
    %21 = arith.subf %13, %20 : vector<4x8x10xf32>
    %22 = math.exp %21 : vector<4x8x10xf32>
    %c0_15 = arith.constant 0 : index
    %c0_16 = arith.constant 0 : index
    %c0_17 = arith.constant 0 : index
    %23 = vector.load %arg9[%c0_15, %c0_16, %c0_17] : memref<4x8x1xf32, #tpu.memory_space<vmem>>, vector<4x8x1xf32>
    %24 = arith.mulf %19, %23 : vector<4x8x1xf32>
    %cst_18 = arith.constant dense<0.000000e+00> : vector<4x8xf32>
    %25 = vector.multi_reduction <add>, %22, %cst_18 [2] : vector<4x8x10xf32> to vector<4x8xf32>
    %26 = vector.shape_cast %25 : vector<4x8xf32> to vector<4x8x1xf32>
    %27 = arith.addf %24, %26 : vector<4x8x1xf32>
    %c0_19 = arith.constant 0 : index
    %c0_20 = arith.constant 0 : index
    %c0_21 = arith.constant 0 : index
    %28 = vector.load %arg9[%c0_19, %c0_20, %c0_21] : memref<4x8x1xf32, #tpu.memory_space<vmem>>, vector<4x8x1xf32>
    tpu.vector_store %arg9[%c0_19, %c0_20, %c0_21], %27 {strides = array<i32>} : memref<4x8x1xf32, #tpu.memory_space<vmem>>, vector<4x8x1xf32>,
    %c0_22 = arith.constant 0 : index
    %c0_23 = arith.constant 0 : index
    %c0_24 = arith.constant 0 : index
    %29 = vector.load %arg10[%c0_22, %c0_23, %c0_24] : memref<4x8x8xf32, #tpu.memory_space<vmem>>, vector<4x8x8xf32>
    %30 = vector.broadcast %19 : vector<4x8x1xf32> to vector<4x8x8xf32>
    %31 = arith.mulf %30, %29 : vector<4x8x8xf32>
    %32 = arith.truncf %22 : vector<4x8x10xf32> to vector<4x8x10xbf16>
    %c0_25 = arith.constant 0 : index
    %c0_26 = arith.constant 0 : index
    %c0_27 = arith.constant 0 : index
    %c0_28 = arith.constant 0 : index
    %33 = vector.load %arg5[%c0_25, %c0_26, %c0_27, %c0_28] : memref<1x4x10x8xbf16, #tpu.memory_space<vmem>>, vector<1x4x10x8xbf16>
    %34 = vector.shape_cast %33 : vector<1x4x10x8xbf16> to vector<4x10x8xbf16>
    "tpu.trace_start"() <{level = 10 : i32, message = "hqk,hkd->hqd"}> : () -> ()
    %cst_29 = arith.constant dense<0.000000e+00> : vector<4x8x8xf32>
    %35 = tpu.matmul %32, %34, %cst_29 {dimension_numbers = #tpu.dot_dimension_numbers<[2], [1], [1], [2], [0, 0, 0, 1, 1, 2], [0], [0]>} : vector<4x8x10xbf16>, vector<4x10x8xbf16>, vector<4x8x8xf32> -> vector<4x8x8xf32>
    "tpu.trace_stop"() : () -> ()
    %36 = arith.addf %31, %35 : vector<4x8x8xf32>
    %c0_30 = arith.constant 0 : index
    %c0_31 = arith.constant 0 : index
    %c0_32 = arith.constant 0 : index
    %37 = vector.load %arg10[%c0_30, %c0_31, %c0_32] : memref<4x8x8xf32, #tpu.memory_space<vmem>>, vector<4x8x8xf32>
    tpu.vector_store %arg10[%c0_30, %c0_31, %c0_32], %36 {strides = array<i32>} : memref<4x8x8xf32, #tpu.memory_space<vmem>>, vector<4x8x8xf32>,
    %c0_33 = arith.constant 0 : index
    %c0_34 = arith.constant 0 : index
    %c0_35 = arith.constant 0 : index
    %38 = vector.load %arg8[%c0_33, %c0_34, %c0_35] : memref<4x8x1xf32, #tpu.memory_space<vmem>>, vector<4x8x1xf32>
    tpu.vector_store %arg8[%c0_33, %c0_34, %c0_35], %17 {strides = array<i32>} : memref<4x8x1xf32, #tpu.memory_space<vmem>>, vector<4x8x1xf32>,
    %c0_i32_36 = arith.constant 0 : i32
    %39 = arith.cmpi eq, %arg2, %c0_i32_36 : i32
    %40 = arith.extui %39 : i1 to i32
    %c0_i32_37 = arith.constant 0 : i32
    %41 = arith.cmpi ne, %40, %c0_i32_37 : i32
    scf.if %41 {
      %c0_38 = arith.constant 0 : index
      %c0_39 = arith.constant 0 : index
      %c0_40 = arith.constant 0 : index
      %42 = vector.load %arg9[%c0_38, %c0_39, %c0_40] : memref<4x8x1xf32, #tpu.memory_space<vmem>>, vector<4x8x1xf32>
      %43 = tpu.reciprocal %42 {approx = true} : vector<4x8x1xf32> -> vector<4x8x1xf32>
      %c0_41 = arith.constant 0 : index
      %c0_42 = arith.constant 0 : index
      %c0_43 = arith.constant 0 : index
      %44 = vector.load %arg10[%c0_41, %c0_42, %c0_43] : memref<4x8x8xf32, #tpu.memory_space<vmem>>, vector<4x8x8xf32>
      %45 = vector.broadcast %43 : vector<4x8x1xf32> to vector<4x8x8xf32>
      %46 = arith.mulf %44, %45 : vector<4x8x8xf32>
      %47 = arith.truncf %46 : vector<4x8x8xf32> to vector<4x8x8xbf16>
      %c0_44 = arith.constant 0 : index
      %c0_45 = arith.constant 0 : index
      %c0_46 = arith.constant 0 : index
      %c0_47 = arith.constant 0 : index
      %48 = vector.load %arg7[%c0_44, %c0_45, %c0_46, %c0_47] : memref<1x4x8x8xbf16, #tpu.memory_space<vmem>>, vector<1x4x8x8xbf16>
      %49 = vector.shape_cast %48 : vector<1x4x8x8xbf16> to vector<4x8x8xbf16>
      %50 = vector.shape_cast %47 : vector<4x8x8xbf16> to vector<1x4x8x8xbf16>
      tpu.vector_store %arg7[%c0_44, %c0_45, %c0_46, %c0_47], %50 {strides = array<i32>} : memref<1x4x8x8xbf16, #tpu.memory_space<vmem>>, vector<1x4x8x8xbf16>,
    } else {
    }
    return
  }
  func.func @transform_0(%arg0: i32, %arg1: i32, %arg2: i32) -> (i32, i32, i32, i32) {
    %c0_i32 = arith.constant 0 : i32
    %c0_i32_0 = arith.constant 0 : i32
    %c0_i32_1 = arith.constant 0 : i32
    return %arg0, %c0_i32, %arg1, %c0_i32_0 : i32, i32, i32, i32
  }
  func.func @transform_1(%arg0: i32, %arg1: i32, %arg2: i32) -> (i32, i32, i32, i32) {
    %c0_i32 = arith.constant 0 : i32
    %c0_i32_0 = arith.constant 0 : i32
    %c0_i32_1 = arith.constant 0 : i32
    return %arg0, %c0_i32, %arg2, %c0_i32_0 : i32, i32, i32, i32
  }
  func.func @transform_2(%arg0: i32, %arg1: i32, %arg2: i32) -> (i32, i32, i32, i32) {
    %c0_i32 = arith.constant 0 : i32
    %c0_i32_0 = arith.constant 0 : i32
    %c0_i32_1 = arith.constant 0 : i32
    return %arg0, %c0_i32, %arg2, %c0_i32_0 : i32, i32, i32, i32
  }
  func.func @transform_3(%arg0: i32, %arg1: i32, %arg2: i32) -> (i32, i32, i32) {
    %c0_i32 = arith.constant 0 : i32
    return %arg0, %arg1, %arg2 : i32, i32, i32
  }
  func.func @transform_4(%arg0: i32, %arg1: i32, %arg2: i32) -> (i32, i32, i32, i32) {
    %c0_i32 = arith.constant 0 : i32
    %c0_i32_0 = arith.constant 0 : i32
    %c0_i32_1 = arith.constant 0 : i32
    return %arg0, %c0_i32, %arg1, %c0_i32_0 : i32, i32, i32, i32
  }
}

module attributes {stable_mosaic.version = 11 : i64} {
  func.func @_matmul_res_ln_kernel(%arg0: i32, %arg1: i32, %arg2: memref<16x64xbf16, #tpu.memory_space<vmem>>, %arg3: memref<64x32xbf16, #tpu.memory_space<vmem>>, %arg4: memref<1x32xf32, #tpu.memory_space<vmem>>, %arg5: memref<16x32xbf16, #tpu.memory_space<vmem>>, %arg6: memref<1x32xf32, #tpu.memory_space<vmem>>, %arg7: memref<1x32xf32, #tpu.memory_space<vmem>>, %arg8: memref<16x32xbf16, #tpu.memory_space<vmem>>, %arg9: memref<16x32xf32, #tpu.memory_space<vmem>>) attributes {dimension_semantics = [#tpu.dimension_semantics<parallel>, #tpu.dimension_semantics<arbitrary>], iteration_bounds = array<i64: 1, 1>, scalar_prefetch = 0 : i64, scratch_operands = 1 : i64, tpu.core_type = #tpu.core_type<tc>, window_params = [{transform_indices = @transform_0, window_bounds = array<i64: 16, 64>}, {transform_indices = @transform_1, window_bounds = array<i64: 64, 32>}, {pipeline_mode = #tpu.pipeline_mode<synchronous>, transform_indices = @transform_2, window_bounds = array<i64: 1, 32>}, {transform_indices = @transform_3, window_bounds = array<i64: 16, 32>}, {pipeline_mode = #tpu.pipeline_mode<synchronous>, transform_indices = @transform_4, window_bounds = array<i64: 1, 32>}, {pipeline_mode = #tpu.pipeline_mode<synchronous>, transform_indices = @transform_5, window_bounds = array<i64: 1, 32>}, {transform_indices = @transform_6, window_bounds = array<i64: 16, 32>}]} {
    %c0_i32 = arith.constant 0 : i32
    %0 = arith.cmpi eq, %arg1, %c0_i32 : i32
    %1 = arith.extui %0 : i1 to i32
    %c0_i32_0 = arith.constant 0 : i32
    %2 = arith.cmpi ne, %1, %c0_i32_0 : i32
    scf.if %2 {
      %cst_10 = arith.constant 0.000000e+00 : f32
      %12 = vector.broadcast %cst_10 : f32 to vector<16x32xf32>
      %c0_11 = arith.constant 0 : index
      %c0_12 = arith.constant 0 : index
      %13 = vector.load %arg9[%c0_11, %c0_12] : memref<16x32xf32, #tpu.memory_space<vmem>>, vector<16x32xf32>
      tpu.vector_store %arg9[%c0_11, %c0_12], %12 {strides = array<i32>} : memref<16x32xf32, #tpu.memory_space<vmem>>, vector<16x32xf32>,
    } else {
    }
    %c0 = arith.constant 0 : index
    %c0_1 = arith.constant 0 : index
    %3 = vector.load %arg9[%c0, %c0_1] : memref<16x32xf32, #tpu.memory_space<vmem>>, vector<16x32xf32>
    %c0_2 = arith.constant 0 : index
    %c0_3 = arith.constant 0 : index
    %4 = vector.load %arg2[%c0_2, %c0_3] : memref<16x64xbf16, #tpu.memory_space<vmem>>, vector<16x64xbf16>
    %c0_4 = arith.constant 0 : index
    %c0_5 = arith.constant 0 : index
    %5 = vector.load %arg3[%c0_4, %c0_5] : memref<64x32xbf16, #tpu.memory_space<vmem>>, vector<64x32xbf16>
    %cst = arith.constant dense<0.000000e+00> : vector<16x32xf32>
    %6 = tpu.matmul %4, %5, %cst {dimension_numbers = #tpu.dot_dimension_numbers<[1], [0], [0], [1], [0, 0, 1, 1], [], []>} : vector<16x64xbf16>, vector<64x32xbf16>, vector<16x32xf32> -> vector<16x32xf32>
    %7 = arith.addf %3, %6 : vector<16x32xf32>
    %c0_6 = arith.constant 0 : index
    %c0_7 = arith.constant 0 : index
    %8 = vector.load %arg9[%c0_6, %c0_7] : memref<16x32xf32, #tpu.memory_space<vmem>>, vector<16x32xf32>
    tpu.vector_store %arg9[%c0_6, %c0_7], %7 {strides = array<i32>} : memref<16x32xf32, #tpu.memory_space<vmem>>, vector<16x32xf32>,
    %c0_i32_8 = arith.constant 0 : i32
    %9 = arith.cmpi eq, %arg1, %c0_i32_8 : i32
    %10 = arith.extui %9 : i1 to i32
    %c0_i32_9 = arith.constant 0 : i32
    %11 = arith.cmpi ne, %10, %c0_i32_9 : i32
    scf.if %11 {
      %c0_10 = arith.constant 0 : index
      %c0_11 = arith.constant 0 : index
      %12 = vector.load %arg9[%c0_10, %c0_11] : memref<16x32xf32, #tpu.memory_space<vmem>>, vector<16x32xf32>
      %c0_12 = arith.constant 0 : index
      %c0_13 = arith.constant 0 : index
      %13 = vector.load %arg4[%c0_12, %c0_13] : memref<1x32xf32, #tpu.memory_space<vmem>>, vector<1x32xf32>
      %14 = vector.broadcast %13 : vector<1x32xf32> to vector<16x32xf32>
      %15 = arith.addf %12, %14 : vector<16x32xf32>
      %c0_14 = arith.constant 0 : index
      %c0_15 = arith.constant 0 : index
      %16 = vector.load %arg5[%c0_14, %c0_15] : memref<16x32xbf16, #tpu.memory_space<vmem>>, vector<16x32xbf16>
      %17 = arith.extf %16 : vector<16x32xbf16> to vector<16x32xf32>
      %18 = arith.addf %15, %17 : vector<16x32xf32>
      %cst_16 = arith.constant dense<0.000000e+00> : vector<16xf32>
      %19 = vector.multi_reduction <add>, %18, %cst_16 [1] : vector<16x32xf32> to vector<16xf32>
      %20 = vector.shape_cast %19 : vector<16xf32> to vector<16x1xf32>
      %cst_17 = arith.constant 3.200000e+01 : f32
      %21 = vector.broadcast %cst_17 : f32 to vector<16x1xf32>
      %22 = arith.divf %20, %21 : vector<16x1xf32>
      %23 = arith.mulf %18, %18 : vector<16x32xf32>
      %cst_18 = arith.constant dense<0.000000e+00> : vector<16xf32>
      %24 = vector.multi_reduction <add>, %23, %cst_18 [1] : vector<16x32xf32> to vector<16xf32>
      %25 = vector.shape_cast %24 : vector<16xf32> to vector<16x1xf32>
      %cst_19 = arith.constant 3.200000e+01 : f32
      %26 = vector.broadcast %cst_19 : f32 to vector<16x1xf32>
      %27 = arith.divf %25, %26 : vector<16x1xf32>
      %28 = arith.mulf %22, %22 : vector<16x1xf32>
      %29 = arith.subf %27, %28 : vector<16x1xf32>
      %cst_20 = arith.constant 0.000000e+00 : f32
      %30 = vector.broadcast %cst_20 : f32 to vector<16x1xf32>
      %31 = arith.maximumf %29, %30 : vector<16x1xf32>
      %32 = vector.broadcast %22 : vector<16x1xf32> to vector<16x32xf32>
      %33 = arith.subf %18, %32 : vector<16x32xf32>
      %cst_21 = arith.constant 9.99999997E-7 : f32
      %34 = vector.broadcast %cst_21 : f32 to vector<16x1xf32>
      %35 = arith.addf %31, %34 : vector<16x1xf32>
      %36 = math.rsqrt %35 : vector<16x1xf32>
      %37 = vector.broadcast %36 : vector<16x1xf32> to vector<16x32xf32>
      %38 = arith.mulf %33, %37 : vector<16x32xf32>
      %c0_22 = arith.constant 0 : index
      %c0_23 = arith.constant 0 : index
      %39 = vector.load %arg6[%c0_22, %c0_23] : memref<1x32xf32, #tpu.memory_space<vmem>>, vector<1x32xf32>
      %40 = vector.broadcast %39 : vector<1x32xf32> to vector<16x32xf32>
      %41 = arith.mulf %38, %40 : vector<16x32xf32>
      %c0_24 = arith.constant 0 : index
      %c0_25 = arith.constant 0 : index
      %42 = vector.load %arg7[%c0_24, %c0_25] : memref<1x32xf32, #tpu.memory_space<vmem>>, vector<1x32xf32>
      %43 = vector.broadcast %42 : vector<1x32xf32> to vector<16x32xf32>
      %44 = arith.addf %41, %43 : vector<16x32xf32>
      %45 = arith.truncf %44 : vector<16x32xf32> to vector<16x32xbf16>
      %c0_26 = arith.constant 0 : index
      %c0_27 = arith.constant 0 : index
      %46 = vector.load %arg8[%c0_26, %c0_27] : memref<16x32xbf16, #tpu.memory_space<vmem>>, vector<16x32xbf16>
      tpu.vector_store %arg8[%c0_26, %c0_27], %45 {strides = array<i32>} : memref<16x32xbf16, #tpu.memory_space<vmem>>, vector<16x32xbf16>,
    } else {
    }
    return
  }
  func.func @transform_0(%arg0: i32, %arg1: i32) -> (i32, i32) {
    %c0_i32 = arith.constant 0 : i32
    return %arg0, %arg1 : i32, i32
  }
  func.func @transform_1(%arg0: i32, %arg1: i32) -> (i32, i32) {
    %c0_i32 = arith.constant 0 : i32
    %c0_i32_0 = arith.constant 0 : i32
    return %arg1, %c0_i32 : i32, i32
  }
  func.func @transform_2(%arg0: i32, %arg1: i32) -> (i32, i32) {
    %c0_i32 = arith.constant 0 : i32
    %c0_i32_0 = arith.constant 0 : i32
    %c0_i32_1 = arith.constant 0 : i32
    return %c0_i32, %c0_i32_0 : i32, i32
  }
  func.func @transform_3(%arg0: i32, %arg1: i32) -> (i32, i32) {
    %c0_i32 = arith.constant 0 : i32
    %c0_i32_0 = arith.constant 0 : i32
    return %arg0, %c0_i32 : i32, i32
  }
  func.func @transform_4(%arg0: i32, %arg1: i32) -> (i32, i32) {
    %c0_i32 = arith.constant 0 : i32
    %c0_i32_0 = arith.constant 0 : i32
    %c0_i32_1 = arith.constant 0 : i32
    return %c0_i32, %c0_i32_0 : i32, i32
  }
  func.func @transform_5(%arg0: i32, %arg1: i32) -> (i32, i32) {
    %c0_i32 = arith.constant 0 : i32
    %c0_i32_0 = arith.constant 0 : i32
    %c0_i32_1 = arith.constant 0 : i32
    return %c0_i32, %c0_i32_0 : i32, i32
  }
  func.func @transform_6(%arg0: i32, %arg1: i32) -> (i32, i32) {
    %c0_i32 = arith.constant 0 : i32
    %c0_i32_0 = arith.constant 0 : i32
    return %arg0, %c0_i32 : i32, i32
  }
}

module attributes {stable_mosaic.version = 11 : i64} {
  func.func @_matmul_bias_kernel(%arg0: i32, %arg1: i32, %arg2: i32, %arg3: memref<16x32xbf16, #tpu.memory_space<vmem>>, %arg4: memref<32x64xbf16, #tpu.memory_space<vmem>>, %arg5: memref<1x64xf32, #tpu.memory_space<vmem>>, %arg6: memref<16x64xbf16, #tpu.memory_space<vmem>>, %arg7: memref<16x64xf32, #tpu.memory_space<vmem>>) attributes {dimension_semantics = [#tpu.dimension_semantics<parallel>, #tpu.dimension_semantics<parallel>, #tpu.dimension_semantics<arbitrary>], iteration_bounds = array<i64: 1, 1, 1>, scalar_prefetch = 0 : i64, scratch_operands = 1 : i64, tpu.core_type = #tpu.core_type<tc>, window_params = [{transform_indices = @transform_0, window_bounds = array<i64: 16, 32>}, {transform_indices = @transform_1, window_bounds = array<i64: 32, 64>}, {transform_indices = @transform_2, window_bounds = array<i64: 1, 64>}, {transform_indices = @transform_3, window_bounds = array<i64: 16, 64>}]} {
    %c0_i32 = arith.constant 0 : i32
    %0 = arith.cmpi eq, %arg2, %c0_i32 : i32
    %1 = arith.extui %0 : i1 to i32
    %c0_i32_0 = arith.constant 0 : i32
    %2 = arith.cmpi ne, %1, %c0_i32_0 : i32
    scf.if %2 {
      %cst_10 = arith.constant 0.000000e+00 : f32
      %12 = vector.broadcast %cst_10 : f32 to vector<16x64xf32>
      %c0_11 = arith.constant 0 : index
      %c0_12 = arith.constant 0 : index
      %13 = vector.load %arg7[%c0_11, %c0_12] : memref<16x64xf32, #tpu.memory_space<vmem>>, vector<16x64xf32>
      tpu.vector_store %arg7[%c0_11, %c0_12], %12 {strides = array<i32>} : memref<16x64xf32, #tpu.memory_space<vmem>>, vector<16x64xf32>,
    } else {
    }
    %c0 = arith.constant 0 : index
    %c0_1 = arith.constant 0 : index
    %3 = vector.load %arg7[%c0, %c0_1] : memref<16x64xf32, #tpu.memory_space<vmem>>, vector<16x64xf32>
    %c0_2 = arith.constant 0 : index
    %c0_3 = arith.constant 0 : index
    %4 = vector.load %arg3[%c0_2, %c0_3] : memref<16x32xbf16, #tpu.memory_space<vmem>>, vector<16x32xbf16>
    %c0_4 = arith.constant 0 : index
    %c0_5 = arith.constant 0 : index
    %5 = vector.load %arg4[%c0_4, %c0_5] : memref<32x64xbf16, #tpu.memory_space<vmem>>, vector<32x64xbf16>
    %cst = arith.constant dense<0.000000e+00> : vector<16x64xf32>
    %6 = tpu.matmul %4, %5, %cst {dimension_numbers = #tpu.dot_dimension_numbers<[1], [0], [0], [1], [0, 0, 1, 1], [], []>} : vector<16x32xbf16>, vector<32x64xbf16>, vector<16x64xf32> -> vector<16x64xf32>
    %7 = arith.addf %3, %6 : vector<16x64xf32>
    %c0_6 = arith.constant 0 : index
    %c0_7 = arith.constant 0 : index
    %8 = vector.load %arg7[%c0_6, %c0_7] : memref<16x64xf32, #tpu.memory_space<vmem>>, vector<16x64xf32>
    tpu.vector_store %arg7[%c0_6, %c0_7], %7 {strides = array<i32>} : memref<16x64xf32, #tpu.memory_space<vmem>>, vector<16x64xf32>,
    %c0_i32_8 = arith.constant 0 : i32
    %9 = arith.cmpi eq, %arg2, %c0_i32_8 : i32
    %10 = arith.extui %9 : i1 to i32
    %c0_i32_9 = arith.constant 0 : i32
    %11 = arith.cmpi ne, %10, %c0_i32_9 : i32
    scf.if %11 {
      %c0_10 = arith.constant 0 : index
      %c0_11 = arith.constant 0 : index
      %12 = vector.load %arg7[%c0_10, %c0_11] : memref<16x64xf32, #tpu.memory_space<vmem>>, vector<16x64xf32>
      %c0_12 = arith.constant 0 : index
      %c0_13 = arith.constant 0 : index
      %13 = vector.load %arg5[%c0_12, %c0_13] : memref<1x64xf32, #tpu.memory_space<vmem>>, vector<1x64xf32>
      %14 = vector.broadcast %13 : vector<1x64xf32> to vector<16x64xf32>
      %15 = arith.addf %12, %14 : vector<16x64xf32>
      %cst_14 = arith.constant 0.000000e+00 : f32
      %16 = vector.broadcast %cst_14 : f32 to vector<16x64xf32>
      %17 = arith.maximumf %15, %16 : vector<16x64xf32>
      %18 = arith.truncf %17 : vector<16x64xf32> to vector<16x64xbf16>
      %c0_15 = arith.constant 0 : index
      %c0_16 = arith.constant 0 : index
      %19 = vector.load %arg6[%c0_15, %c0_16] : memref<16x64xbf16, #tpu.memory_space<vmem>>, vector<16x64xbf16>
      tpu.vector_store %arg6[%c0_15, %c0_16], %18 {strides = array<i32>} : memref<16x64xbf16, #tpu.memory_space<vmem>>, vector<16x64xbf16>,
    } else {
    }
    return
  }
  func.func @transform_0(%arg0: i32, %arg1: i32, %arg2: i32) -> (i32, i32) {
    %c0_i32 = arith.constant 0 : i32
    return %arg0, %arg2 : i32, i32
  }
  func.func @transform_1(%arg0: i32, %arg1: i32, %arg2: i32) -> (i32, i32) {
    %c0_i32 = arith.constant 0 : i32
    return %arg2, %arg1 : i32, i32
  }
  func.func @transform_2(%arg0: i32, %arg1: i32, %arg2: i32) -> (i32, i32) {
    %c0_i32 = arith.constant 0 : i32
    %c0_i32_0 = arith.constant 0 : i32
    return %c0_i32, %arg1 : i32, i32
  }
  func.func @transform_3(%arg0: i32, %arg1: i32, %arg2: i32) -> (i32, i32) {
    %c0_i32 = arith.constant 0 : i32
    return %arg0, %arg1 : i32, i32
  }
}

</mosaic_0001>

<llo_original>
// kernel: decoder_layer.9
$region0: #{decoder_layer.9}
  #allocation0 [shape = 'u32[]', space=smem, size = 0x4, offset = 0x4, fixed_abs, tag = 'smem constant byte address 0x4 - core index']
  #allocation1 [shape = 'u32[72,128]{1,0:T(1,128)}', space=vmem, size = 0x9000, scoped, tag = 'internal scratch']
  #allocation2 [shape = 'f32[16,96]{1,0:T(8,128)}', space=vmem, size = 0x2000, scoped, tag = 'scratch operand']
  %s0 = inlined_call_operand.vmem [shape: bf16[16,32], index: 0, kind: input, shape index: {}]
  %s1 = inlined_call_operand.vmem [shape: bf16[32,96], index: 1, kind: input, shape index: {}]
  %s2 = inlined_call_operand.vmem [shape: f32[1,96], index: 2, kind: input, shape index: {}]
  %s3 = inlined_call_operand.vmem [shape: bf16[16,96], index: 3, kind: output, shape index: {}]
  %s4 = sld [smem:[#allocation0]]
  $region30: #{decoder_layer.9} parent=0
    _
  %s6 = ssub.s32 1, %s4
  %s7 = scalar_select 0, %s6, %s4
  // Predicated region
  $region2: #{decoder_layer.9} parent=0 // pred_check
    _
  $region3: #{decoder_layer.9} parent=0 // pred_check_branch
    %9 = sbr.rel (0) target = $region5
  $region4: #{decoder_layer.9} parent=0 // pred_region
    _
  $region5: #{decoder_layer.9} parent=0 // pred_fallthru
    _
  // Predicated region
  $region6: #{decoder_layer.9} parent=0 // pred_check
    _
  $region7: #{decoder_layer.9} parent=0 // pred_check_branch
    %11 = sbr.rel (0) target = $region9
  $region8: #{decoder_layer.9} parent=0 // pred_region
    _
  $region9: #{decoder_layer.9} parent=0 // pred_fallthru
    _
  // Predicated region
  $region10: #{decoder_layer.9} parent=0 // pred_check
    _
  $region11: #{decoder_layer.9} parent=0 // pred_check_branch
    %13 = sbr.rel (0) target = $region13
  $region12: #{decoder_layer.9} parent=0 // pred_region
    _
  $region13: #{decoder_layer.9} parent=0 // pred_fallthru
    _
  %p15 = scmp.eq.s32.totalorder 0, 0
  // Predicated region
  $region14: #{decoder_layer.9} parent=0 // pred_check
    %p16 = pneg %p15
  $region15: #{decoder_layer.9} parent=0 // pred_check_branch
    %18 = sbr.rel (%p16) target = $region17
  $region16: #{decoder_layer.9} parent=0 // pred_region
    %vm19 = vcmask 785408
    %20 = vst.msk [vmem:[#allocation2] sm:$0xff] %vm19, 0.0
    %21 = vst.msk [vmem:[#allocation2 + $0x8] sm:$0xff] %vm19, 0.0
  $region17: #{decoder_layer.9} parent=0 // pred_fallthru
    _
  %v22 = vld [vmem:[#allocation2] sm:$0xff]
  %v23 = vld [vmem:[#allocation2 + $0x8] sm:$0xff]
  %v24 = vld [vmem:[%s0] sm:$0xf]
  %v25 = vld [vmem:[%s0 + $0x4] sm:$0xf]
  %v26 = vld [vmem:[%s1] sm:$0xf]
  %v27 = vld [vmem:[%s1 + $0x4] sm:$0xf]
  %v28 = vld [vmem:[%s1 + $0x8] sm:$0xf]
  %v29 = vld [vmem:[%s1 + $0xc] sm:$0xf]
  %v32 = vunpack.c.l.b16 %v24
  %v33 = vunpack.c.l.b16 %v25
  %v34 = vpack.c.b16 %v33, %v32
  %v39 = vunpack.c.l.b16 %v26
  %v40 = vunpack.c.l.b16 %v27
  %v41 = vunpack.c.l.b16 %v28
  %v42 = vunpack.c.l.b16 %v29
  %v43 = vpack.c.b16 %v40, %v39
  %v44 = vpack.c.b16 %v42, %v41
  %vm47 = vcmask 261120
  %v49 = vsel %vm47, %v34, 0
  %51 = vmatpush.bf16.msra.mxu0 0
  %52 = vmatpush.bf16.msra.mxu0 0
  %53 = vmatpush.bf16.msra.mxu0 0
  %54 = vmatpush.bf16.msra.mxu0 0
  %55 = vmatpush.bf16.msra.mxu0 0
  %56 = vmatpush.bf16.msra.mxu0 0
  %57 = vmatpush.bf16.msra.mxu0 %v44
  %58 = vmatpush.bf16.msra.mxu0 %v43
  %59 = vmatmul.bf16.gmra.mxu0 %v49
  %v60 = vpop.f32.mrf.mxu0
  %v61 = vadd.f32 0.0, %v60
  %v62 = vpop.f32.mrf.mxu0
  %v63 = vadd.f32 0.0, %v62
  %64 = vdwg.mxu0
  %v65 = vadd.f32 %v22, %v61
  %v66 = vadd.f32 %v23, %v63
  %vm67 = vcmask 785408
  %68 = vst.msk [vmem:[#allocation2] sm:$0xff] %vm67, %v65
  %69 = vst.msk [vmem:[#allocation2 + $0x8] sm:$0xff] %vm67, %v66
  // Predicated region
  $region18: #{decoder_layer.9} parent=0 // pred_check
    %p70 = pneg %p15
  $region19: #{decoder_layer.9} parent=0 // pred_check_branch
    %72 = sbr.rel (%p70) target = $region21
  $region20: #{decoder_layer.9} parent=0 // pred_region
    %v73 = vld [vmem:[#allocation2] sm:$0xff]
    %v74 = vld [vmem:[#allocation2 + $0x8] sm:$0xff]
    %v75 = vld [vmem:[%s2] sm:$0x1]
    %v77 = vperm.slane %v75, 0
    %v79 = vadd.f32 %v73, %v77
    %v80 = vadd.f32 %v74, %v77
    %v81 = vpack.c.bf16 %v79, %v79
    %v82 = vpack.c.bf16 %v80, %v80
    %vm83 = vcmask 781312
    %84 = vst.msk [vmem:[%s3] sm:$0xf] %vm83, %v81
    %85 = vst.msk [vmem:[%s3 + $0x4] sm:$0xf] %vm83, %v82
  $region21: #{decoder_layer.9} parent=0 // pred_fallthru
    _
  // Predicated region
  $region22: #{decoder_layer.9} parent=0 // pred_check
    _
  $region23: #{decoder_layer.9} parent=0 // pred_check_branch
    %87 = sbr.rel (0) target = $region25
  $region24: #{decoder_layer.9} parent=0 // pred_region
    _
  $region25: #{decoder_layer.9} parent=0 // pred_fallthru
    _
  // Predicated region
  $region26: #{decoder_layer.9} parent=0 // pred_check
    _
  $region27: #{decoder_layer.9} parent=0 // pred_check_branch
    %89 = sbr.rel (0) target = $region29
  $region28: #{decoder_layer.9} parent=0 // pred_region
    _
  $region29: #{decoder_layer.9} parent=0 // pred_fallthru
    _

// kernel: decoder_layer.10
$region0: #{decoder_layer.10}
  #allocation0 [shape = 'u32[]', space=smem, size = 0x4, offset = 0x4, fixed_abs, tag = 'smem constant byte address 0x4 - core index']
  #allocation1 [shape = 'u32[72,128]{1,0:T(1,128)}', space=vmem, size = 0x9000, scoped, tag = 'internal scratch']
  #allocation2 [shape = 'f32[4,8,1]{2,1,0:T(8,128)}', space=vmem, size = 0x4000, scoped, tag = 'scratch operand']
  #allocation3 [shape = 'f32[4,8,1]{2,1,0:T(8,128)}', space=vmem, size = 0x4000, scoped, tag = 'scratch operand']
  #allocation4 [shape = 'f32[4,8,8]{2,1,0:T(8,128)}', space=vmem, size = 0x4000, scoped, tag = 'scratch operand']
  %s0 = inlined_call_operand.vmem [shape: bf16[2,4,8,8], index: 0, kind: input, shape index: {}]
  %s1 = inlined_call_operand.vmem [shape: bf16[2,4,8,8], index: 1, kind: input, shape index: {}]
  %s2 = inlined_call_operand.vmem [shape: bf16[2,4,8,8], index: 2, kind: input, shape index: {}]
  %s3 = inlined_call_operand.vmem [shape: bf16[2,8,8], index: 3, kind: input, shape index: {}]
  %s4 = inlined_call_operand.vmem [shape: bf16[2,4,8,8], index: 4, kind: output, shape index: {}]
  %s5 = sld [smem:[#allocation0]]
  $region57: #{decoder_layer.10} parent=0
    _
  %s7 = ssub.s32 1, %s5
  %s8 = scalar_select 0, %s7, %s5
  loop: start=0, step=1, limit=4
  $region2: #{decoder_layer.10} parent=0 // loop_pre_header
    _
  $region3: #{decoder_layer.10} parent=0 // loop_header
    %s10 = sphi 0, %s14
    %p11 = scmp.ge.s32.totalorder %s10, 4
    %s17 = sphi 0, %s36
    %s18 = sphi 0, %s32
    %s19 = sphi 0, %s28
    %s20 = sphi 0, %s17
    %s21 = sphi 0, %s18
    %s22 = sphi 0, %s19
    %s23 = sphi 0, %s20
    %s24 = sphi 0, %s21
    %s25 = sphi 0, %s22
    %s41 = sphi 0, %s43
    %s44 = sphi 0, %s41
    %s45 = sphi 0, %s44
    %s61 = sphi 0, %s45
    %s69 = sphi 0, %s71
    %s72 = sphi 0, %s69
    %s73 = sphi 0, %s72
    %s89 = sphi 0, %s73
    %s97 = sphi 0, %s99
    %s100 = sphi 0, %s97
    %s101 = sphi 0, %s100
    %s117 = sphi 0, %s101
    %s127 = sphi 0, %s129
    %s130 = sphi 0, %s127
    %s131 = sphi 0, %s130
    %s147 = sphi 0, %s131
    %s155 = sphi 0, %s157
    %s158 = sphi 0, %s155
    %s159 = sphi 0, %s158
    %s175 = sphi 0, %s159
  $region4: #{decoder_layer.10} parent=0 // loop_header_branch
    %13 = sbr.rel (%p11) target = $region8
  $region5: #{decoder_layer.10} parent=0 // loop_body
    %s15 = ssub.s32 %s10, 1
    %s16 = ssub.s32 %s10, 2
    %s26 = sadd.s32 1, %s19
    %p27 = scmp.ge.s32.totalorder %s26, 1
    %s28 = scalar_select %p27, 0, %s26
    %s29 = sadd.s32 1, %s18
    %s30 = scalar_select %p27, %s29, %s18
    %p31 = scmp.ge.s32.totalorder %s30, 1
    %s32 = scalar_select %p31, 0, %s30
    %s33 = sadd.s32 1, %s17
    %s34 = scalar_select %p31, %s33, %s17
    %p35 = scmp.ge.s32.totalorder %s34, 2
    %s36 = scalar_select %p35, 0, %s34
    %s37 = ssub.s32 %s17, %s36
    %s38 = ssub.s32 %s18, %s32
    %s39 = sor.u32 %s37, %s38
    %p40 = scmp.eq.s32.totalorder %s39, 0
    %s42 = sadd.s32 %s41, 1
    %s43 = scalar_select %p40, %s41, %s42
    %p46 = pneg %p40
    %p47 = scmp.eq.s32.totalorder %s10, 1
    %p48 = por %p46, %p47
    %p49 = scmp.ne.s32.totalorder %s41, %s44
    %p50 = scmp.eq.s32.totalorder %s10, 0
    %p51 = por %p49, %p50
    %p52 = scmp.ne.s32.totalorder %s41, %s44
    %p53 = scmp.eq.s32.totalorder %s15, 1
    %p54 = por %p52, %p53
    %p55 = scmp.ne.s32.totalorder %s44, %s45
    %p56 = scmp.eq.s32.totalorder %s15, 0
    %p57 = por %p55, %p56
    %p58 = scmp.ne.s32.totalorder %s44, %s45
    %p59 = scmp.eq.s32.totalorder %s16, 1
    %p60 = por %p58, %p59
    %p62 = scmp.ne.s32.totalorder %s45, %s61
    %p63 = scmp.eq.s32.totalorder %s16, 0
    %p64 = por %p62, %p63
    %s65 = ssub.s32 %s17, %s36
    %s66 = ssub.s32 %s19, %s28
    %s67 = sor.u32 %s65, %s66
    %p68 = scmp.eq.s32.totalorder %s67, 0
    %s70 = sadd.s32 %s69, 1
    %s71 = scalar_select %p68, %s69, %s70
    %p74 = pneg %p68
    %p75 = scmp.eq.s32.totalorder %s10, 1
    %p76 = por %p74, %p75
    %p77 = scmp.ne.s32.totalorder %s69, %s72
    %p78 = scmp.eq.s32.totalorder %s10, 0
    %p79 = por %p77, %p78
    %p80 = scmp.ne.s32.totalorder %s69, %s72
    %p81 = scmp.eq.s32.totalorder %s15, 1
    %p82 = por %p80, %p81
    %p83 = scmp.ne.s32.totalorder %s72, %s73
    %p84 = scmp.eq.s32.totalorder %s15, 0
    %p85 = por %p83, %p84
    %p86 = scmp.ne.s32.totalorder %s72, %s73
    %p87 = scmp.eq.s32.totalorder %s16, 1
    %p88 = por %p86, %p87
    %p90 = scmp.ne.s32.totalorder %s73, %s89
    %p91 = scmp.eq.s32.totalorder %s16, 0
    %p92 = por %p90, %p91
    %s93 = ssub.s32 %s17, %s36
    %s94 = ssub.s32 %s19, %s28
    %s95 = sor.u32 %s93, %s94
    %p96 = scmp.eq.s32.totalorder %s95, 0
    %s98 = sadd.s32 %s97, 1
    %s99 = scalar_select %p96, %s97, %s98
    %p102 = pneg %p96
    %p103 = scmp.eq.s32.totalorder %s10, 1
    %p104 = por %p102, %p103
    %p105 = scmp.ne.s32.totalorder %s97, %s100
    %p106 = scmp.eq.s32.totalorder %s10, 0
    %p107 = por %p105, %p106
    %p108 = scmp.ne.s32.totalorder %s97, %s100
    %p109 = scmp.eq.s32.totalorder %s15, 1
    %p110 = por %p108, %p109
    %p111 = scmp.ne.s32.totalorder %s100, %s101
    %p112 = scmp.eq.s32.totalorder %s15, 0
    %p113 = por %p111, %p112
    %p114 = scmp.ne.s32.totalorder %s100, %s101
    %p115 = scmp.eq.s32.totalorder %s16, 1
    %p116 = por %p114, %p115
    %p118 = scmp.ne.s32.totalorder %s101, %s117
    %p119 = scmp.eq.s32.totalorder %s16, 0
    %p120 = por %p118, %p119
    %s121 = ssub.s32 %s17, %s36
    %s122 = ssub.s32 %s18, %s32
    %s123 = sor.u32 %s121, %s122
    %s124 = ssub.s32 %s19, %s28
    %s125 = sor.u32 %s123, %s124
    %p126 = scmp.eq.s32.totalorder %s125, 0
    %s128 = sadd.s32 %s127, 1
    %s129 = scalar_select %p126, %s127, %s128
    %p132 = pneg %p126
    %p133 = scmp.eq.s32.totalorder %s10, 1
    %p134 = por %p132, %p133
    %p135 = scmp.ne.s32.totalorder %s127, %s130
    %p136 = scmp.eq.s32.totalorder %s10, 0
    %p137 = por %p135, %p136
    %p138 = scmp.ne.s32.totalorder %s127, %s130
    %p139 = scmp.eq.s32.totalorder %s15, 1
    %p140 = por %p138, %p139
    %p141 = scmp.ne.s32.totalorder %s130, %s131
    %p142 = scmp.eq.s32.totalorder %s15, 0
    %p143 = por %p141, %p142
    %p144 = scmp.ne.s32.totalorder %s130, %s131
    %p145 = scmp.eq.s32.totalorder %s16, 1
    %p146 = por %p144, %p145
    %p148 = scmp.ne.s32.totalorder %s131, %s147
    %p149 = scmp.eq.s32.totalorder %s16, 0
    %p150 = por %p148, %p149
    %s151 = ssub.s32 %s17, %s36
    %s152 = ssub.s32 %s18, %s32
    %s153 = sor.u32 %s151, %s152
    %p154 = scmp.eq.s32.totalorder %s153, 0
    %s156 = sadd.s32 %s155, 1
    %s157 = scalar_select %p154, %s155, %s156
    %p160 = pneg %p154
    %p161 = scmp.eq.s32.totalorder %s10, 1
    %p162 = por %p160, %p161
    %p163 = scmp.ne.s32.totalorder %s155, %s158
    %p164 = scmp.eq.s32.totalorder %s10, 0
    %p165 = por %p163, %p164
    %p166 = scmp.ne.s32.totalorder %s155, %s158
    %p167 = scmp.eq.s32.totalorder %s15, 1
    %p168 = por %p166, %p167
    %p169 = scmp.ne.s32.totalorder %s158, %s159
    %p170 = scmp.eq.s32.totalorder %s15, 0
    %p171 = por %p169, %p170
    %p172 = scmp.ne.s32.totalorder %s158, %s159
    %p173 = scmp.eq.s32.totalorder %s16, 1
    %p174 = por %p172, %p173
    %p176 = scmp.ne.s32.totalorder %s159, %s175
    %p177 = scmp.eq.s32.totalorder %s16, 0
    %p178 = por %p176, %p177
    %p179 = scmp.le.s32.totalorder 1, %s10
    %p180 = scmp.lt.s32.totalorder %s10, 3
    %p181 = pnand %p179, %p180
    %p182 = pneg %p181
    // Predicated region
    $region9: #{decoder_layer.10} parent=5 // pred_check
      _
    $region10: #{decoder_layer.10} parent=5 // pred_check_branch
      %184 = sbr.rel (%p181) target = $region12
    $region11: #{decoder_layer.10} parent=5 // pred_region
      %s185 = ssub.s32 %s10, 1
    $region12: #{decoder_layer.10} parent=5 // pred_fallthru
      _
    %p186 = scmp.lt.s32.totalorder %s10, 2
    // Predicated region
    $region13: #{decoder_layer.10} parent=5 // pred_check
      %p187 = pneg %p186
    $region14: #{decoder_layer.10} parent=5 // pred_check_branch
      %189 = sbr.rel (%p187) target = $region16
    $region15: #{decoder_layer.10} parent=5 // pred_region
      // Predicated region
      $region17: #{decoder_layer.10} parent=15 // pred_check
        %p190 = pneg %p51
      $region18: #{decoder_layer.10} parent=15 // pred_check_branch
        %192 = sbr.rel (%p190) target = $region20
      $region19: #{decoder_layer.10} parent=15 // pred_region
        %p193 = scmp.lt.s32.totalorder %s17, 1
        %s194 = scalar_select %p193, %s17, 1
        %p195 = scmp.lt.s32.totalorder %s18, 0
        %s196 = scalar_select %p195, %s18, 0
        %s197 = smul.addr %s194, 4
        %s198 = sadd.s32 %s196, %s197
        %s199 = smul.addr %s198, 4
        %s200 = scalar_lea.vmem %s0, %s199
      $region20: #{decoder_layer.10} parent=15 // pred_fallthru
        _
      // Predicated region
      $region21: #{decoder_layer.10} parent=15 // pred_check
        %p201 = pneg %p79
      $region22: #{decoder_layer.10} parent=15 // pred_check_branch
        %203 = sbr.rel (%p201) target = $region24
      $region23: #{decoder_layer.10} parent=15 // pred_region
        %p204 = scmp.lt.s32.totalorder %s17, 1
        %s205 = scalar_select %p204, %s17, 1
        %p206 = scmp.lt.s32.totalorder %s19, 0
        %s207 = scalar_select %p206, %s19, 0
        %s208 = smul.addr %s205, 4
        %s209 = sadd.s32 %s207, %s208
        %s210 = smul.addr %s209, 4
        %s211 = scalar_lea.vmem %s1, %s210
      $region24: #{decoder_layer.10} parent=15 // pred_fallthru
        _
      // Predicated region
      $region25: #{decoder_layer.10} parent=15 // pred_check
        %p212 = pneg %p107
      $region26: #{decoder_layer.10} parent=15 // pred_check_branch
        %214 = sbr.rel (%p212) target = $region28
      $region27: #{decoder_layer.10} parent=15 // pred_region
        %p215 = scmp.lt.s32.totalorder %s17, 1
        %s216 = scalar_select %p215, %s17, 1
        %p217 = scmp.lt.s32.totalorder %s19, 0
        %s218 = scalar_select %p217, %s19, 0
        %s219 = smul.addr %s216, 4
        %s220 = sadd.s32 %s218, %s219
        %s221 = smul.addr %s220, 4
        %s222 = scalar_lea.vmem %s2, %s221
      $region28: #{decoder_layer.10} parent=15 // pred_fallthru
        _
      // Predicated region
      $region29: #{decoder_layer.10} parent=15 // pred_check
        %p223 = pneg %p137
      $region30: #{decoder_layer.10} parent=15 // pred_check_branch
        %225 = sbr.rel (%p223) target = $region32
      $region31: #{decoder_layer.10} parent=15 // pred_region
        %p226 = scmp.lt.s32.totalorder %s17, 1
        %s227 = scalar_select %p226, %s17, 1
        %p228 = scmp.lt.s32.totalorder %s18, 0
        %s229 = scalar_select %p228, %s18, 0
        %p230 = scmp.lt.s32.totalorder %s19, 0
        %s231 = scalar_select %p230, %s19, 0
        %s232 = sadd.s32 %s231, %s229
        %s233 = sadd.s32 %s232, %s227
        %s234 = smul.addr %s233, 4
        %s235 = scalar_lea.vmem %s3, %s234
      $region32: #{decoder_layer.10} parent=15 // pred_fallthru
        _
    $region16: #{decoder_layer.10} parent=5 // pred_fallthru
      _
    %p236 = scmp.le.s32.totalorder 1, %s10
    %p237 = scmp.lt.s32.totalorder %s10, 3
    %p238 = pnand %p236, %p237
    %p239 = pneg %p238
    // Predicated region
    $region33: #{decoder_layer.10} parent=5 // pred_check
      _
    $region34: #{decoder_layer.10} parent=5 // pred_check_branch
      %241 = sbr.rel (%p238) target = $region36
    $region35: #{decoder_layer.10} parent=5 // pred_region
      %s242 = ssub.s32 %s10, 1
      %p243 = scmp.lt.s32.totalorder %s20, 1
      %s244 = scalar_select %p243, %s20, 1
      %p245 = scmp.lt.s32.totalorder %s21, 0
      %s246 = scalar_select %p245, %s21, 0
      %s247 = smul.addr %s244, 4
      %s248 = sadd.s32 %s246, %s247
      %s249 = smul.addr %s248, 4
      %s250 = scalar_lea.vmem %s0, %s249
      %p251 = pneg %p57
      %p252 = pneg %p54
      %p253 = scmp.lt.s32.totalorder %s20, 1
      %s254 = scalar_select %p253, %s20, 1
      %p255 = scmp.lt.s32.totalorder %s22, 0
      %s256 = scalar_select %p255, %s22, 0
      %s257 = smul.addr %s254, 4
      %s258 = sadd.s32 %s256, %s257
      %s259 = smul.addr %s258, 4
      %s260 = scalar_lea.vmem %s1, %s259
      %p261 = pneg %p85
      %p262 = pneg %p82
      %p263 = scmp.lt.s32.totalorder %s20, 1
      %s264 = scalar_select %p263, %s20, 1
      %p265 = scmp.lt.s32.totalorder %s22, 0
      %s266 = scalar_select %p265, %s22, 0
      %s267 = smul.addr %s264, 4
      %s268 = sadd.s32 %s266, %s267
      %s269 = smul.addr %s268, 4
      %s270 = scalar_lea.vmem %s2, %s269
      %p271 = pneg %p113
      %p272 = pneg %p110
      %p273 = scmp.lt.s32.totalorder %s20, 1
      %s274 = scalar_select %p273, %s20, 1
      %p275 = scmp.lt.s32.totalorder %s21, 0
      %s276 = scalar_select %p275, %s21, 0
      %p277 = scmp.lt.s32.totalorder %s22, 0
      %s278 = scalar_select %p277, %s22, 0
      %s279 = sadd.s32 %s278, %s276
      %s280 = sadd.s32 %s279, %s274
      %s281 = smul.addr %s280, 4
      %s282 = scalar_lea.vmem %s3, %s281
      %p283 = pneg %p143
      %p284 = pneg %p140
      %p285 = pneg %p171
      %p286 = pneg %p168
      %p287 = scmp.lt.s32.totalorder %s20, 1
      %s288 = scalar_select %p287, %s20, 1
      %p289 = scmp.lt.s32.totalorder %s21, 0
      %s290 = scalar_select %p289, %s21, 0
      %s291 = smul.addr %s288, 4
      %s292 = sadd.s32 %s290, %s291
      %s293 = smul.addr %s292, 4
      %s294 = scalar_lea.vmem %s4, %s293
      %p295 = scmp.lt.s32.totalorder %s20, 1
      %s296 = scalar_select %p295, %s20, 1
      %p297 = scmp.lt.s32.totalorder %s21, 0
      %s298 = scalar_select %p297, %s21, 0
      %s299 = smul.addr %s296, 4
      %s300 = sadd.s32 %s298, %s299
      %s301 = smul.addr %s300, 4
      %s302 = scalar_lea.vmem %s0, %s301
      %p303 = scmp.lt.s32.totalorder %s20, 1
      %s304 = scalar_select %p303, %s20, 1
      %p305 = scmp.lt.s32.totalorder %s22, 0
      %s306 = scalar_select %p305, %s22, 0
      %s307 = smul.addr %s304, 4
      %s308 = sadd.s32 %s306, %s307
      %s309 = smul.addr %s308, 4
      %s310 = scalar_lea.vmem %s1, %s309
      %p311 = scmp.lt.s32.totalorder %s20, 1
      %s312 = scalar_select %p311, %s20, 1
      %p313 = scmp.lt.s32.totalorder %s22, 0
      %s314 = scalar_select %p313, %s22, 0
      %s315 = smul.addr %s312, 4
      %s316 = sadd.s32 %s314, %s315
      %s317 = smul.addr %s316, 4
      %s318 = scalar_lea.vmem %s2, %s317
      %p319 = scmp.lt.s32.totalorder %s20, 1
      %s320 = scalar_select %p319, %s20, 1
      %p321 = scmp.lt.s32.totalorder %s21, 0
      %s322 = scalar_select %p321, %s21, 0
      %p323 = scmp.lt.s32.totalorder %s22, 0
      %s324 = scalar_select %p323, %s22, 0
      %s325 = sadd.s32 %s324, %s322
      %s326 = sadd.s32 %s325, %s320
      %s327 = smul.addr %s326, 4
      %s328 = scalar_lea.vmem %s3, %s327
      %p329 = scmp.lt.s32.totalorder %s20, 1
      %s330 = scalar_select %p329, %s20, 1
      %p331 = scmp.lt.s32.totalorder %s21, 0
      %s332 = scalar_select %p331, %s21, 0
      %s333 = smul.addr %s330, 4
      %s334 = sadd.s32 %s332, %s333
      %s335 = smul.addr %s334, 4
      %s336 = scalar_lea.vmem %s4, %s335
      %p338 = scmp.eq.s32.totalorder %s22, 0
      // Predicated region
      $region37: #{decoder_layer.10} parent=35 // pred_check
        %p339 = pneg %p338
      $region38: #{decoder_layer.10} parent=35 // pred_check_branch
        %341 = sbr.rel (%p339) target = $region40
      $region39: #{decoder_layer.10} parent=35 // pred_region
        %vm342 = vcmask 7168
        %343 = vst.msk [vmem:[#allocation2] sm:$0xff] %vm342, -inf
        %344 = vst.msk [vmem:[#allocation2 + $0x8] sm:$0xff] %vm342, -inf
        %345 = vst.msk [vmem:[#allocation2 + $0x10] sm:$0xff] %vm342, -inf
        %346 = vst.msk [vmem:[#allocation2 + $0x18] sm:$0xff] %vm342, -inf
        %347 = vst.msk [vmem:[#allocation3] sm:$0xff] %vm342, 0.0
        %348 = vst.msk [vmem:[#allocation3 + $0x8] sm:$0xff] %vm342, 0.0
        %349 = vst.msk [vmem:[#allocation3 + $0x10] sm:$0xff] %vm342, 0.0
        %350 = vst.msk [vmem:[#allocation3 + $0x18] sm:$0xff] %vm342, 0.0
        %vm351 = vcmask 64512
        %352 = vst.msk [vmem:[#allocation4] sm:$0xff] %vm351, 0.0
        %353 = vst.msk [vmem:[#allocation4 + $0x8] sm:$0xff] %vm351, 0.0
        %354 = vst.msk [vmem:[#allocation4 + $0x10] sm:$0xff] %vm351, 0.0
        %355 = vst.msk [vmem:[#allocation4 + $0x18] sm:$0xff] %vm351, 0.0
      $region40: #{decoder_layer.10} parent=35 // pred_fallthru
        _
      %v356 = vld [vmem:[%s302] sm:$0xf]
      %v357 = vld [vmem:[%s302 + $0x4] sm:$0xf]
      %v358 = vld [vmem:[%s302 + $0x8] sm:$0xf]
      %v359 = vld [vmem:[%s302 + $0xc] sm:$0xf]
      %v360 = vld [vmem:[%s310] sm:$0xf]
      %v361 = vld [vmem:[%s310 + $0x4] sm:$0xf]
      %v362 = vld [vmem:[%s310 + $0x8] sm:$0xf]
      %v363 = vld [vmem:[%s310 + $0xc] sm:$0xf]
      %v364 = vld [vmem:[%s328] sm:$0xf]
      %v365 = vunpack.c.l.bf16 %v364
      %vm366 = vcmask 64512
      %v368 = vsel %vm366, %v356, 0
      %v371 = vsel %vm366, %v360, 0
      %373 = vmatpush.bf16.xpose.msra.mxu0 0
      %374 = vmatpush.bf16.xpose.msra.mxu0 0
      %375 = vmatpush.bf16.xpose.msra.mxu0 0
      %376 = vmatpush.bf16.xpose.msra.mxu0 0
      %377 = vmatpush.bf16.xpose.msra.mxu0 0
      %378 = vmatpush.bf16.xpose.msra.mxu0 0
      %379 = vmatpush.bf16.xpose.msra.mxu0 0
      %380 = vmatpush.bf16.xpose.msra.mxu0 %v371
      %381 = vmatmul.bf16.gmra.mxu0 %v368
      %v382 = vpop.f32.mrf.mxu0
      %v383 = vadd.f32 %v365, %v382
      %v384 = vpop.f32.mrf.mxu0
      %385 = vdwg.mxu0
      %v387 = vsel %vm366, %v357, 0
      %v390 = vsel %vm366, %v361, 0
      %392 = vmatpush.bf16.xpose.msra.mxu0 0
      %393 = vmatpush.bf16.xpose.msra.mxu0 0
      %394 = vmatpush.bf16.xpose.msra.mxu0 0
      %395 = vmatpush.bf16.xpose.msra.mxu0 0
      %396 = vmatpush.bf16.xpose.msra.mxu0 0
      %397 = vmatpush.bf16.xpose.msra.mxu0 0
      %398 = vmatpush.bf16.xpose.msra.mxu0 0
      %399 = vmatpush.bf16.xpose.msra.mxu0 %v390
      %400 = vmatmul.bf16.gmra.mxu0 %v387
      %v401 = vpop.f32.mrf.mxu0
      %v402 = vadd.f32 %v365, %v401
      %v403 = vpop.f32.mrf.mxu0
      %404 = vdwg.mxu0
      %v406 = vsel %vm366, %v358, 0
      %v409 = vsel %vm366, %v362, 0
      %411 = vmatpush.bf16.xpose.msra.mxu0 0
      %412 = vmatpush.bf16.xpose.msra.mxu0 0
      %413 = vmatpush.bf16.xpose.msra.mxu0 0
      %414 = vmatpush.bf16.xpose.msra.mxu0 0
      %415 = vmatpush.bf16.xpose.msra.mxu0 0
      %416 = vmatpush.bf16.xpose.msra.mxu0 0
      %417 = vmatpush.bf16.xpose.msra.mxu0 0
      %418 = vmatpush.bf16.xpose.msra.mxu0 %v409
      %419 = vmatmul.bf16.gmra.mxu0 %v406
      %v420 = vpop.f32.mrf.mxu0
      %v421 = vadd.f32 %v365, %v420
      %v422 = vpop.f32.mrf.mxu0
      %423 = vdwg.mxu0
      %v425 = vsel %vm366, %v359, 0
      %v428 = vsel %vm366, %v363, 0
      %430 = vmatpush.bf16.xpose.msra.mxu0 0
      %431 = vmatpush.bf16.xpose.msra.mxu0 0
      %432 = vmatpush.bf16.xpose.msra.mxu0 0
      %433 = vmatpush.bf16.xpose.msra.mxu0 0
      %434 = vmatpush.bf16.xpose.msra.mxu0 0
      %435 = vmatpush.bf16.xpose.msra.mxu0 0
      %436 = vmatpush.bf16.xpose.msra.mxu0 0
      %437 = vmatpush.bf16.xpose.msra.mxu0 %v428
      %438 = vmatmul.bf16.gmra.mxu0 %v425
      %v439 = vpop.f32.mrf.mxu0
      %v440 = vadd.f32 %v365, %v439
      %v441 = vpop.f32.mrf.mxu0
      %442 = vdwg.mxu0
      %v443 = vld [vmem:[#allocation2] sm:$0xff]
      %v444 = vld [vmem:[#allocation2 + $0x8] sm:$0xff]
      %v445 = vld [vmem:[#allocation2 + $0x10] sm:$0xff]
      %v446 = vld [vmem:[#allocation2 + $0x18] sm:$0xff]
      %v447 = vsel %vm366, %v383, -inf
      %448 = vmax.xlane.f32.xlu0 %v447
      %v449 = vpop.xlane.xlu0 %448
      %v450 = vsel %vm366, %v402, -inf
      %451 = vmax.xlane.f32.xlu0 %v450
      %v452 = vpop.xlane.xlu0 %451
      %v453 = vsel %vm366, %v421, -inf
      %454 = vmax.xlane.f32.xlu0 %v453
      %v455 = vpop.xlane.xlu0 %454
      %v456 = vsel %vm366, %v440, -inf
      %457 = vmax.xlane.f32.xlu0 %v456
      %v458 = vpop.xlane.xlu0 %457
      %v459 = vmax.f32 %v443, %v449
      %v460 = vmax.f32 %v444, %v452
      %v461 = vmax.f32 %v445, %v455
      %v462 = vmax.f32 %v446, %v458
      %v463 = vsub.f32 %v443, %v459
      %v464 = vsub.f32 %v444, %v460
      %v465 = vsub.f32 %v445, %v461
      %v466 = vsub.f32 %v446, %v462
      %v467 = vmul.f32 %v463, 1.442695
      %v468 = vpow.pop %v467
      %v469 = vmul.f32 %v464, 1.442695
      %v470 = vpow.pop %v469
      %v471 = vmul.f32 %v465, 1.442695
      %v472 = vpow.pop %v471
      %v473 = vmul.f32 %v466, 1.442695
      %v474 = vpow.pop %v473
      %476 = vset.pattern.permute.xlu0 0
      %477 = vperm.xlu0 %476, %v459
      %v478 = vpop.permute.xlu0 %477
      %481 = vset.pattern.permute.xlu0 0
      %482 = vperm.xlu0 %481, %v460
      %v483 = vpop.permute.xlu0 %482
      %486 = vset.pattern.permute.xlu0 0
      %487 = vperm.xlu0 %486, %v461
      %v488 = vpop.permute.xlu0 %487
      %491 = vset.pattern.permute.xlu0 0
      %492 = vperm.xlu0 %491, %v462
      %v493 = vpop.permute.xlu0 %492
      %v495 = vsub.f32 %v383, %v478
      %v496 = vsub.f32 %v402, %v483
      %v497 = vsub.f32 %v421, %v488
      %v498 = vsub.f32 %v440, %v493
      %v499 = vmul.f32 %v495, 1.442695
      %v500 = vpow.pop %v499
      %v501 = vmul.f32 %v496, 1.442695
      %v502 = vpow.pop %v501
      %v503 = vmul.f32 %v497, 1.442695
      %v504 = vpow.pop %v503
      %v505 = vmul.f32 %v498, 1.442695
      %v506 = vpow.pop %v505
      %v507 = vld [vmem:[#allocation3] sm:$0xff]
      %v508 = vld [vmem:[#allocation3 + $0x8] sm:$0xff]
      %v509 = vld [vmem:[#allocation3 + $0x10] sm:$0xff]
      %v510 = vld [vmem:[#allocation3 + $0x18] sm:$0xff]
      %v511 = vmul.f32 %v468, %v507
      %v512 = vmul.f32 %v470, %v508
      %v513 = vmul.f32 %v472, %v509
      %v514 = vmul.f32 %v474, %v510
      %v515 = vsel %vm366, %v500, 0.0
      %516 = vadd.xlane.f32.xlu0 %v515
      %v517 = vpop.xlane.xlu0 %516
      %v518 = vsel %vm366, %v502, 0.0
      %519 = vadd.xlane.f32.xlu0 %v518
      %v520 = vpop.xlane.xlu0 %519
      %v521 = vsel %vm366, %v504, 0.0
      %522 = vadd.xlane.f32.xlu0 %v521
      %v523 = vpop.xlane.xlu0 %522
      %v524 = vsel %vm366, %v506, 0.0
      %525 = vadd.xlane.f32.xlu0 %v524
      %v526 = vpop.xlane.xlu0 %525
      %v527 = vadd.f32 %v511, %v517
      %v528 = vadd.f32 %v512, %v520
      %v529 = vadd.f32 %v513, %v523
      %v530 = vadd.f32 %v514, %v526
      %vm531 = vcmask 7168
      %532 = vst.msk [vmem:[#allocation3] sm:$0xff] %vm531, %v527
      %533 = vst.msk [vmem:[#allocation3 + $0x8] sm:$0xff] %vm531, %v528
      %534 = vst.msk [vmem:[#allocation3 + $0x10] sm:$0xff] %vm531, %v529
      %535 = vst.msk [vmem:[#allocation3 + $0x18] sm:$0xff] %vm531, %v530
      %v536 = vld [vmem:[#allocation4] sm:$0xff]
      %v537 = vld [vmem:[#allocation4 + $0x8] sm:$0xff]
      %v538 = vld [vmem:[#allocation4 + $0x10] sm:$0xff]
      %v539 = vld [vmem:[#allocation4 + $0x18] sm:$0xff]
      %541 = vset.pattern.permute.xlu0 0
      %542 = vperm.xlu0 %541, %v468
      %v543 = vpop.permute.xlu0 %542
      %546 = vset.pattern.permute.xlu0 0
      %547 = vperm.xlu0 %546, %v470
      %v548 = vpop.permute.xlu0 %547
      %551 = vset.pattern.permute.xlu0 0
      %552 = vperm.xlu0 %551, %v472
      %v553 = vpop.permute.xlu0 %552
      %556 = vset.pattern.permute.xlu0 0
      %557 = vperm.xlu0 %556, %v474
      %v558 = vpop.permute.xlu0 %557
      %v560 = vmul.f32 %v543, %v536
      %v561 = vmul.f32 %v548, %v537
      %v562 = vmul.f32 %v553, %v538
      %v563 = vmul.f32 %v558, %v539
      %v564 = vpack.c.bf16 %v500, %v500
      %v565 = vpack.c.bf16 %v502, %v502
      %v566 = vpack.c.bf16 %v504, %v504
      %v567 = vpack.c.bf16 %v506, %v506
      %v568 = vld [vmem:[%s318] sm:$0xf]
      %v569 = vld [vmem:[%s318 + $0x4] sm:$0xf]
      %v570 = vld [vmem:[%s318 + $0x8] sm:$0xf]
      %v571 = vld [vmem:[%s318 + $0xc] sm:$0xf]
      %v573 = vsel %vm366, %v564, 0
      %vm575 = vcmask 1043456
      %v577 = vsel %vm575, %v568, 0
      %579 = vmatpush.bf16.msra.mxu0 0
      %580 = vmatpush.bf16.msra.mxu0 0
      %581 = vmatpush.bf16.msra.mxu0 0
      %582 = vmatpush.bf16.msra.mxu0 0
      %583 = vmatpush.bf16.msra.mxu0 0
      %584 = vmatpush.bf16.msra.mxu0 0
      %585 = vmatpush.bf16.msra.mxu0 0
      %586 = vmatpush.bf16.msra.mxu0 %v577
      %587 = vmatmul.bf16.gmra.mxu0 %v573
      %v588 = vpop.f32.mrf.mxu0
      %v589 = vadd.f32 0.0, %v588
      %v590 = vpop.f32.mrf.mxu0
      %591 = vdwg.mxu0
      %v593 = vsel %vm366, %v565, 0
      %v596 = vsel %vm575, %v569, 0
      %598 = vmatpush.bf16.msra.mxu0 0
      %599 = vmatpush.bf16.msra.mxu0 0
      %600 = vmatpush.bf16.msra.mxu0 0
      %601 = vmatpush.bf16.msra.mxu0 0
      %602 = vmatpush.bf16.msra.mxu0 0
      %603 = vmatpush.bf16.msra.mxu0 0
      %604 = vmatpush.bf16.msra.mxu0 0
      %605 = vmatpush.bf16.msra.mxu0 %v596
      %606 = vmatmul.bf16.gmra.mxu0 %v593
      %v607 = vpop.f32.mrf.mxu0
      %v608 = vadd.f32 0.0, %v607
      %v609 = vpop.f32.mrf.mxu0
      %610 = vdwg.mxu0
      %v612 = vsel %vm366, %v566, 0
      %v615 = vsel %vm575, %v570, 0
      %617 = vmatpush.bf16.msra.mxu0 0
      %618 = vmatpush.bf16.msra.mxu0 0
      %619 = vmatpush.bf16.msra.mxu0 0
      %620 = vmatpush.bf16.msra.mxu0 0
      %621 = vmatpush.bf16.msra.mxu0 0
      %622 = vmatpush.bf16.msra.mxu0 0
      %623 = vmatpush.bf16.msra.mxu0 0
      %624 = vmatpush.bf16.msra.mxu0 %v615
      %625 = vmatmul.bf16.gmra.mxu0 %v612
      %v626 = vpop.f32.mrf.mxu0
      %v627 = vadd.f32 0.0, %v626
      %v628 = vpop.f32.mrf.mxu0
      %629 = vdwg.mxu0
      %v631 = vsel %vm366, %v567, 0
      %v634 = vsel %vm575, %v571, 0
      %636 = vmatpush.bf16.msra.mxu0 0
      %637 = vmatpush.bf16.msra.mxu0 0
      %638 = vmatpush.bf16.msra.mxu0 0
      %639 = vmatpush.bf16.msra.mxu0 0
      %640 = vmatpush.bf16.msra.mxu0 0
      %641 = vmatpush.bf16.msra.mxu0 0
      %642 = vmatpush.bf16.msra.mxu0 0
      %643 = vmatpush.bf16.msra.mxu0 %v634
      %644 = vmatmul.bf16.gmra.mxu0 %v631
      %v645 = vpop.f32.mrf.mxu0
      %v646 = vadd.f32 0.0, %v645
      %v647 = vpop.f32.mrf.mxu0
      %648 = vdwg.mxu0
      %v649 = vadd.f32 %v560, %v589
      %v650 = vadd.f32 %v561, %v608
      %v651 = vadd.f32 %v562, %v627
      %v652 = vadd.f32 %v563, %v646
      %653 = vst.msk [vmem:[#allocation4] sm:$0xff] %vm366, %v649
      %654 = vst.msk [vmem:[#allocation4 + $0x8] sm:$0xff] %vm366, %v650
      %655 = vst.msk [vmem:[#allocation4 + $0x10] sm:$0xff] %vm366, %v651
      %656 = vst.msk [vmem:[#allocation4 + $0x18] sm:$0xff] %vm366, %v652
      %657 = vst.msk [vmem:[#allocation2] sm:$0xff] %vm531, %v459
      %658 = vst.msk [vmem:[#allocation2 + $0x8] sm:$0xff] %vm531, %v460
      %659 = vst.msk [vmem:[#allocation2 + $0x10] sm:$0xff] %vm531, %v461
      %660 = vst.msk [vmem:[#allocation2 + $0x18] sm:$0xff] %vm531, %v462
      // Predicated region
      $region41: #{decoder_layer.10} parent=35 // pred_check
        %p661 = pneg %p338
      $region42: #{decoder_layer.10} parent=35 // pred_check_branch
        %663 = sbr.rel (%p661) target = $region44
      $region43: #{decoder_layer.10} parent=35 // pred_region
        %v664 = vld [vmem:[#allocation3] sm:$0xff]
        %v665 = vld [vmem:[#allocation3 + $0x8] sm:$0xff]
        %v666 = vld [vmem:[#allocation3 + $0x10] sm:$0xff]
        %v667 = vld [vmem:[#allocation3 + $0x18] sm:$0xff]
        %v668 = vrcp.pop %v664
        %v669 = vrcp.pop %v665
        %v670 = vrcp.pop %v666
        %v671 = vrcp.pop %v667
        %v672 = vld [vmem:[#allocation4] sm:$0xff]
        %v673 = vld [vmem:[#allocation4 + $0x8] sm:$0xff]
        %v674 = vld [vmem:[#allocation4 + $0x10] sm:$0xff]
        %v675 = vld [vmem:[#allocation4 + $0x18] sm:$0xff]
        %677 = vset.pattern.permute.xlu0 0
        %678 = vperm.xlu0 %677, %v668
        %v679 = vpop.permute.xlu0 %678
        %682 = vset.pattern.permute.xlu0 0
        %683 = vperm.xlu0 %682, %v669
        %v684 = vpop.permute.xlu0 %683
        %687 = vset.pattern.permute.xlu0 0
        %688 = vperm.xlu0 %687, %v670
        %v689 = vpop.permute.xlu0 %688
        %692 = vset.pattern.permute.xlu0 0
        %693 = vperm.xlu0 %692, %v671
        %v694 = vpop.permute.xlu0 %693
        %v696 = vmul.f32 %v672, %v679
        %v697 = vmul.f32 %v673, %v684
        %v698 = vmul.f32 %v674, %v689
        %v699 = vmul.f32 %v675, %v694
        %v700 = vpack.c.bf16 %v696, %v696
        %v701 = vpack.c.bf16 %v697, %v697
        %v702 = vpack.c.bf16 %v698, %v698
        %v703 = vpack.c.bf16 %v699, %v699
        %vm704 = vcmask 60416
        %705 = vst.msk [vmem:[%s336] sm:$0xf] %vm704, %v700
        %706 = vst.msk [vmem:[%s336 + $0x4] sm:$0xf] %vm704, %v701
        %707 = vst.msk [vmem:[%s336 + $0x8] sm:$0xf] %vm704, %v702
        %708 = vst.msk [vmem:[%s336 + $0xc] sm:$0xf] %vm704, %v703
      $region44: #{decoder_layer.10} parent=35 // pred_fallthru
        _
      %p709 = scmp.lt.s32.totalorder %s20, 1
      %s710 = scalar_select %p709, %s20, 1
      %p711 = scmp.lt.s32.totalorder %s21, 0
      %s712 = scalar_select %p711, %s21, 0
      %s713 = smul.addr %s710, 4
      %s714 = sadd.s32 %s712, %s713
      %s715 = smul.addr %s714, 4
      %s716 = scalar_lea.vmem %s4, %s715
      // Predicated region
      $region45: #{decoder_layer.10} parent=35 // pred_check
        %p717 = pneg %p168
      $region46: #{decoder_layer.10} parent=35 // pred_check_branch
        %719 = sbr.rel (%p717) target = $region48
      $region47: #{decoder_layer.10} parent=35 // pred_region
        _
      $region48: #{decoder_layer.10} parent=35 // pred_fallthru
        _
    $region36: #{decoder_layer.10} parent=5 // pred_fallthru
      _
    %p720 = scmp.le.s32.totalorder 2, %s10
    // Predicated region
    $region49: #{decoder_layer.10} parent=5 // pred_check
      %p721 = pneg %p720
    $region50: #{decoder_layer.10} parent=5 // pred_check_branch
      %723 = sbr.rel (%p721) target = $region52
    $region51: #{decoder_layer.10} parent=5 // pred_region
      %s724 = ssub.s32 %s10, 2
      // Predicated region
      $region53: #{decoder_layer.10} parent=51 // pred_check
        %p725 = pneg %p174
      $region54: #{decoder_layer.10} parent=51 // pred_check_branch
        %727 = sbr.rel (%p725) target = $region56
      $region55: #{decoder_layer.10} parent=51 // pred_region
        %p728 = scmp.lt.s32.totalorder %s23, 1
        %s729 = scalar_select %p728, %s23, 1
        %p730 = scmp.lt.s32.totalorder %s24, 0
        %s731 = scalar_select %p730, %s24, 0
        %s732 = smul.addr %s729, 4
        %s733 = sadd.s32 %s731, %s732
        %s734 = smul.addr %s733, 4
        %s735 = scalar_lea.vmem %s4, %s734
      $region56: #{decoder_layer.10} parent=51 // pred_fallthru
        _
    $region52: #{decoder_layer.10} parent=5 // pred_fallthru
      _
  $region6: #{decoder_layer.10} parent=0 // loop_footer
    %s14 = sadd.s32 1, %s10
  $region7: #{decoder_layer.10} parent=0 // loop_footer_branch
    %9 = sbr.rel target = $region3
  $region8: #{decoder_layer.10} parent=0 // loop_exit
    _

// kernel: decoder_layer.12
$region0: #{decoder_layer.12}
  #allocation0 [shape = 'u32[]', space=smem, size = 0x4, offset = 0x4, fixed_abs, tag = 'smem constant byte address 0x4 - core index']
  #allocation1 [shape = 'u32[72,128]{1,0:T(1,128)}', space=vmem, size = 0x9000, scoped, tag = 'internal scratch']
  #allocation2 [shape = 'f32[16,32]{1,0:T(8,128)}', space=vmem, size = 0x2000, scoped, tag = 'scratch operand']
  %s0 = inlined_call_operand.vmem [shape: bf16[16,32], index: 0, kind: input, shape index: {}]
  %s1 = inlined_call_operand.vmem [shape: bf16[32,32], index: 1, kind: input, shape index: {}]
  %s2 = inlined_call_operand.vmem [shape: f32[1,32], index: 2, kind: input, shape index: {}]
  %s3 = inlined_call_operand.vmem [shape: bf16[16,32], index: 3, kind: output, shape index: {}]
  %s4 = sld [smem:[#allocation0]]
  $region30: #{decoder_layer.12} parent=0
    _
  %s6 = ssub.s32 1, %s4
  %s7 = scalar_select 0, %s6, %s4
  // Predicated region
  $region2: #{decoder_layer.12} parent=0 // pred_check
    _
  $region3: #{decoder_layer.12} parent=0 // pred_check_branch
    %9 = sbr.rel (0) target = $region5
  $region4: #{decoder_layer.12} parent=0 // pred_region
    _
  $region5: #{decoder_layer.12} parent=0 // pred_fallthru
    _
  // Predicated region
  $region6: #{decoder_layer.12} parent=0 // pred_check
    _
  $region7: #{decoder_layer.12} parent=0 // pred_check_branch
    %11 = sbr.rel (0) target = $region9
  $region8: #{decoder_layer.12} parent=0 // pred_region
    _
  $region9: #{decoder_layer.12} parent=0 // pred_fallthru
    _
  // Predicated region
  $region10: #{decoder_layer.12} parent=0 // pred_check
    _
  $region11: #{decoder_layer.12} parent=0 // pred_check_branch
    %13 = sbr.rel (0) target = $region13
  $region12: #{decoder_layer.12} parent=0 // pred_region
    _
  $region13: #{decoder_layer.12} parent=0 // pred_fallthru
    _
  %p15 = scmp.eq.s32.totalorder 0, 0
  // Predicated region
  $region14: #{decoder_layer.12} parent=0 // pred_check
    %p16 = pneg %p15
  $region15: #{decoder_layer.12} parent=0 // pred_check_branch
    %18 = sbr.rel (%p16) target = $region17
  $region16: #{decoder_layer.12} parent=0 // pred_region
    %vm19 = vcmask 261120
    %20 = vst.msk [vmem:[#allocation2] sm:$0xff] %vm19, 0.0
    %21 = vst.msk [vmem:[#allocation2 + $0x8] sm:$0xff] %vm19, 0.0
  $region17: #{decoder_layer.12} parent=0 // pred_fallthru
    _
  %v22 = vld [vmem:[#allocation2] sm:$0xff]
  %v23 = vld [vmem:[#allocation2 + $0x8] sm:$0xff]
  %v24 = vld [vmem:[%s0] sm:$0xf]
  %v25 = vld [vmem:[%s0 + $0x4] sm:$0xf]
  %v26 = vld [vmem:[%s1] sm:$0xf]
  %v27 = vld [vmem:[%s1 + $0x4] sm:$0xf]
  %v28 = vld [vmem:[%s1 + $0x8] sm:$0xf]
  %v29 = vld [vmem:[%s1 + $0xc] sm:$0xf]
  %v32 = vunpack.c.l.b16 %v24
  %v33 = vunpack.c.l.b16 %v25
  %v34 = vpack.c.b16 %v33, %v32
  %v39 = vunpack.c.l.b16 %v26
  %v40 = vunpack.c.l.b16 %v27
  %v41 = vunpack.c.l.b16 %v28
  %v42 = vunpack.c.l.b16 %v29
  %v43 = vpack.c.b16 %v40, %v39
  %v44 = vpack.c.b16 %v42, %v41
  %vm47 = vcmask 261120
  %v49 = vsel %vm47, %v34, 0
  %51 = vmatpush.bf16.msra.mxu0 0
  %52 = vmatpush.bf16.msra.mxu0 0
  %53 = vmatpush.bf16.msra.mxu0 0
  %54 = vmatpush.bf16.msra.mxu0 0
  %55 = vmatpush.bf16.msra.mxu0 0
  %56 = vmatpush.bf16.msra.mxu0 0
  %57 = vmatpush.bf16.msra.mxu0 %v44
  %58 = vmatpush.bf16.msra.mxu0 %v43
  %59 = vmatmul.bf16.gmra.mxu0 %v49
  %v60 = vpop.f32.mrf.mxu0
  %v61 = vadd.f32 0.0, %v60
  %v62 = vpop.f32.mrf.mxu0
  %v63 = vadd.f32 0.0, %v62
  %64 = vdwg.mxu0
  %v65 = vadd.f32 %v22, %v61
  %v66 = vadd.f32 %v23, %v63
  %67 = vst.msk [vmem:[#allocation2] sm:$0xff] %vm47, %v65
  %68 = vst.msk [vmem:[#allocation2 + $0x8] sm:$0xff] %vm47, %v66
  // Predicated region
  $region18: #{decoder_layer.12} parent=0 // pred_check
    %p69 = pneg %p15
  $region19: #{decoder_layer.12} parent=0 // pred_check_branch
    %71 = sbr.rel (%p69) target = $region21
  $region20: #{decoder_layer.12} parent=0 // pred_region
    %v72 = vld [vmem:[#allocation2] sm:$0xff]
    %v73 = vld [vmem:[#allocation2 + $0x8] sm:$0xff]
    %v74 = vld [vmem:[%s2] sm:$0x1]
    %v76 = vperm.slane %v74, 0
    %v78 = vadd.f32 %v72, %v76
    %v79 = vadd.f32 %v73, %v76
    %v80 = vpack.c.bf16 %v78, %v78
    %v81 = vpack.c.bf16 %v79, %v79
    %vm82 = vcmask 257024
    %83 = vst.msk [vmem:[%s3] sm:$0xf] %vm82, %v80
    %84 = vst.msk [vmem:[%s3 + $0x4] sm:$0xf] %vm82, %v81
  $region21: #{decoder_layer.12} parent=0 // pred_fallthru
    _
  // Predicated region
  $region22: #{decoder_layer.12} parent=0 // pred_check
    _
  $region23: #{decoder_layer.12} parent=0 // pred_check_branch
    %86 = sbr.rel (0) target = $region25
  $region24: #{decoder_layer.12} parent=0 // pred_region
    _
  $region25: #{decoder_layer.12} parent=0 // pred_fallthru
    _
  // Predicated region
  $region26: #{decoder_layer.12} parent=0 // pred_check
    _
  $region27: #{decoder_layer.12} parent=0 // pred_check_branch
    %88 = sbr.rel (0) target = $region29
  $region28: #{decoder_layer.12} parent=0 // pred_region
    _
  $region29: #{decoder_layer.12} parent=0 // pred_fallthru
    _

// kernel: decoder_layer.11
$region0: #{decoder_layer.11}
  #allocation0 [shape = 'u32[]', space=smem, size = 0x4, offset = 0x4, fixed_abs, tag = 'smem constant byte address 0x4 - core index']
  #allocation1 [shape = 'u32[72,128]{1,0:T(1,128)}', space=vmem, size = 0x9000, scoped, tag = 'internal scratch']
  #allocation2 [shape = 'f32[16,32]{1,0:T(8,128)}', space=vmem, size = 0x2000, scoped, tag = 'scratch operand']
  %s0 = inlined_call_operand.vmem [shape: bf16[16,32], index: 0, kind: input, shape index: {}]
  %s1 = inlined_call_operand.vmem [shape: bf16[32,32], index: 1, kind: input, shape index: {}]
  %s2 = inlined_call_operand.vmem [shape: f32[1,32], index: 2, kind: input, shape index: {}]
  %s3 = inlined_call_operand.vmem [shape: bf16[16,32], index: 3, kind: input, shape index: {}]
  %s4 = inlined_call_operand.vmem [shape: f32[1,32], index: 4, kind: input, shape index: {}]
  %s5 = inlined_call_operand.vmem [shape: f32[1,32], index: 5, kind: input, shape index: {}]
  %s6 = inlined_call_operand.vmem [shape: bf16[16,32], index: 6, kind: output, shape index: {}]
  %s7 = sld [smem:[#allocation0]]
  $region42: #{decoder_layer.11} parent=0
    _
  %s9 = ssub.s32 1, %s7
  %s10 = scalar_select 0, %s9, %s7
  // Predicated region
  $region2: #{decoder_layer.11} parent=0 // pred_check
    _
  $region3: #{decoder_layer.11} parent=0 // pred_check_branch
    %12 = sbr.rel (0) target = $region5
  $region4: #{decoder_layer.11} parent=0 // pred_region
    _
  $region5: #{decoder_layer.11} parent=0 // pred_fallthru
    _
  // Predicated region
  $region6: #{decoder_layer.11} parent=0 // pred_check
    _
  $region7: #{decoder_layer.11} parent=0 // pred_check_branch
    %14 = sbr.rel (0) target = $region9
  $region8: #{decoder_layer.11} parent=0 // pred_region
    _
  $region9: #{decoder_layer.11} parent=0 // pred_fallthru
    _
  // Predicated region
  $region10: #{decoder_layer.11} parent=0 // pred_check
    _
  $region11: #{decoder_layer.11} parent=0 // pred_check_branch
    %16 = sbr.rel (0) target = $region13
  $region12: #{decoder_layer.11} parent=0 // pred_region
    _
  $region13: #{decoder_layer.11} parent=0 // pred_fallthru
    _
  // Predicated region
  $region14: #{decoder_layer.11} parent=0 // pred_check
    _
  $region15: #{decoder_layer.11} parent=0 // pred_check_branch
    %18 = sbr.rel (0) target = $region17
  $region16: #{decoder_layer.11} parent=0 // pred_region
    _
  $region17: #{decoder_layer.11} parent=0 // pred_fallthru
    _
  // Predicated region
  $region18: #{decoder_layer.11} parent=0 // pred_check
    _
  $region19: #{decoder_layer.11} parent=0 // pred_check_branch
    %20 = sbr.rel (0) target = $region21
  $region20: #{decoder_layer.11} parent=0 // pred_region
    _
  $region21: #{decoder_layer.11} parent=0 // pred_fallthru
    _
  // Predicated region
  $region22: #{decoder_layer.11} parent=0 // pred_check
    _
  $region23: #{decoder_layer.11} parent=0 // pred_check_branch
    %22 = sbr.rel (0) target = $region25
  $region24: #{decoder_layer.11} parent=0 // pred_region
    _
  $region25: #{decoder_layer.11} parent=0 // pred_fallthru
    _
  %p24 = scmp.eq.s32.totalorder 0, 0
  // Predicated region
  $region26: #{decoder_layer.11} parent=0 // pred_check
    %p25 = pneg %p24
  $region27: #{decoder_layer.11} parent=0 // pred_check_branch
    %27 = sbr.rel (%p25) target = $region29
  $region28: #{decoder_layer.11} parent=0 // pred_region
    %vm28 = vcmask 261120
    %29 = vst.msk [vmem:[#allocation2] sm:$0xff] %vm28, 0.0
    %30 = vst.msk [vmem:[#allocation2 + $0x8] sm:$0xff] %vm28, 0.0
  $region29: #{decoder_layer.11} parent=0 // pred_fallthru
    _
  %v31 = vld [vmem:[#allocation2] sm:$0xff]
  %v32 = vld [vmem:[#allocation2 + $0x8] sm:$0xff]
  %v33 = vld [vmem:[%s0] sm:$0xf]
  %v34 = vld [vmem:[%s0 + $0x4] sm:$0xf]
  %v35 = vld [vmem:[%s1] sm:$0xf]
  %v36 = vld [vmem:[%s1 + $0x4] sm:$0xf]
  %v37 = vld [vmem:[%s1 + $0x8] sm:$0xf]
  %v38 = vld [vmem:[%s1 + $0xc] sm:$0xf]
  %v41 = vunpack.c.l.b16 %v33
  %v42 = vunpack.c.l.b16 %v34
  %v43 = vpack.c.b16 %v42, %v41
  %v48 = vunpack.c.l.b16 %v35
  %v49 = vunpack.c.l.b16 %v36
  %v50 = vunpack.c.l.b16 %v37
  %v51 = vunpack.c.l.b16 %v38
  %v52 = vpack.c.b16 %v49, %v48
  %v53 = vpack.c.b16 %v51, %v50
  %vm56 = vcmask 261120
  %v58 = vsel %vm56, %v43, 0
  %60 = vmatpush.bf16.msra.mxu0 0
  %61 = vmatpush.bf16.msra.mxu0 0
  %62 = vmatpush.bf16.msra.mxu0 0
  %63 = vmatpush.bf16.msra.mxu0 0
  %64 = vmatpush.bf16.msra.mxu0 0
  %65 = vmatpush.bf16.msra.mxu0 0
  %66 = vmatpush.bf16.msra.mxu0 %v53
  %67 = vmatpush.bf16.msra.mxu0 %v52
  %68 = vmatmul.bf16.gmra.mxu0 %v58
  %v69 = vpop.f32.mrf.mxu0
  %v70 = vadd.f32 0.0, %v69
  %v71 = vpop.f32.mrf.mxu0
  %v72 = vadd.f32 0.0, %v71
  %73 = vdwg.mxu0
  %v74 = vadd.f32 %v31, %v70
  %v75 = vadd.f32 %v32, %v72
  %76 = vst.msk [vmem:[#allocation2] sm:$0xff] %vm56, %v74
  %77 = vst.msk [vmem:[#allocation2 + $0x8] sm:$0xff] %vm56, %v75
  // Predicated region
  $region30: #{decoder_layer.11} parent=0 // pred_check
    %p78 = pneg %p24
  $region31: #{decoder_layer.11} parent=0 // pred_check_branch
    %80 = sbr.rel (%p78) target = $region33
  $region32: #{decoder_layer.11} parent=0 // pred_region
    %v81 = vld [vmem:[#allocation2] sm:$0xff]
    %v82 = vld [vmem:[#allocation2 + $0x8] sm:$0xff]
    %v83 = vld [vmem:[%s2] sm:$0x1]
    %v85 = vperm.slane %v83, 0
    %v87 = vadd.f32 %v81, %v85
    %v88 = vadd.f32 %v82, %v85
    %v89 = vld [vmem:[%s3] sm:$0xf]
    %v90 = vld [vmem:[%s3 + $0x4] sm:$0xf]
    %v91 = vunpack.c.l.bf16 %v89
    %v92 = vunpack.c.l.bf16 %v90
    %v93 = vadd.f32 %v87, %v91
    %v94 = vadd.f32 %v88, %v92
    %v95 = vsel %vm56, %v93, 0.0
    %96 = vadd.xlane.f32.xlu0 %v95
    %v97 = vpop.xlane.xlu0 %96
    %v98 = vsel %vm56, %v94, 0.0
    %99 = vadd.xlane.f32.xlu0 %v98
    %v100 = vpop.xlane.xlu0 %99
    %v101 = vrcp.pop 32.0
    %v102 = vmul.f32 32.0, %v101
    %v103 = vsub.f32 1.0, %v102
    %v104 = vmul.f32 %v101, %v103
    %v105 = vadd.f32 %v101, %v104
    %vm106 = vweird.f32 %v101
    %v107 = vsel %vm106, %v101, %v105
    %v108 = vmul.f32 %v97, %v107
    %v109 = vmul.f32 %v100, %v107
    %v110 = vmul.f32 %v93, %v93
    %v111 = vmul.f32 %v94, %v94
    %v112 = vsel %vm56, %v110, 0.0
    %113 = vadd.xlane.f32.xlu0 %v112
    %v114 = vpop.xlane.xlu0 %113
    %v115 = vsel %vm56, %v111, 0.0
    %116 = vadd.xlane.f32.xlu0 %v115
    %v117 = vpop.xlane.xlu0 %116
    %v118 = vmul.f32 %v114, %v107
    %v119 = vmul.f32 %v117, %v107
    %v120 = vmul.f32 %v108, %v108
    %v121 = vmul.f32 %v109, %v109
    %v122 = vsub.f32 %v118, %v120
    %v123 = vsub.f32 %v119, %v121
    %v124 = vmax.f32 %v122, 0.0
    %v125 = vmax.f32 %v123, 0.0
    %v126 = vsub.f32 %v93, %v108
    %v127 = vsub.f32 %v94, %v109
    %v128 = vadd.f32 %v124, 1e-06
    %v129 = vadd.f32 %v125, 1e-06
    %v130 = vrsqrt.pop %v128
    %v131 = vmul.f32 %v130, %v128
    %v132 = vmul.f32 %v131, %v130
    %v133 = vmul.f32 0.5, %v132
    %v134 = vsub.f32 1.5, %v133
    %v135 = vmul.f32 %v130, %v134
    %vm136 = vweird.f32 %v128
    %vm137 = vweird.f32 %v130
    %vm138 = vmor %vm136, %vm137
    %v139 = vsel %vm138, %v130, %v135
    %v140 = vrsqrt.pop %v129
    %v141 = vmul.f32 %v140, %v129
    %v142 = vmul.f32 %v141, %v140
    %v143 = vmul.f32 0.5, %v142
    %v144 = vsub.f32 1.5, %v143
    %v145 = vmul.f32 %v140, %v144
    %vm146 = vweird.f32 %v129
    %vm147 = vweird.f32 %v140
    %vm148 = vmor %vm146, %vm147
    %v149 = vsel %vm148, %v140, %v145
    %v150 = vmul.f32 %v126, %v139
    %v151 = vmul.f32 %v127, %v149
    %v152 = vld [vmem:[%s4] sm:$0x1]
    %v154 = vperm.slane %v152, 0
    %v156 = vmul.f32 %v150, %v154
    %v157 = vmul.f32 %v151, %v154
    %v158 = vld [vmem:[%s5] sm:$0x1]
    %v160 = vperm.slane %v158, 0
    %v162 = vadd.f32 %v156, %v160
    %v163 = vadd.f32 %v157, %v160
    %v164 = vpack.c.bf16 %v162, %v162
    %v165 = vpack.c.bf16 %v163, %v163
    %vm166 = vcmask 257024
    %167 = vst.msk [vmem:[%s6] sm:$0xf] %vm166, %v164
    %168 = vst.msk [vmem:[%s6 + $0x4] sm:$0xf] %vm166, %v165
  $region33: #{decoder_layer.11} parent=0 // pred_fallthru
    _
  // Predicated region
  $region34: #{decoder_layer.11} parent=0 // pred_check
    _
  $region35: #{decoder_layer.11} parent=0 // pred_check_branch
    %170 = sbr.rel (0) target = $region37
  $region36: #{decoder_layer.11} parent=0 // pred_region
    _
  $region37: #{decoder_layer.11} parent=0 // pred_fallthru
    _
  // Predicated region
  $region38: #{decoder_layer.11} parent=0 // pred_check
    _
  $region39: #{decoder_layer.11} parent=0 // pred_check_branch
    %172 = sbr.rel (0) target = $region41
  $region40: #{decoder_layer.11} parent=0 // pred_region
    _
  $region41: #{decoder_layer.11} parent=0 // pred_fallthru
    _

// kernel: decoder_layer.13
$region0: #{decoder_layer.13}
  #allocation0 [shape = 'u32[]', space=smem, size = 0x4, offset = 0x4, fixed_abs, tag = 'smem constant byte address 0x4 - core index']
  #allocation1 [shape = 'u32[72,128]{1,0:T(1,128)}', space=vmem, size = 0x9000, scoped, tag = 'internal scratch']
  #allocation2 [shape = 'f32[20,64]{1,0:T(8,128)}', space=vmem, size = 0x3000, scoped, tag = 'scratch operand']
  %s0 = inlined_call_operand.vmem [shape: bf16[20,32], index: 0, kind: input, shape index: {}]
  %s1 = inlined_call_operand.vmem [shape: bf16[32,64], index: 1, kind: input, shape index: {}]
  %s2 = inlined_call_operand.vmem [shape: f32[1,64], index: 2, kind: input, shape index: {}]
  %s3 = inlined_call_operand.vmem [shape: bf16[20,64], index: 3, kind: output, shape index: {}]
  %s4 = sld [smem:[#allocation0]]
  $region30: #{decoder_layer.13} parent=0
    _
  %s6 = ssub.s32 1, %s4
  %s7 = scalar_select 0, %s6, %s4
  // Predicated region
  $region2: #{decoder_layer.13} parent=0 // pred_check
    _
  $region3: #{decoder_layer.13} parent=0 // pred_check_branch
    %9 = sbr.rel (0) target = $region5
  $region4: #{decoder_layer.13} parent=0 // pred_region
    _
  $region5: #{decoder_layer.13} parent=0 // pred_fallthru
    _
  // Predicated region
  $region6: #{decoder_layer.13} parent=0 // pred_check
    _
  $region7: #{decoder_layer.13} parent=0 // pred_check_branch
    %11 = sbr.rel (0) target = $region9
  $region8: #{decoder_layer.13} parent=0 // pred_region
    _
  $region9: #{decoder_layer.13} parent=0 // pred_fallthru
    _
  // Predicated region
  $region10: #{decoder_layer.13} parent=0 // pred_check
    _
  $region11: #{decoder_layer.13} parent=0 // pred_check_branch
    %13 = sbr.rel (0) target = $region13
  $region12: #{decoder_layer.13} parent=0 // pred_region
    _
  $region13: #{decoder_layer.13} parent=0 // pred_fallthru
    _
  %p15 = scmp.eq.s32.totalorder 0, 0
  // Predicated region
  $region14: #{decoder_layer.13} parent=0 // pred_check
    %p16 = pneg %p15
  $region15: #{decoder_layer.13} parent=0 // pred_check_branch
    %18 = sbr.rel (%p16) target = $region17
  $region16: #{decoder_layer.13} parent=0 // pred_region
    %vm19 = vcmask 523264
    %20 = vst.msk [vmem:[#allocation2] sm:$0xff] %vm19, 0.0
    %21 = vst.msk [vmem:[#allocation2 + $0x8] sm:$0xff] %vm19, 0.0
    %vm22 = vcmask 519168
    %23 = vst.msk [vmem:[#allocation2 + $0x10] sm:$0xf] %vm22, 0.0
  $region17: #{decoder_layer.13} parent=0 // pred_fallthru
    _
  %v24 = vld [vmem:[#allocation2] sm:$0xff]
  %v25 = vld [vmem:[#allocation2 + $0x8] sm:$0xff]
  %v26 = vld [vmem:[#allocation2 + $0x10] sm:$0xf]
  %v27 = vld [vmem:[%s0] sm:$0xf]
  %v28 = vld [vmem:[%s0 + $0x4] sm:$0xf]
  %v29 = vld [vmem:[%s0 + $0x8] sm:$0x3]
  %v30 = vld [vmem:[%s1] sm:$0xf]
  %v31 = vld [vmem:[%s1 + $0x4] sm:$0xf]
  %v32 = vld [vmem:[%s1 + $0x8] sm:$0xf]
  %v33 = vld [vmem:[%s1 + $0xc] sm:$0xf]
  %v37 = vunpack.c.l.b16 %v27
  %v38 = vunpack.c.l.b16 %v28
  %v39 = vunpack.c.l.b16 %v29
  %v40 = vpack.c.b16 %v38, %v37
  %v41 = vpack.c.b16 %v39, %v39
  %v46 = vunpack.c.l.b16 %v30
  %v47 = vunpack.c.l.b16 %v31
  %v48 = vunpack.c.l.b16 %v32
  %v49 = vunpack.c.l.b16 %v33
  %v50 = vpack.c.b16 %v47, %v46
  %v51 = vpack.c.b16 %v49, %v48
  %vm54 = vcmask 261120
  %v56 = vsel %vm54, %v40, 0
  %v59 = vsel %vm54, %v41, 0
  %61 = vmatpush.bf16.msra.mxu0 0
  %62 = vmatpush.bf16.msra.mxu0 0
  %63 = vmatpush.bf16.msra.mxu0 0
  %64 = vmatpush.bf16.msra.mxu0 0
  %65 = vmatpush.bf16.msra.mxu0 0
  %66 = vmatpush.bf16.msra.mxu0 0
  %67 = vmatpush.bf16.msra.mxu0 %v51
  %68 = vmatpush.bf16.msra.mxu0 %v50
  %69 = vmatmul.bf16.gmra.mxu0 %v56
  %v70 = vpop.f32.mrf.mxu0
  %v71 = vadd.f32 0.0, %v70
  %v72 = vpop.f32.mrf.mxu0
  %v73 = vadd.f32 0.0, %v72
  %74 = vmatmul.bf16.gmra.mxu0 %v59
  %v75 = vpop.f32.mrf.mxu0
  %v76 = vadd.f32 0.0, %v75
  %v77 = vpop.f32.mrf.mxu0
  %78 = vdwg.mxu0
  %v79 = vadd.f32 %v24, %v71
  %v80 = vadd.f32 %v25, %v73
  %v81 = vadd.f32 %v26, %v76
  %vm82 = vcmask 523264
  %83 = vst.msk [vmem:[#allocation2] sm:$0xff] %vm82, %v79
  %84 = vst.msk [vmem:[#allocation2 + $0x8] sm:$0xff] %vm82, %v80
  %vm85 = vcmask 519168
  %86 = vst.msk [vmem:[#allocation2 + $0x10] sm:$0xf] %vm85, %v81
  // Predicated region
  $region18: #{decoder_layer.13} parent=0 // pred_check
    %p87 = pneg %p15
  $region19: #{decoder_layer.13} parent=0 // pred_check_branch
    %89 = sbr.rel (%p87) target = $region21
  $region20: #{decoder_layer.13} parent=0 // pred_region
    %v90 = vld [vmem:[#allocation2] sm:$0xff]
    %v91 = vld [vmem:[#allocation2 + $0x8] sm:$0xff]
    %v92 = vld [vmem:[#allocation2 + $0x10] sm:$0xf]
    %v93 = vld [vmem:[%s2] sm:$0x1]
    %v95 = vperm.slane %v93, 0
    %v97 = vadd.f32 %v90, %v95
    %v98 = vadd.f32 %v91, %v95
    %v99 = vadd.f32 %v92, %v95
    %v100 = vpack.c.bf16 %v97, %v97
    %v101 = vpack.c.bf16 %v98, %v98
    %v102 = vpack.c.bf16 %v99, %v99
    %103 = vst.msk [vmem:[%s3] sm:$0xf] %vm85, %v100
    %104 = vst.msk [vmem:[%s3 + $0x4] sm:$0xf] %vm85, %v101
    %vm105 = vcmask 517120
    %106 = vst.msk [vmem:[%s3 + $0x8] sm:$0x3] %vm105, %v102
  $region21: #{decoder_layer.13} parent=0 // pred_fallthru
    _
  // Predicated region
  $region22: #{decoder_layer.13} parent=0 // pred_check
    _
  $region23: #{decoder_layer.13} parent=0 // pred_check_branch
    %108 = sbr.rel (0) target = $region25
  $region24: #{decoder_layer.13} parent=0 // pred_region
    _
  $region25: #{decoder_layer.13} parent=0 // pred_fallthru
    _
  // Predicated region
  $region26: #{decoder_layer.13} parent=0 // pred_check
    _
  $region27: #{decoder_layer.13} parent=0 // pred_check_branch
    %110 = sbr.rel (0) target = $region29
  $region28: #{decoder_layer.13} parent=0 // pred_region
    _
  $region29: #{decoder_layer.13} parent=0 // pred_fallthru
    _

// kernel: decoder_layer.16
$region0: #{decoder_layer.16}
  #allocation0 [shape = 'u32[]', space=smem, size = 0x4, offset = 0x4, fixed_abs, tag = 'smem constant byte address 0x4 - core index']
  #allocation1 [shape = 'u32[72,128]{1,0:T(1,128)}', space=vmem, size = 0x9000, scoped, tag = 'internal scratch']
  #allocation2 [shape = 'f32[16,64]{1,0:T(8,128)}', space=vmem, size = 0x2000, scoped, tag = 'scratch operand']
  %s0 = inlined_call_operand.vmem [shape: bf16[16,32], index: 0, kind: input, shape index: {}]
  %s1 = inlined_call_operand.vmem [shape: bf16[32,64], index: 1, kind: input, shape index: {}]
  %s2 = inlined_call_operand.vmem [shape: f32[1,64], index: 2, kind: input, shape index: {}]
  %s3 = inlined_call_operand.vmem [shape: bf16[16,64], index: 3, kind: output, shape index: {}]
  %s4 = sld [smem:[#allocation0]]
  $region30: #{decoder_layer.16} parent=0
    _
  %s6 = ssub.s32 1, %s4
  %s7 = scalar_select 0, %s6, %s4
  // Predicated region
  $region2: #{decoder_layer.16} parent=0 // pred_check
    _
  $region3: #{decoder_layer.16} parent=0 // pred_check_branch
    %9 = sbr.rel (0) target = $region5
  $region4: #{decoder_layer.16} parent=0 // pred_region
    _
  $region5: #{decoder_layer.16} parent=0 // pred_fallthru
    _
  // Predicated region
  $region6: #{decoder_layer.16} parent=0 // pred_check
    _
  $region7: #{decoder_layer.16} parent=0 // pred_check_branch
    %11 = sbr.rel (0) target = $region9
  $region8: #{decoder_layer.16} parent=0 // pred_region
    _
  $region9: #{decoder_layer.16} parent=0 // pred_fallthru
    _
  // Predicated region
  $region10: #{decoder_layer.16} parent=0 // pred_check
    _
  $region11: #{decoder_layer.16} parent=0 // pred_check_branch
    %13 = sbr.rel (0) target = $region13
  $region12: #{decoder_layer.16} parent=0 // pred_region
    _
  $region13: #{decoder_layer.16} parent=0 // pred_fallthru
    _
  %p15 = scmp.eq.s32.totalorder 0, 0
  // Predicated region
  $region14: #{decoder_layer.16} parent=0 // pred_check
    %p16 = pneg %p15
  $region15: #{decoder_layer.16} parent=0 // pred_check_branch
    %18 = sbr.rel (%p16) target = $region17
  $region16: #{decoder_layer.16} parent=0 // pred_region
    %vm19 = vcmask 523264
    %20 = vst.msk [vmem:[#allocation2] sm:$0xff] %vm19, 0.0
    %21 = vst.msk [vmem:[#allocation2 + $0x8] sm:$0xff] %vm19, 0.0
  $region17: #{decoder_layer.16} parent=0 // pred_fallthru
    _
  %v22 = vld [vmem:[#allocation2] sm:$0xff]
  %v23 = vld [vmem:[#allocation2 + $0x8] sm:$0xff]
  %v24 = vld [vmem:[%s0] sm:$0xf]
  %v25 = vld [vmem:[%s0 + $0x4] sm:$0xf]
  %v26 = vld [vmem:[%s1] sm:$0xf]
  %v27 = vld [vmem:[%s1 + $0x4] sm:$0xf]
  %v28 = vld [vmem:[%s1 + $0x8] sm:$0xf]
  %v29 = vld [vmem:[%s1 + $0xc] sm:$0xf]
  %v32 = vunpack.c.l.b16 %v24
  %v33 = vunpack.c.l.b16 %v25
  %v34 = vpack.c.b16 %v33, %v32
  %v39 = vunpack.c.l.b16 %v26
  %v40 = vunpack.c.l.b16 %v27
  %v41 = vunpack.c.l.b16 %v28
  %v42 = vunpack.c.l.b16 %v29
  %v43 = vpack.c.b16 %v40, %v39
  %v44 = vpack.c.b16 %v42, %v41
  %vm47 = vcmask 261120
  %v49 = vsel %vm47, %v34, 0
  %51 = vmatpush.bf16.msra.mxu0 0
  %52 = vmatpush.bf16.msra.mxu0 0
  %53 = vmatpush.bf16.msra.mxu0 0
  %54 = vmatpush.bf16.msra.mxu0 0
  %55 = vmatpush.bf16.msra.mxu0 0
  %56 = vmatpush.bf16.msra.mxu0 0
  %57 = vmatpush.bf16.msra.mxu0 %v44
  %58 = vmatpush.bf16.msra.mxu0 %v43
  %59 = vmatmul.bf16.gmra.mxu0 %v49
  %v60 = vpop.f32.mrf.mxu0
  %v61 = vadd.f32 0.0, %v60
  %v62 = vpop.f32.mrf.mxu0
  %v63 = vadd.f32 0.0, %v62
  %64 = vdwg.mxu0
  %v65 = vadd.f32 %v22, %v61
  %v66 = vadd.f32 %v23, %v63
  %vm67 = vcmask 523264
  %68 = vst.msk [vmem:[#allocation2] sm:$0xff] %vm67, %v65
  %69 = vst.msk [vmem:[#allocation2 + $0x8] sm:$0xff] %vm67, %v66
  // Predicated region
  $region18: #{decoder_layer.16} parent=0 // pred_check
    %p70 = pneg %p15
  $region19: #{decoder_layer.16} parent=0 // pred_check_branch
    %72 = sbr.rel (%p70) target = $region21
  $region20: #{decoder_layer.16} parent=0 // pred_region
    %v73 = vld [vmem:[#allocation2] sm:$0xff]
    %v74 = vld [vmem:[#allocation2 + $0x8] sm:$0xff]
    %v75 = vld [vmem:[%s2] sm:$0x1]
    %v77 = vperm.slane %v75, 0
    %v79 = vadd.f32 %v73, %v77
    %v80 = vadd.f32 %v74, %v77
    %v81 = vmax.f32 %v79, 0.0
    %v82 = vmax.f32 %v80, 0.0
    %v83 = vpack.c.bf16 %v81, %v81
    %v84 = vpack.c.bf16 %v82, %v82
    %vm85 = vcmask 519168
    %86 = vst.msk [vmem:[%s3] sm:$0xf] %vm85, %v83
    %87 = vst.msk [vmem:[%s3 + $0x4] sm:$0xf] %vm85, %v84
  $region21: #{decoder_layer.16} parent=0 // pred_fallthru
    _
  // Predicated region
  $region22: #{decoder_layer.16} parent=0 // pred_check
    _
  $region23: #{decoder_layer.16} parent=0 // pred_check_branch
    %89 = sbr.rel (0) target = $region25
  $region24: #{decoder_layer.16} parent=0 // pred_region
    _
  $region25: #{decoder_layer.16} parent=0 // pred_fallthru
    _
  // Predicated region
  $region26: #{decoder_layer.16} parent=0 // pred_check
    _
  $region27: #{decoder_layer.16} parent=0 // pred_check_branch
    %91 = sbr.rel (0) target = $region29
  $region28: #{decoder_layer.16} parent=0 // pred_region
    _
  $region29: #{decoder_layer.16} parent=0 // pred_fallthru
    _

// kernel: decoder_layer.17
$region0: #{decoder_layer.17}
  #allocation0 [shape = 'u32[]', space=smem, size = 0x4, offset = 0x4, fixed_abs, tag = 'smem constant byte address 0x4 - core index']
  #allocation1 [shape = 'u32[72,128]{1,0:T(1,128)}', space=vmem, size = 0x9000, scoped, tag = 'internal scratch']
  #allocation2 [shape = 'f32[16,32]{1,0:T(8,128)}', space=vmem, size = 0x2000, scoped, tag = 'scratch operand']
  %s0 = inlined_call_operand.vmem [shape: bf16[16,64], index: 0, kind: input, shape index: {}]
  %s1 = inlined_call_operand.vmem [shape: bf16[64,32], index: 1, kind: input, shape index: {}]
  %s2 = inlined_call_operand.vmem [shape: f32[1,32], index: 2, kind: input, shape index: {}]
  %s3 = inlined_call_operand.vmem [shape: bf16[16,32], index: 3, kind: input, shape index: {}]
  %s4 = inlined_call_operand.vmem [shape: f32[1,32], index: 4, kind: input, shape index: {}]
  %s5 = inlined_call_operand.vmem [shape: f32[1,32], index: 5, kind: input, shape index: {}]
  %s6 = inlined_call_operand.hbm [shape: bf16[16,32], index: 6, kind: output, shape index: {}]
  %s7 = sld [smem:[#allocation0]]
  $region42: #{decoder_layer.17} parent=0
    _
  %s9 = ssub.s32 1, %s7
  %s10 = scalar_select 0, %s9, %s7
  $region1: #{decoder_layer.17} parent=0
    #allocation3 [shape = 'u8[4096]{0}', space=vmem, size = 0x1000, scoped, tag = 'output window, operand 0, single buffered']
    #allocation4 [shape = 's32[1]{0}', space=sflag, size = 0x4, scoped, tag = 'scoped memory for decoder_layer.17']
    %11 = vsyncpa [#allocation4], 0
    // Predicated region
    $region2: #{decoder_layer.17} parent=1 // pred_check
      _
    $region3: #{decoder_layer.17} parent=1 // pred_check_branch
      %13 = sbr.rel (0) target = $region5
    $region4: #{decoder_layer.17} parent=1 // pred_region
      _
    $region5: #{decoder_layer.17} parent=1 // pred_fallthru
      _
    // Predicated region
    $region6: #{decoder_layer.17} parent=1 // pred_check
      _
    $region7: #{decoder_layer.17} parent=1 // pred_check_branch
      %15 = sbr.rel (0) target = $region9
    $region8: #{decoder_layer.17} parent=1 // pred_region
      _
    $region9: #{decoder_layer.17} parent=1 // pred_fallthru
      _
    // Predicated region
    $region10: #{decoder_layer.17} parent=1 // pred_check
      _
    $region11: #{decoder_layer.17} parent=1 // pred_check_branch
      %17 = sbr.rel (0) target = $region13
    $region12: #{decoder_layer.17} parent=1 // pred_region
      _
    $region13: #{decoder_layer.17} parent=1 // pred_fallthru
      _
    // Predicated region
    $region14: #{decoder_layer.17} parent=1 // pred_check
      _
    $region15: #{decoder_layer.17} parent=1 // pred_check_branch
      %19 = sbr.rel (0) target = $region17
    $region16: #{decoder_layer.17} parent=1 // pred_region
      _
    $region17: #{decoder_layer.17} parent=1 // pred_fallthru
      _
    // Predicated region
    $region18: #{decoder_layer.17} parent=1 // pred_check
      _
    $region19: #{decoder_layer.17} parent=1 // pred_check_branch
      %21 = sbr.rel (0) target = $region21
    $region20: #{decoder_layer.17} parent=1 // pred_region
      _
    $region21: #{decoder_layer.17} parent=1 // pred_fallthru
      _
    // Predicated region
    $region22: #{decoder_layer.17} parent=1 // pred_check
      _
    $region23: #{decoder_layer.17} parent=1 // pred_check_branch
      %23 = sbr.rel (0) target = $region25
    $region24: #{decoder_layer.17} parent=1 // pred_region
      _
    $region25: #{decoder_layer.17} parent=1 // pred_fallthru
      _
    %p25 = scmp.eq.s32.totalorder 0, 0
    // Predicated region
    $region26: #{decoder_layer.17} parent=1 // pred_check
      %p26 = pneg %p25
    $region27: #{decoder_layer.17} parent=1 // pred_check_branch
      %28 = sbr.rel (%p26) target = $region29
    $region28: #{decoder_layer.17} parent=1 // pred_region
      %vm29 = vcmask 261120
      %30 = vst.msk [vmem:[#allocation2] sm:$0xff] %vm29, 0.0
      %31 = vst.msk [vmem:[#allocation2 + $0x8] sm:$0xff] %vm29, 0.0
    $region29: #{decoder_layer.17} parent=1 // pred_fallthru
      _
    %v32 = vld [vmem:[#allocation2] sm:$0xff]
    %v33 = vld [vmem:[#allocation2 + $0x8] sm:$0xff]
    %v34 = vld [vmem:[%s0] sm:$0xf]
    %v35 = vld [vmem:[%s0 + $0x4] sm:$0xf]
    %v36 = vld [vmem:[%s1] sm:$0xf]
    %v37 = vld [vmem:[%s1 + $0x4] sm:$0xf]
    %v38 = vld [vmem:[%s1 + $0x8] sm:$0xf]
    %v39 = vld [vmem:[%s1 + $0xc] sm:$0xf]
    %v40 = vld [vmem:[%s1 + $0x10] sm:$0xf]
    %v41 = vld [vmem:[%s1 + $0x14] sm:$0xf]
    %v42 = vld [vmem:[%s1 + $0x18] sm:$0xf]
    %v43 = vld [vmem:[%s1 + $0x1c] sm:$0xf]
    %v46 = vunpack.c.l.b16 %v34
    %v47 = vunpack.c.l.b16 %v35
    %v48 = vpack.c.b16 %v47, %v46
    %v57 = vunpack.c.l.b16 %v36
    %v58 = vunpack.c.l.b16 %v37
    %v59 = vunpack.c.l.b16 %v38
    %v60 = vunpack.c.l.b16 %v39
    %v61 = vunpack.c.l.b16 %v40
    %v62 = vunpack.c.l.b16 %v41
    %v63 = vunpack.c.l.b16 %v42
    %v64 = vunpack.c.l.b16 %v43
    %v65 = vpack.c.b16 %v58, %v57
    %v66 = vpack.c.b16 %v60, %v59
    %v67 = vpack.c.b16 %v62, %v61
    %v68 = vpack.c.b16 %v64, %v63
    %vm73 = vcmask 523264
    %v75 = vsel %vm73, %v48, 0
    %77 = vmatpush.bf16.msra.mxu0 0
    %78 = vmatpush.bf16.msra.mxu0 0
    %79 = vmatpush.bf16.msra.mxu0 0
    %80 = vmatpush.bf16.msra.mxu0 0
    %81 = vmatpush.bf16.msra.mxu0 %v68
    %82 = vmatpush.bf16.msra.mxu0 %v67
    %83 = vmatpush.bf16.msra.mxu0 %v66
    %84 = vmatpush.bf16.msra.mxu0 %v65
    %85 = vmatmul.bf16.gmra.mxu0 %v75
    %v86 = vpop.f32.mrf.mxu0
    %v87 = vadd.f32 0.0, %v86
    %v88 = vpop.f32.mrf.mxu0
    %v89 = vadd.f32 0.0, %v88
    %90 = vdwg.mxu0
    %v91 = vadd.f32 %v32, %v87
    %v92 = vadd.f32 %v33, %v89
    %vm93 = vcmask 261120
    %94 = vst.msk [vmem:[#allocation2] sm:$0xff] %vm93, %v91
    %95 = vst.msk [vmem:[#allocation2 + $0x8] sm:$0xff] %vm93, %v92
    // Predicated region
    $region30: #{decoder_layer.17} parent=1 // pred_check
      %p96 = pneg %p25
    $region31: #{decoder_layer.17} parent=1 // pred_check_branch
      %98 = sbr.rel (%p96) target = $region33
    $region32: #{decoder_layer.17} parent=1 // pred_region
      %v99 = vld [vmem:[#allocation2] sm:$0xff]
      %v100 = vld [vmem:[#allocation2 + $0x8] sm:$0xff]
      %v101 = vld [vmem:[%s2] sm:$0x1]
      %v103 = vperm.slane %v101, 0
      %v105 = vadd.f32 %v99, %v103
      %v106 = vadd.f32 %v100, %v103
      %v107 = vld [vmem:[%s3] sm:$0xf]
      %v108 = vld [vmem:[%s3 + $0x4] sm:$0xf]
      %v109 = vunpack.c.l.bf16 %v107
      %v110 = vunpack.c.l.bf16 %v108
      %v111 = vadd.f32 %v105, %v109
      %v112 = vadd.f32 %v106, %v110
      %v113 = vsel %vm93, %v111, 0.0
      %114 = vadd.xlane.f32.xlu0 %v113
      %v115 = vpop.xlane.xlu0 %114
      %v116 = vsel %vm93, %v112, 0.0
      %117 = vadd.xlane.f32.xlu0 %v116
      %v118 = vpop.xlane.xlu0 %117
      %v119 = vrcp.pop 32.0
      %v120 = vmul.f32 32.0, %v119
      %v121 = vsub.f32 1.0, %v120
      %v122 = vmul.f32 %v119, %v121
      %v123 = vadd.f32 %v119, %v122
      %vm124 = vweird.f32 %v119
      %v125 = vsel %vm124, %v119, %v123
      %v126 = vmul.f32 %v115, %v125
      %v127 = vmul.f32 %v118, %v125
      %v128 = vmul.f32 %v111, %v111
      %v129 = vmul.f32 %v112, %v112
      %v130 = vsel %vm93, %v128, 0.0
      %131 = vadd.xlane.f32.xlu0 %v130
      %v132 = vpop.xlane.xlu0 %131
      %v133 = vsel %vm93, %v129, 0.0
      %134 = vadd.xlane.f32.xlu0 %v133
      %v135 = vpop.xlane.xlu0 %134
      %v136 = vmul.f32 %v132, %v125
      %v137 = vmul.f32 %v135, %v125
      %v138 = vmul.f32 %v126, %v126
      %v139 = vmul.f32 %v127, %v127
      %v140 = vsub.f32 %v136, %v138
      %v141 = vsub.f32 %v137, %v139
      %v142 = vmax.f32 %v140, 0.0
      %v143 = vmax.f32 %v141, 0.0
      %v144 = vsub.f32 %v111, %v126
      %v145 = vsub.f32 %v112, %v127
      %v146 = vadd.f32 %v142, 1e-06
      %v147 = vadd.f32 %v143, 1e-06
      %v148 = vrsqrt.pop %v146
      %v149 = vmul.f32 %v148, %v146
      %v150 = vmul.f32 %v149, %v148
      %v151 = vmul.f32 0.5, %v150
      %v152 = vsub.f32 1.5, %v151
      %v153 = vmul.f32 %v148, %v152
      %vm154 = vweird.f32 %v146
      %vm155 = vweird.f32 %v148
      %vm156 = vmor %vm154, %vm155
      %v157 = vsel %vm156, %v148, %v153
      %v158 = vrsqrt.pop %v147
      %v159 = vmul.f32 %v158, %v147
      %v160 = vmul.f32 %v159, %v158
      %v161 = vmul.f32 0.5, %v160
      %v162 = vsub.f32 1.5, %v161
      %v163 = vmul.f32 %v158, %v162
      %vm164 = vweird.f32 %v147
      %vm165 = vweird.f32 %v158
      %vm166 = vmor %vm164, %vm165
      %v167 = vsel %vm166, %v158, %v163
      %v168 = vmul.f32 %v144, %v157
      %v169 = vmul.f32 %v145, %v167
      %v170 = vld [vmem:[%s4] sm:$0x1]
      %v172 = vperm.slane %v170, 0
      %v174 = vmul.f32 %v168, %v172
      %v175 = vmul.f32 %v169, %v172
      %v176 = vld [vmem:[%s5] sm:$0x1]
      %v178 = vperm.slane %v176, 0
      %v180 = vadd.f32 %v174, %v178
      %v181 = vadd.f32 %v175, %v178
      %v182 = vpack.c.bf16 %v180, %v180
      %v183 = vpack.c.bf16 %v181, %v181
      %vm184 = vcmask 257024
      %185 = vst.msk [vmem:[#allocation3] sm:$0xf] %vm184, %v182
      %186 = vst.msk [vmem:[#allocation3 + $0x4] sm:$0xf] %vm184, %v183
    $region33: #{decoder_layer.17} parent=1 // pred_fallthru
      _
    // Predicated region
    $region34: #{decoder_layer.17} parent=1 // pred_check
      _
    $region35: #{decoder_layer.17} parent=1 // pred_check_branch
      %188 = sbr.rel (0) target = $region37
    $region36: #{decoder_layer.17} parent=1 // pred_region
      %190 = vsyncadd [#allocation4], 0
      %s191 = sshll.u32 [#allocation3], 4
      %s192 = int_to_ptr.vmem [resolvable:$true] %s191
      %s193 = sshll.u32 %s6, 4
      %s194 = int_to_ptr.hbm [resolvable:$true] %s193
      %199 = dma.vmem_to_hbm [thread:$0]  %s192, 128, %s194, [#allocation4], 64, 64, 4
    $region37: #{decoder_layer.17} parent=1 // pred_fallthru
      _
    // Predicated region
    $region38: #{decoder_layer.17} parent=1 // pred_check
      _
    $region39: #{decoder_layer.17} parent=1 // pred_check_branch
      %201 = sbr.rel (0) target = $region41
    $region40: #{decoder_layer.17} parent=1 // pred_region
      %203 = dma.done [#allocation4], 128
    $region41: #{decoder_layer.17} parent=1 // pred_fallthru
      _
    %204 = vsyncpa [#allocation4], 1

// kernel: decoder_layer.14
$region0: #{decoder_layer.14}
  #allocation0 [shape = 'u32[]', space=smem, size = 0x4, offset = 0x4, fixed_abs, tag = 'smem constant byte address 0x4 - core index']
  #allocation1 [shape = 'u32[72,128]{1,0:T(1,128)}', space=vmem, size = 0x9000, scoped, tag = 'internal scratch']
  #allocation2 [shape = 'f32[4,8,1]{2,1,0:T(8,128)}', space=vmem, size = 0x4000, scoped, tag = 'scratch operand']
  #allocation3 [shape = 'f32[4,8,1]{2,1,0:T(8,128)}', space=vmem, size = 0x4000, scoped, tag = 'scratch operand']
  #allocation4 [shape = 'f32[4,8,8]{2,1,0:T(8,128)}', space=vmem, size = 0x4000, scoped, tag = 'scratch operand']
  %s0 = inlined_call_operand.vmem [shape: bf16[2,4,8,8], index: 0, kind: input, shape index: {}]
  %s1 = inlined_call_operand.vmem [shape: bf16[2,4,10,8], index: 1, kind: input, shape index: {}]
  %s2 = inlined_call_operand.vmem [shape: bf16[2,4,10,8], index: 2, kind: input, shape index: {}]
  %s3 = inlined_call_operand.vmem [shape: bf16[2,8,10], index: 3, kind: input, shape index: {}]
  %s4 = inlined_call_operand.vmem [shape: bf16[2,4,8,8], index: 4, kind: output, shape index: {}]
  %s5 = sld [smem:[#allocation0]]
  $region57: #{decoder_layer.14} parent=0
    _
  %s7 = ssub.s32 1, %s5
  %s8 = scalar_select 0, %s7, %s5
  loop: start=0, step=1, limit=4
  $region2: #{decoder_layer.14} parent=0 // loop_pre_header
    _
  $region3: #{decoder_layer.14} parent=0 // loop_header
    %s10 = sphi 0, %s14
    %p11 = scmp.ge.s32.totalorder %s10, 4
    %s17 = sphi 0, %s36
    %s18 = sphi 0, %s32
    %s19 = sphi 0, %s28
    %s20 = sphi 0, %s17
    %s21 = sphi 0, %s18
    %s22 = sphi 0, %s19
    %s23 = sphi 0, %s20
    %s24 = sphi 0, %s21
    %s25 = sphi 0, %s22
    %s41 = sphi 0, %s43
    %s44 = sphi 0, %s41
    %s45 = sphi 0, %s44
    %s61 = sphi 0, %s45
    %s69 = sphi 0, %s71
    %s72 = sphi 0, %s69
    %s73 = sphi 0, %s72
    %s89 = sphi 0, %s73
    %s97 = sphi 0, %s99
    %s100 = sphi 0, %s97
    %s101 = sphi 0, %s100
    %s117 = sphi 0, %s101
    %s127 = sphi 0, %s129
    %s130 = sphi 0, %s127
    %s131 = sphi 0, %s130
    %s147 = sphi 0, %s131
    %s155 = sphi 0, %s157
    %s158 = sphi 0, %s155
    %s159 = sphi 0, %s158
    %s175 = sphi 0, %s159
  $region4: #{decoder_layer.14} parent=0 // loop_header_branch
    %13 = sbr.rel (%p11) target = $region8
  $region5: #{decoder_layer.14} parent=0 // loop_body
    %s15 = ssub.s32 %s10, 1
    %s16 = ssub.s32 %s10, 2
    %s26 = sadd.s32 1, %s19
    %p27 = scmp.ge.s32.totalorder %s26, 1
    %s28 = scalar_select %p27, 0, %s26
    %s29 = sadd.s32 1, %s18
    %s30 = scalar_select %p27, %s29, %s18
    %p31 = scmp.ge.s32.totalorder %s30, 1
    %s32 = scalar_select %p31, 0, %s30
    %s33 = sadd.s32 1, %s17
    %s34 = scalar_select %p31, %s33, %s17
    %p35 = scmp.ge.s32.totalorder %s34, 2
    %s36 = scalar_select %p35, 0, %s34
    %s37 = ssub.s32 %s17, %s36
    %s38 = ssub.s32 %s18, %s32
    %s39 = sor.u32 %s37, %s38
    %p40 = scmp.eq.s32.totalorder %s39, 0
    %s42 = sadd.s32 %s41, 1
    %s43 = scalar_select %p40, %s41, %s42
    %p46 = pneg %p40
    %p47 = scmp.eq.s32.totalorder %s10, 1
    %p48 = por %p46, %p47
    %p49 = scmp.ne.s32.totalorder %s41, %s44
    %p50 = scmp.eq.s32.totalorder %s10, 0
    %p51 = por %p49, %p50
    %p52 = scmp.ne.s32.totalorder %s41, %s44
    %p53 = scmp.eq.s32.totalorder %s15, 1
    %p54 = por %p52, %p53
    %p55 = scmp.ne.s32.totalorder %s44, %s45
    %p56 = scmp.eq.s32.totalorder %s15, 0
    %p57 = por %p55, %p56
    %p58 = scmp.ne.s32.totalorder %s44, %s45
    %p59 = scmp.eq.s32.totalorder %s16, 1
    %p60 = por %p58, %p59
    %p62 = scmp.ne.s32.totalorder %s45, %s61
    %p63 = scmp.eq.s32.totalorder %s16, 0
    %p64 = por %p62, %p63
    %s65 = ssub.s32 %s17, %s36
    %s66 = ssub.s32 %s19, %s28
    %s67 = sor.u32 %s65, %s66
    %p68 = scmp.eq.s32.totalorder %s67, 0
    %s70 = sadd.s32 %s69, 1
    %s71 = scalar_select %p68, %s69, %s70
    %p74 = pneg %p68
    %p75 = scmp.eq.s32.totalorder %s10, 1
    %p76 = por %p74, %p75
    %p77 = scmp.ne.s32.totalorder %s69, %s72
    %p78 = scmp.eq.s32.totalorder %s10, 0
    %p79 = por %p77, %p78
    %p80 = scmp.ne.s32.totalorder %s69, %s72
    %p81 = scmp.eq.s32.totalorder %s15, 1
    %p82 = por %p80, %p81
    %p83 = scmp.ne.s32.totalorder %s72, %s73
    %p84 = scmp.eq.s32.totalorder %s15, 0
    %p85 = por %p83, %p84
    %p86 = scmp.ne.s32.totalorder %s72, %s73
    %p87 = scmp.eq.s32.totalorder %s16, 1
    %p88 = por %p86, %p87
    %p90 = scmp.ne.s32.totalorder %s73, %s89
    %p91 = scmp.eq.s32.totalorder %s16, 0
    %p92 = por %p90, %p91
    %s93 = ssub.s32 %s17, %s36
    %s94 = ssub.s32 %s19, %s28
    %s95 = sor.u32 %s93, %s94
    %p96 = scmp.eq.s32.totalorder %s95, 0
    %s98 = sadd.s32 %s97, 1
    %s99 = scalar_select %p96, %s97, %s98
    %p102 = pneg %p96
    %p103 = scmp.eq.s32.totalorder %s10, 1
    %p104 = por %p102, %p103
    %p105 = scmp.ne.s32.totalorder %s97, %s100
    %p106 = scmp.eq.s32.totalorder %s10, 0
    %p107 = por %p105, %p106
    %p108 = scmp.ne.s32.totalorder %s97, %s100
    %p109 = scmp.eq.s32.totalorder %s15, 1
    %p110 = por %p108, %p109
    %p111 = scmp.ne.s32.totalorder %s100, %s101
    %p112 = scmp.eq.s32.totalorder %s15, 0
    %p113 = por %p111, %p112
    %p114 = scmp.ne.s32.totalorder %s100, %s101
    %p115 = scmp.eq.s32.totalorder %s16, 1
    %p116 = por %p114, %p115
    %p118 = scmp.ne.s32.totalorder %s101, %s117
    %p119 = scmp.eq.s32.totalorder %s16, 0
    %p120 = por %p118, %p119
    %s121 = ssub.s32 %s17, %s36
    %s122 = ssub.s32 %s18, %s32
    %s123 = sor.u32 %s121, %s122
    %s124 = ssub.s32 %s19, %s28
    %s125 = sor.u32 %s123, %s124
    %p126 = scmp.eq.s32.totalorder %s125, 0
    %s128 = sadd.s32 %s127, 1
    %s129 = scalar_select %p126, %s127, %s128
    %p132 = pneg %p126
    %p133 = scmp.eq.s32.totalorder %s10, 1
    %p134 = por %p132, %p133
    %p135 = scmp.ne.s32.totalorder %s127, %s130
    %p136 = scmp.eq.s32.totalorder %s10, 0
    %p137 = por %p135, %p136
    %p138 = scmp.ne.s32.totalorder %s127, %s130
    %p139 = scmp.eq.s32.totalorder %s15, 1
    %p140 = por %p138, %p139
    %p141 = scmp.ne.s32.totalorder %s130, %s131
    %p142 = scmp.eq.s32.totalorder %s15, 0
    %p143 = por %p141, %p142
    %p144 = scmp.ne.s32.totalorder %s130, %s131
    %p145 = scmp.eq.s32.totalorder %s16, 1
    %p146 = por %p144, %p145
    %p148 = scmp.ne.s32.totalorder %s131, %s147
    %p149 = scmp.eq.s32.totalorder %s16, 0
    %p150 = por %p148, %p149
    %s151 = ssub.s32 %s17, %s36
    %s152 = ssub.s32 %s18, %s32
    %s153 = sor.u32 %s151, %s152
    %p154 = scmp.eq.s32.totalorder %s153, 0
    %s156 = sadd.s32 %s155, 1
    %s157 = scalar_select %p154, %s155, %s156
    %p160 = pneg %p154
    %p161 = scmp.eq.s32.totalorder %s10, 1
    %p162 = por %p160, %p161
    %p163 = scmp.ne.s32.totalorder %s155, %s158
    %p164 = scmp.eq.s32.totalorder %s10, 0
    %p165 = por %p163, %p164
    %p166 = scmp.ne.s32.totalorder %s155, %s158
    %p167 = scmp.eq.s32.totalorder %s15, 1
    %p168 = por %p166, %p167
    %p169 = scmp.ne.s32.totalorder %s158, %s159
    %p170 = scmp.eq.s32.totalorder %s15, 0
    %p171 = por %p169, %p170
    %p172 = scmp.ne.s32.totalorder %s158, %s159
    %p173 = scmp.eq.s32.totalorder %s16, 1
    %p174 = por %p172, %p173
    %p176 = scmp.ne.s32.totalorder %s159, %s175
    %p177 = scmp.eq.s32.totalorder %s16, 0
    %p178 = por %p176, %p177
    %p179 = scmp.le.s32.totalorder 1, %s10
    %p180 = scmp.lt.s32.totalorder %s10, 3
    %p181 = pnand %p179, %p180
    %p182 = pneg %p181
    // Predicated region
    $region9: #{decoder_layer.14} parent=5 // pred_check
      _
    $region10: #{decoder_layer.14} parent=5 // pred_check_branch
      %184 = sbr.rel (%p181) target = $region12
    $region11: #{decoder_layer.14} parent=5 // pred_region
      %s185 = ssub.s32 %s10, 1
    $region12: #{decoder_layer.14} parent=5 // pred_fallthru
      _
    %p186 = scmp.lt.s32.totalorder %s10, 2
    // Predicated region
    $region13: #{decoder_layer.14} parent=5 // pred_check
      %p187 = pneg %p186
    $region14: #{decoder_layer.14} parent=5 // pred_check_branch
      %189 = sbr.rel (%p187) target = $region16
    $region15: #{decoder_layer.14} parent=5 // pred_region
      // Predicated region
      $region17: #{decoder_layer.14} parent=15 // pred_check
        %p190 = pneg %p51
      $region18: #{decoder_layer.14} parent=15 // pred_check_branch
        %192 = sbr.rel (%p190) target = $region20
      $region19: #{decoder_layer.14} parent=15 // pred_region
        %p193 = scmp.lt.s32.totalorder %s17, 1
        %s194 = scalar_select %p193, %s17, 1
        %p195 = scmp.lt.s32.totalorder %s18, 0
        %s196 = scalar_select %p195, %s18, 0
        %s197 = smul.addr %s194, 4
        %s198 = sadd.s32 %s196, %s197
        %s199 = smul.addr %s198, 4
        %s200 = scalar_lea.vmem %s0, %s199
      $region20: #{decoder_layer.14} parent=15 // pred_fallthru
        _
      // Predicated region
      $region21: #{decoder_layer.14} parent=15 // pred_check
        %p201 = pneg %p79
      $region22: #{decoder_layer.14} parent=15 // pred_check_branch
        %203 = sbr.rel (%p201) target = $region24
      $region23: #{decoder_layer.14} parent=15 // pred_region
        %s204 = smul.u32 2, %s19
        %p205 = scmp.lt.s32.totalorder %s17, 1
        %s206 = scalar_select %p205, %s17, 1
        %p207 = scmp.lt.s32.totalorder %s204, 1
        %s208 = scalar_select %p207, %s204, 1
        %s209 = smul.addr %s206, 8
        %s210 = sadd.s32 %s208, %s209
        %s211 = smul.addr %s210, 4
        %s212 = scalar_lea.vmem %s1, %s211
        %s213 = smul.u32 2, %s19
      $region24: #{decoder_layer.14} parent=15 // pred_fallthru
        _
      // Predicated region
      $region25: #{decoder_layer.14} parent=15 // pred_check
        %p214 = pneg %p107
      $region26: #{decoder_layer.14} parent=15 // pred_check_branch
        %216 = sbr.rel (%p214) target = $region28
      $region27: #{decoder_layer.14} parent=15 // pred_region
        %s217 = smul.u32 2, %s19
        %p218 = scmp.lt.s32.totalorder %s17, 1
        %s219 = scalar_select %p218, %s17, 1
        %p220 = scmp.lt.s32.totalorder %s217, 1
        %s221 = scalar_select %p220, %s217, 1
        %s222 = smul.addr %s219, 8
        %s223 = sadd.s32 %s221, %s222
        %s224 = smul.addr %s223, 4
        %s225 = scalar_lea.vmem %s2, %s224
        %s226 = smul.u32 2, %s19
      $region28: #{decoder_layer.14} parent=15 // pred_fallthru
        _
      // Predicated region
      $region29: #{decoder_layer.14} parent=15 // pred_check
        %p227 = pneg %p137
      $region30: #{decoder_layer.14} parent=15 // pred_check_branch
        %229 = sbr.rel (%p227) target = $region32
      $region31: #{decoder_layer.14} parent=15 // pred_region
        %p230 = scmp.lt.s32.totalorder %s17, 1
        %s231 = scalar_select %p230, %s17, 1
        %p232 = scmp.lt.s32.totalorder %s18, 0
        %s233 = scalar_select %p232, %s18, 0
        %p234 = scmp.lt.s32.totalorder %s19, 0
        %s235 = scalar_select %p234, %s19, 0
        %s236 = sadd.s32 %s235, %s233
        %s237 = sadd.s32 %s236, %s231
        %s238 = smul.addr %s237, 4
        %s239 = scalar_lea.vmem %s3, %s238
      $region32: #{decoder_layer.14} parent=15 // pred_fallthru
        _
    $region16: #{decoder_layer.14} parent=5 // pred_fallthru
      _
    %p240 = scmp.le.s32.totalorder 1, %s10
    %p241 = scmp.lt.s32.totalorder %s10, 3
    %p242 = pnand %p240, %p241
    %p243 = pneg %p242
    // Predicated region
    $region33: #{decoder_layer.14} parent=5 // pred_check
      _
    $region34: #{decoder_layer.14} parent=5 // pred_check_branch
      %245 = sbr.rel (%p242) target = $region36
    $region35: #{decoder_layer.14} parent=5 // pred_region
      %s246 = ssub.s32 %s10, 1
      %p247 = scmp.lt.s32.totalorder %s20, 1
      %s248 = scalar_select %p247, %s20, 1
      %p249 = scmp.lt.s32.totalorder %s21, 0
      %s250 = scalar_select %p249, %s21, 0
      %s251 = smul.addr %s248, 4
      %s252 = sadd.s32 %s250, %s251
      %s253 = smul.addr %s252, 4
      %s254 = scalar_lea.vmem %s0, %s253
      %p255 = pneg %p57
      %p256 = pneg %p54
      %s257 = smul.u32 2, %s22
      %p258 = scmp.lt.s32.totalorder %s20, 1
      %s259 = scalar_select %p258, %s20, 1
      %p260 = scmp.lt.s32.totalorder %s257, 1
      %s261 = scalar_select %p260, %s257, 1
      %s262 = smul.addr %s259, 8
      %s263 = sadd.s32 %s261, %s262
      %s264 = smul.addr %s263, 4
      %s265 = scalar_lea.vmem %s1, %s264
      %p266 = pneg %p85
      %p267 = pneg %p82
      %s268 = smul.u32 2, %s22
      %p269 = scmp.lt.s32.totalorder %s20, 1
      %s270 = scalar_select %p269, %s20, 1
      %p271 = scmp.lt.s32.totalorder %s268, 1
      %s272 = scalar_select %p271, %s268, 1
      %s273 = smul.addr %s270, 8
      %s274 = sadd.s32 %s272, %s273
      %s275 = smul.addr %s274, 4
      %s276 = scalar_lea.vmem %s2, %s275
      %p277 = pneg %p113
      %p278 = pneg %p110
      %p279 = scmp.lt.s32.totalorder %s20, 1
      %s280 = scalar_select %p279, %s20, 1
      %p281 = scmp.lt.s32.totalorder %s21, 0
      %s282 = scalar_select %p281, %s21, 0
      %p283 = scmp.lt.s32.totalorder %s22, 0
      %s284 = scalar_select %p283, %s22, 0
      %s285 = sadd.s32 %s284, %s282
      %s286 = sadd.s32 %s285, %s280
      %s287 = smul.addr %s286, 4
      %s288 = scalar_lea.vmem %s3, %s287
      %p289 = pneg %p143
      %p290 = pneg %p140
      %p291 = pneg %p171
      %p292 = pneg %p168
      %p293 = scmp.lt.s32.totalorder %s20, 1
      %s294 = scalar_select %p293, %s20, 1
      %p295 = scmp.lt.s32.totalorder %s21, 0
      %s296 = scalar_select %p295, %s21, 0
      %s297 = smul.addr %s294, 4
      %s298 = sadd.s32 %s296, %s297
      %s299 = smul.addr %s298, 4
      %s300 = scalar_lea.vmem %s4, %s299
      %p301 = scmp.lt.s32.totalorder %s20, 1
      %s302 = scalar_select %p301, %s20, 1
      %p303 = scmp.lt.s32.totalorder %s21, 0
      %s304 = scalar_select %p303, %s21, 0
      %s305 = smul.addr %s302, 4
      %s306 = sadd.s32 %s304, %s305
      %s307 = smul.addr %s306, 4
      %s308 = scalar_lea.vmem %s0, %s307
      %s309 = smul.u32 2, %s22
      %p310 = scmp.lt.s32.totalorder %s20, 1
      %s311 = scalar_select %p310, %s20, 1
      %p312 = scmp.lt.s32.totalorder %s309, 1
      %s313 = scalar_select %p312, %s309, 1
      %s314 = smul.addr %s311, 8
      %s315 = sadd.s32 %s313, %s314
      %s316 = smul.addr %s315, 4
      %s317 = scalar_lea.vmem %s1, %s316
      %s318 = smul.u32 2, %s22
      %s319 = smul.u32 2, %s22
      %p320 = scmp.lt.s32.totalorder %s20, 1
      %s321 = scalar_select %p320, %s20, 1
      %p322 = scmp.lt.s32.totalorder %s319, 1
      %s323 = scalar_select %p322, %s319, 1
      %s324 = smul.addr %s321, 8
      %s325 = sadd.s32 %s323, %s324
      %s326 = smul.addr %s325, 4
      %s327 = scalar_lea.vmem %s2, %s326
      %s328 = smul.u32 2, %s22
      %p329 = scmp.lt.s32.totalorder %s20, 1
      %s330 = scalar_select %p329, %s20, 1
      %p331 = scmp.lt.s32.totalorder %s21, 0
      %s332 = scalar_select %p331, %s21, 0
      %p333 = scmp.lt.s32.totalorder %s22, 0
      %s334 = scalar_select %p333, %s22, 0
      %s335 = sadd.s32 %s334, %s332
      %s336 = sadd.s32 %s335, %s330
      %s337 = smul.addr %s336, 4
      %s338 = scalar_lea.vmem %s3, %s337
      %p339 = scmp.lt.s32.totalorder %s20, 1
      %s340 = scalar_select %p339, %s20, 1
      %p341 = scmp.lt.s32.totalorder %s21, 0
      %s342 = scalar_select %p341, %s21, 0
      %s343 = smul.addr %s340, 4
      %s344 = sadd.s32 %s342, %s343
      %s345 = smul.addr %s344, 4
      %s346 = scalar_lea.vmem %s4, %s345
      %p348 = scmp.eq.s32.totalorder %s22, 0
      // Predicated region
      $region37: #{decoder_layer.14} parent=35 // pred_check
        %p349 = pneg %p348
      $region38: #{decoder_layer.14} parent=35 // pred_check_branch
        %351 = sbr.rel (%p349) target = $region40
      $region39: #{decoder_layer.14} parent=35 // pred_region
        %vm352 = vcmask 7168
        %353 = vst.msk [vmem:[#allocation2] sm:$0xff] %vm352, -inf
        %354 = vst.msk [vmem:[#allocation2 + $0x8] sm:$0xff] %vm352, -inf
        %355 = vst.msk [vmem:[#allocation2 + $0x10] sm:$0xff] %vm352, -inf
        %356 = vst.msk [vmem:[#allocation2 + $0x18] sm:$0xff] %vm352, -inf
        %357 = vst.msk [vmem:[#allocation3] sm:$0xff] %vm352, 0.0
        %358 = vst.msk [vmem:[#allocation3 + $0x8] sm:$0xff] %vm352, 0.0
        %359 = vst.msk [vmem:[#allocation3 + $0x10] sm:$0xff] %vm352, 0.0
        %360 = vst.msk [vmem:[#allocation3 + $0x18] sm:$0xff] %vm352, 0.0
        %vm361 = vcmask 64512
        %362 = vst.msk [vmem:[#allocation4] sm:$0xff] %vm361, 0.0
        %363 = vst.msk [vmem:[#allocation4 + $0x8] sm:$0xff] %vm361, 0.0
        %364 = vst.msk [vmem:[#allocation4 + $0x10] sm:$0xff] %vm361, 0.0
        %365 = vst.msk [vmem:[#allocation4 + $0x18] sm:$0xff] %vm361, 0.0
      $region40: #{decoder_layer.14} parent=35 // pred_fallthru
        _
      %v366 = vld [vmem:[%s308] sm:$0xf]
      %v367 = vld [vmem:[%s308 + $0x4] sm:$0xf]
      %v368 = vld [vmem:[%s308 + $0x8] sm:$0xf]
      %v369 = vld [vmem:[%s308 + $0xc] sm:$0xf]
      %v370 = vld [vmem:[%s317] sm:$0xf]
      %v371 = vld [vmem:[%s317 + $0x4] sm:$0x1]
      %v372 = vld [vmem:[%s317 + $0x8] sm:$0xf]
      %v373 = vld [vmem:[%s317 + $0xc] sm:$0x1]
      %v374 = vld [vmem:[%s317 + $0x10] sm:$0xf]
      %v375 = vld [vmem:[%s317 + $0x14] sm:$0x1]
      %v376 = vld [vmem:[%s317 + $0x18] sm:$0xf]
      %v377 = vld [vmem:[%s317 + $0x1c] sm:$0x1]
      %v378 = vld [vmem:[%s338] sm:$0xf]
      %v379 = vunpack.c.l.bf16 %v378
      %v382 = vunpack.c.l.b16 %v370
      %v383 = vunpack.c.l.b16 %v371
      %v384 = vpack.c.b16 %v383, %v382
      %vm385 = vcmask 64512
      %v387 = vsel %vm385, %v366, 0
      %v390 = vsel %vm385, %v384, 0
      %392 = vmatpush.bf16.xpose.msra.mxu0 0
      %393 = vmatpush.bf16.xpose.msra.mxu0 0
      %394 = vmatpush.bf16.xpose.msra.mxu0 0
      %395 = vmatpush.bf16.xpose.msra.mxu0 0
      %396 = vmatpush.bf16.xpose.msra.mxu0 0
      %397 = vmatpush.bf16.xpose.msra.mxu0 0
      %398 = vmatpush.bf16.xpose.msra.mxu0 0
      %399 = vmatpush.bf16.xpose.msra.mxu0 %v390
      %400 = vmatmul.bf16.gmra.mxu0 %v387
      %v401 = vpop.f32.mrf.mxu0
      %v402 = vadd.f32 %v379, %v401
      %v403 = vpop.f32.mrf.mxu0
      %404 = vdwg.mxu0
      %v407 = vunpack.c.l.b16 %v372
      %v408 = vunpack.c.l.b16 %v373
      %v409 = vpack.c.b16 %v408, %v407
      %v411 = vsel %vm385, %v367, 0
      %v414 = vsel %vm385, %v409, 0
      %416 = vmatpush.bf16.xpose.msra.mxu0 0
      %417 = vmatpush.bf16.xpose.msra.mxu0 0
      %418 = vmatpush.bf16.xpose.msra.mxu0 0
      %419 = vmatpush.bf16.xpose.msra.mxu0 0
      %420 = vmatpush.bf16.xpose.msra.mxu0 0
      %421 = vmatpush.bf16.xpose.msra.mxu0 0
      %422 = vmatpush.bf16.xpose.msra.mxu0 0
      %423 = vmatpush.bf16.xpose.msra.mxu0 %v414
      %424 = vmatmul.bf16.gmra.mxu0 %v411
      %v425 = vpop.f32.mrf.mxu0
      %v426 = vadd.f32 %v379, %v425
      %v427 = vpop.f32.mrf.mxu0
      %428 = vdwg.mxu0
      %v431 = vunpack.c.l.b16 %v374
      %v432 = vunpack.c.l.b16 %v375
      %v433 = vpack.c.b16 %v432, %v431
      %v435 = vsel %vm385, %v368, 0
      %v438 = vsel %vm385, %v433, 0
      %440 = vmatpush.bf16.xpose.msra.mxu0 0
      %441 = vmatpush.bf16.xpose.msra.mxu0 0
      %442 = vmatpush.bf16.xpose.msra.mxu0 0
      %443 = vmatpush.bf16.xpose.msra.mxu0 0
      %444 = vmatpush.bf16.xpose.msra.mxu0 0
      %445 = vmatpush.bf16.xpose.msra.mxu0 0
      %446 = vmatpush.bf16.xpose.msra.mxu0 0
      %447 = vmatpush.bf16.xpose.msra.mxu0 %v438
      %448 = vmatmul.bf16.gmra.mxu0 %v435
      %v449 = vpop.f32.mrf.mxu0
      %v450 = vadd.f32 %v379, %v449
      %v451 = vpop.f32.mrf.mxu0
      %452 = vdwg.mxu0
      %v455 = vunpack.c.l.b16 %v376
      %v456 = vunpack.c.l.b16 %v377
      %v457 = vpack.c.b16 %v456, %v455
      %v459 = vsel %vm385, %v369, 0
      %v462 = vsel %vm385, %v457, 0
      %464 = vmatpush.bf16.xpose.msra.mxu0 0
      %465 = vmatpush.bf16.xpose.msra.mxu0 0
      %466 = vmatpush.bf16.xpose.msra.mxu0 0
      %467 = vmatpush.bf16.xpose.msra.mxu0 0
      %468 = vmatpush.bf16.xpose.msra.mxu0 0
      %469 = vmatpush.bf16.xpose.msra.mxu0 0
      %470 = vmatpush.bf16.xpose.msra.mxu0 0
      %471 = vmatpush.bf16.xpose.msra.mxu0 %v462
      %472 = vmatmul.bf16.gmra.mxu0 %v459
      %v473 = vpop.f32.mrf.mxu0
      %v474 = vadd.f32 %v379, %v473
      %v475 = vpop.f32.mrf.mxu0
      %476 = vdwg.mxu0
      %v477 = vld [vmem:[#allocation2] sm:$0xff]
      %v478 = vld [vmem:[#allocation2 + $0x8] sm:$0xff]
      %v479 = vld [vmem:[#allocation2 + $0x10] sm:$0xff]
      %v480 = vld [vmem:[#allocation2 + $0x18] sm:$0xff]
      %vm481 = vcmask 80896
      %v482 = vsel %vm481, %v402, -inf
      %483 = vmax.xlane.f32.xlu0 %v482
      %v484 = vpop.xlane.xlu0 %483
      %v485 = vsel %vm481, %v426, -inf
      %486 = vmax.xlane.f32.xlu0 %v485
      %v487 = vpop.xlane.xlu0 %486
      %v488 = vsel %vm481, %v450, -inf
      %489 = vmax.xlane.f32.xlu0 %v488
      %v490 = vpop.xlane.xlu0 %489
      %v491 = vsel %vm481, %v474, -inf
      %492 = vmax.xlane.f32.xlu0 %v491
      %v493 = vpop.xlane.xlu0 %492
      %v494 = vmax.f32 %v477, %v484
      %v495 = vmax.f32 %v478, %v487
      %v496 = vmax.f32 %v479, %v490
      %v497 = vmax.f32 %v480, %v493
      %v498 = vsub.f32 %v477, %v494
      %v499 = vsub.f32 %v478, %v495
      %v500 = vsub.f32 %v479, %v496
      %v501 = vsub.f32 %v480, %v497
      %v502 = vmul.f32 %v498, 1.442695
      %v503 = vpow.pop %v502
      %v504 = vmul.f32 %v499, 1.442695
      %v505 = vpow.pop %v504
      %v506 = vmul.f32 %v500, 1.442695
      %v507 = vpow.pop %v506
      %v508 = vmul.f32 %v501, 1.442695
      %v509 = vpow.pop %v508
      %511 = vset.pattern.permute.xlu0 0
      %512 = vperm.xlu0 %511, %v494
      %v513 = vpop.permute.xlu0 %512
      %516 = vset.pattern.permute.xlu0 0
      %517 = vperm.xlu0 %516, %v495
      %v518 = vpop.permute.xlu0 %517
      %521 = vset.pattern.permute.xlu0 0
      %522 = vperm.xlu0 %521, %v496
      %v523 = vpop.permute.xlu0 %522
      %526 = vset.pattern.permute.xlu0 0
      %527 = vperm.xlu0 %526, %v497
      %v528 = vpop.permute.xlu0 %527
      %v530 = vsub.f32 %v402, %v513
      %v531 = vsub.f32 %v426, %v518
      %v532 = vsub.f32 %v450, %v523
      %v533 = vsub.f32 %v474, %v528
      %v534 = vmul.f32 %v530, 1.442695
      %v535 = vpow.pop %v534
      %v536 = vmul.f32 %v531, 1.442695
      %v537 = vpow.pop %v536
      %v538 = vmul.f32 %v532, 1.442695
      %v539 = vpow.pop %v538
      %v540 = vmul.f32 %v533, 1.442695
      %v541 = vpow.pop %v540
      %v542 = vld [vmem:[#allocation3] sm:$0xff]
      %v543 = vld [vmem:[#allocation3 + $0x8] sm:$0xff]
      %v544 = vld [vmem:[#allocation3 + $0x10] sm:$0xff]
      %v545 = vld [vmem:[#allocation3 + $0x18] sm:$0xff]
      %v546 = vmul.f32 %v503, %v542
      %v547 = vmul.f32 %v505, %v543
      %v548 = vmul.f32 %v507, %v544
      %v549 = vmul.f32 %v509, %v545
      %v550 = vsel %vm481, %v535, 0.0
      %551 = vadd.xlane.f32.xlu0 %v550
      %v552 = vpop.xlane.xlu0 %551
      %v553 = vsel %vm481, %v537, 0.0
      %554 = vadd.xlane.f32.xlu0 %v553
      %v555 = vpop.xlane.xlu0 %554
      %v556 = vsel %vm481, %v539, 0.0
      %557 = vadd.xlane.f32.xlu0 %v556
      %v558 = vpop.xlane.xlu0 %557
      %v559 = vsel %vm481, %v541, 0.0
      %560 = vadd.xlane.f32.xlu0 %v559
      %v561 = vpop.xlane.xlu0 %560
      %v562 = vadd.f32 %v546, %v552
      %v563 = vadd.f32 %v547, %v555
      %v564 = vadd.f32 %v548, %v558
      %v565 = vadd.f32 %v549, %v561
      %vm566 = vcmask 7168
      %567 = vst.msk [vmem:[#allocation3] sm:$0xff] %vm566, %v562
      %568 = vst.msk [vmem:[#allocation3 + $0x8] sm:$0xff] %vm566, %v563
      %569 = vst.msk [vmem:[#allocation3 + $0x10] sm:$0xff] %vm566, %v564
      %570 = vst.msk [vmem:[#allocation3 + $0x18] sm:$0xff] %vm566, %v565
      %v571 = vld [vmem:[#allocation4] sm:$0xff]
      %v572 = vld [vmem:[#allocation4 + $0x8] sm:$0xff]
      %v573 = vld [vmem:[#allocation4 + $0x10] sm:$0xff]
      %v574 = vld [vmem:[#allocation4 + $0x18] sm:$0xff]
      %576 = vset.pattern.permute.xlu0 0
      %577 = vperm.xlu0 %576, %v503
      %v578 = vpop.permute.xlu0 %577
      %581 = vset.pattern.permute.xlu0 0
      %582 = vperm.xlu0 %581, %v505
      %v583 = vpop.permute.xlu0 %582
      %586 = vset.pattern.permute.xlu0 0
      %587 = vperm.xlu0 %586, %v507
      %v588 = vpop.permute.xlu0 %587
      %591 = vset.pattern.permute.xlu0 0
      %592 = vperm.xlu0 %591, %v509
      %v593 = vpop.permute.xlu0 %592
      %v595 = vmul.f32 %v578, %v571
      %v596 = vmul.f32 %v583, %v572
      %v597 = vmul.f32 %v588, %v573
      %v598 = vmul.f32 %v593, %v574
      %v599 = vpack.c.bf16 %v535, %v535
      %v600 = vpack.c.bf16 %v537, %v537
      %v601 = vpack.c.bf16 %v539, %v539
      %v602 = vpack.c.bf16 %v541, %v541
      %v603 = vld [vmem:[%s327] sm:$0xf]
      %v604 = vld [vmem:[%s327 + $0x4] sm:$0x1]
      %v605 = vld [vmem:[%s327 + $0x8] sm:$0xf]
      %v606 = vld [vmem:[%s327 + $0xc] sm:$0x1]
      %v607 = vld [vmem:[%s327 + $0x10] sm:$0xf]
      %v608 = vld [vmem:[%s327 + $0x14] sm:$0x1]
      %v609 = vld [vmem:[%s327 + $0x18] sm:$0xf]
      %v610 = vld [vmem:[%s327 + $0x1c] sm:$0x1]
      %v613 = vunpack.c.l.b16 %v603
      %v614 = vunpack.c.l.b16 %v604
      %v615 = vpack.c.b16 %v614, %v613
      %v617 = vsel %vm481, %v599, 0
      %vm619 = vcmask 1044480
      %v621 = vsel %vm619, %v615, 0
      %623 = vmatpush.bf16.msra.mxu0 0
      %624 = vmatpush.bf16.msra.mxu0 0
      %625 = vmatpush.bf16.msra.mxu0 0
      %626 = vmatpush.bf16.msra.mxu0 0
      %627 = vmatpush.bf16.msra.mxu0 0
      %628 = vmatpush.bf16.msra.mxu0 0
      %629 = vmatpush.bf16.msra.mxu0 0
      %630 = vmatpush.bf16.msra.mxu0 %v621
      %631 = vmatmul.bf16.gmra.mxu0 %v617
      %v632 = vpop.f32.mrf.mxu0
      %v633 = vadd.f32 0.0, %v632
      %v634 = vpop.f32.mrf.mxu0
      %635 = vdwg.mxu0
      %v638 = vunpack.c.l.b16 %v605
      %v639 = vunpack.c.l.b16 %v606
      %v640 = vpack.c.b16 %v639, %v638
      %v642 = vsel %vm481, %v600, 0
      %v645 = vsel %vm619, %v640, 0
      %647 = vmatpush.bf16.msra.mxu0 0
      %648 = vmatpush.bf16.msra.mxu0 0
      %649 = vmatpush.bf16.msra.mxu0 0
      %650 = vmatpush.bf16.msra.mxu0 0
      %651 = vmatpush.bf16.msra.mxu0 0
      %652 = vmatpush.bf16.msra.mxu0 0
      %653 = vmatpush.bf16.msra.mxu0 0
      %654 = vmatpush.bf16.msra.mxu0 %v645
      %655 = vmatmul.bf16.gmra.mxu0 %v642
      %v656 = vpop.f32.mrf.mxu0
      %v657 = vadd.f32 0.0, %v656
      %v658 = vpop.f32.mrf.mxu0
      %659 = vdwg.mxu0
      %v662 = vunpack.c.l.b16 %v607
      %v663 = vunpack.c.l.b16 %v608
      %v664 = vpack.c.b16 %v663, %v662
      %v666 = vsel %vm481, %v601, 0
      %v669 = vsel %vm619, %v664, 0
      %671 = vmatpush.bf16.msra.mxu0 0
      %672 = vmatpush.bf16.msra.mxu0 0
      %673 = vmatpush.bf16.msra.mxu0 0
      %674 = vmatpush.bf16.msra.mxu0 0
      %675 = vmatpush.bf16.msra.mxu0 0
      %676 = vmatpush.bf16.msra.mxu0 0
      %677 = vmatpush.bf16.msra.mxu0 0
      %678 = vmatpush.bf16.msra.mxu0 %v669
      %679 = vmatmul.bf16.gmra.mxu0 %v666
      %v680 = vpop.f32.mrf.mxu0
      %v681 = vadd.f32 0.0, %v680
      %v682 = vpop.f32.mrf.mxu0
      %683 = vdwg.mxu0
      %v686 = vunpack.c.l.b16 %v609
      %v687 = vunpack.c.l.b16 %v610
      %v688 = vpack.c.b16 %v687, %v686
      %v690 = vsel %vm481, %v602, 0
      %v693 = vsel %vm619, %v688, 0
      %695 = vmatpush.bf16.msra.mxu0 0
      %696 = vmatpush.bf16.msra.mxu0 0
      %697 = vmatpush.bf16.msra.mxu0 0
      %698 = vmatpush.bf16.msra.mxu0 0
      %699 = vmatpush.bf16.msra.mxu0 0
      %700 = vmatpush.bf16.msra.mxu0 0
      %701 = vmatpush.bf16.msra.mxu0 0
      %702 = vmatpush.bf16.msra.mxu0 %v693
      %703 = vmatmul.bf16.gmra.mxu0 %v690
      %v704 = vpop.f32.mrf.mxu0
      %v705 = vadd.f32 0.0, %v704
      %v706 = vpop.f32.mrf.mxu0
      %707 = vdwg.mxu0
      %v708 = vadd.f32 %v595, %v633
      %v709 = vadd.f32 %v596, %v657
      %v710 = vadd.f32 %v597, %v681
      %v711 = vadd.f32 %v598, %v705
      %712 = vst.msk [vmem:[#allocation4] sm:$0xff] %vm385, %v708
      %713 = vst.msk [vmem:[#allocation4 + $0x8] sm:$0xff] %vm385, %v709
      %714 = vst.msk [vmem:[#allocation4 + $0x10] sm:$0xff] %vm385, %v710
      %715 = vst.msk [vmem:[#allocation4 + $0x18] sm:$0xff] %vm385, %v711
      %716 = vst.msk [vmem:[#allocation2] sm:$0xff] %vm566, %v494
      %717 = vst.msk [vmem:[#allocation2 + $0x8] sm:$0xff] %vm566, %v495
      %718 = vst.msk [vmem:[#allocation2 + $0x10] sm:$0xff] %vm566, %v496
      %719 = vst.msk [vmem:[#allocation2 + $0x18] sm:$0xff] %vm566, %v497
      // Predicated region
      $region41: #{decoder_layer.14} parent=35 // pred_check
        %p720 = pneg %p348
      $region42: #{decoder_layer.14} parent=35 // pred_check_branch
        %722 = sbr.rel (%p720) target = $region44
      $region43: #{decoder_layer.14} parent=35 // pred_region
        %v723 = vld [vmem:[#allocation3] sm:$0xff]
        %v724 = vld [vmem:[#allocation3 + $0x8] sm:$0xff]
        %v725 = vld [vmem:[#allocation3 + $0x10] sm:$0xff]
        %v726 = vld [vmem:[#allocation3 + $0x18] sm:$0xff]
        %v727 = vrcp.pop %v723
        %v728 = vrcp.pop %v724
        %v729 = vrcp.pop %v725
        %v730 = vrcp.pop %v726
        %v731 = vld [vmem:[#allocation4] sm:$0xff]
        %v732 = vld [vmem:[#allocation4 + $0x8] sm:$0xff]
        %v733 = vld [vmem:[#allocation4 + $0x10] sm:$0xff]
        %v734 = vld [vmem:[#allocation4 + $0x18] sm:$0xff]
        %736 = vset.pattern.permute.xlu0 0
        %737 = vperm.xlu0 %736, %v727
        %v738 = vpop.permute.xlu0 %737
        %741 = vset.pattern.permute.xlu0 0
        %742 = vperm.xlu0 %741, %v728
        %v743 = vpop.permute.xlu0 %742
        %746 = vset.pattern.permute.xlu0 0
        %747 = vperm.xlu0 %746, %v729
        %v748 = vpop.permute.xlu0 %747
        %751 = vset.pattern.permute.xlu0 0
        %752 = vperm.xlu0 %751, %v730
        %v753 = vpop.permute.xlu0 %752
        %v755 = vmul.f32 %v731, %v738
        %v756 = vmul.f32 %v732, %v743
        %v757 = vmul.f32 %v733, %v748
        %v758 = vmul.f32 %v734, %v753
        %v759 = vpack.c.bf16 %v755, %v755
        %v760 = vpack.c.bf16 %v756, %v756
        %v761 = vpack.c.bf16 %v757, %v757
        %v762 = vpack.c.bf16 %v758, %v758
        %vm763 = vcmask 60416
        %764 = vst.msk [vmem:[%s346] sm:$0xf] %vm763, %v759
        %765 = vst.msk [vmem:[%s346 + $0x4] sm:$0xf] %vm763, %v760
        %766 = vst.msk [vmem:[%s346 + $0x8] sm:$0xf] %vm763, %v761
        %767 = vst.msk [vmem:[%s346 + $0xc] sm:$0xf] %vm763, %v762
      $region44: #{decoder_layer.14} parent=35 // pred_fallthru
        _
      %p768 = scmp.lt.s32.totalorder %s20, 1
      %s769 = scalar_select %p768, %s20, 1
      %p770 = scmp.lt.s32.totalorder %s21, 0
      %s771 = scalar_select %p770, %s21, 0
      %s772 = smul.addr %s769, 4
      %s773 = sadd.s32 %s771, %s772
      %s774 = smul.addr %s773, 4
      %s775 = scalar_lea.vmem %s4, %s774
      // Predicated region
      $region45: #{decoder_layer.14} parent=35 // pred_check
        %p776 = pneg %p168
      $region46: #{decoder_layer.14} parent=35 // pred_check_branch
        %778 = sbr.rel (%p776) target = $region48
      $region47: #{decoder_layer.14} parent=35 // pred_region
        _
      $region48: #{decoder_layer.14} parent=35 // pred_fallthru
        _
    $region36: #{decoder_layer.14} parent=5 // pred_fallthru
      _
    %p779 = scmp.le.s32.totalorder 2, %s10
    // Predicated region
    $region49: #{decoder_layer.14} parent=5 // pred_check
      %p780 = pneg %p779
    $region50: #{decoder_layer.14} parent=5 // pred_check_branch
      %782 = sbr.rel (%p780) target = $region52
    $region51: #{decoder_layer.14} parent=5 // pred_region
      %s783 = ssub.s32 %s10, 2
      // Predicated region
      $region53: #{decoder_layer.14} parent=51 // pred_check
        %p784 = pneg %p174
      $region54: #{decoder_layer.14} parent=51 // pred_check_branch
        %786 = sbr.rel (%p784) target = $region56
      $region55: #{decoder_layer.14} parent=51 // pred_region
        %p787 = scmp.lt.s32.totalorder %s23, 1
        %s788 = scalar_select %p787, %s23, 1
        %p789 = scmp.lt.s32.totalorder %s24, 0
        %s790 = scalar_select %p789, %s24, 0
        %s791 = smul.addr %s788, 4
        %s792 = sadd.s32 %s790, %s791
        %s793 = smul.addr %s792, 4
        %s794 = scalar_lea.vmem %s4, %s793
      $region56: #{decoder_layer.14} parent=51 // pred_fallthru
        _
    $region52: #{decoder_layer.14} parent=5 // pred_fallthru
      _
  $region6: #{decoder_layer.14} parent=0 // loop_footer
    %s14 = sadd.s32 1, %s10
  $region7: #{decoder_layer.14} parent=0 // loop_footer_branch
    %9 = sbr.rel target = $region3
  $region8: #{decoder_layer.14} parent=0 // loop_exit
    _

</llo_original>
